<compile_context>
chip_gen: v6e
topology: v6e:2x2x1
jax: 0.10.0
libtpu: 0.0.40
codegen_flags: <defaults>
</compile_context>

<pallas_src>
import math

import jax
import jax.numpy as jnp
from jax import lax
from jax.experimental import pallas as pl
from jax.experimental.pallas import tpu as pltpu

# ----------------------- model config (small, BERT-shaped) -----------------------
VOCAB = 64
MAX_POS = 32
HIDDEN = 32
HEADS = 4
HEAD_DIM = HIDDEN // HEADS
INTER = 64
LAYERS = 2
N_CLASSES = 3
FC_PAD = 128          # lane-dense padding of the classifier output
LN_EPS = 1e-12        # BERT layer-norm epsilon

# rows of the packed per-layer vector table (lvec: (LAYERS, 8, 3*HIDDEN))
_BQKV, _BO, _LN1G, _LN1B, _B1, _B2, _LN2G, _LN2B = range(8)
# rows of the packed global vector table (glob: (4, FC_PAD))
_EMBG, _EMBB, _POOLB, _FCB = range(4)


# --------------------------------- fused kernel ----------------------------------
def _bert_fused_kernel(
    ids_ref, amask_ref, emb_ref,
    wqkv_ref, wo_ref, w1_ref, w2_ref, lvec_ref,
    poolw_ref, fcw_ref, glob_ref,
    o_ref,
):
    f32 = jnp.float32
    bs = ids_ref.shape[0]                 # B * S token rows
    b_sz, s_len = amask_ref.shape         # batch, sequence length
    n_tab = emb_ref.shape[0]              # VOCAB + MAX_POS
    b_pad = o_ref.shape[0]                # padded CLS-row count (multiple of 8)

    def layer_norm(x, g, b):
        mu = jnp.mean(x, axis=-1, keepdims=True)
        xc = x - mu
        var = jnp.mean(xc * xc, axis=-1, keepdims=True)
        return xc * lax.rsqrt(var + LN_EPS) * g + b

    # ---- in-kernel embedding lookup: one-hot (word OR position) -> single MXU gather ----
    ids = ids_ref[...]                                              # (B*S, 1) int32
    col = lax.broadcasted_iota(jnp.int32, (bs, n_tab), 1)
    row = lax.broadcasted_iota(jnp.int32, (bs, n_tab), 0)
    if (s_len & (s_len - 1)) == 0:                                  # static branch
        pos_idx = row & (s_len - 1)
    else:
        pos_idx = row % s_len
    hit = (col == ids) | (col == (VOCAB + pos_idx))                 # two hits per row
    onehot = jnp.where(hit, 1.0, 0.0)                               # (B*S, VOCAB+MAX_POS) f32
    x = jnp.dot(onehot, emb_ref[...], preferred_element_type=f32)   # word + pos + type emb
    h = layer_norm(x, glob_ref[_EMBG:_EMBG + 1, :HIDDEN],
                   glob_ref[_EMBB:_EMBB + 1, :HIDDEN])              # (B*S, H)

    # ---- additive attention-mask bias, computed once and pre-broadcast per batch ----
    bias = (1.0 - amask_ref[...].astype(f32)) * -10000.0            # (B, S)
    mask_sq = [jnp.broadcast_to(bias[b:b + 1, :], (s_len, s_len)) for b in range(b_sz)]

    for l in range(LAYERS):                                         # unrolled at trace time
        # fused QKV projection (scale 1/sqrt(Dh) already folded into the Q block at init)
        qkv = jnp.dot(h, wqkv_ref[l], preferred_element_type=f32) \
            + lvec_ref[l, _BQKV:_BQKV + 1, :]                       # (B*S, 3H)

        ctx_heads = []
        for hh in range(HEADS):
            q_h = qkv[:, hh * HEAD_DIM:(hh + 1) * HEAD_DIM]
            k_h = qkv[:, HIDDEN + hh * HEAD_DIM:HIDDEN + (hh + 1) * HEAD_DIM]
            v_h = qkv[:, 2 * HIDDEN + hh * HEAD_DIM:2 * HIDDEN + (hh + 1) * HEAD_DIM]
            ctx_bs = []
            for b in range(b_sz):                                   # flat 2-D dots per batch
                q = q_h[b * s_len:(b + 1) * s_len, :]               # (S, Dh) sublane slice
                k = k_h[b * s_len:(b + 1) * s_len, :]
                v = v_h[b * s_len:(b + 1) * s_len, :]
                s = lax.dot_general(q, k, (((1,), (1,)), ((), ())),
                                    preferred_element_type=f32)     # q @ k.T  (S, S)
                s = s + mask_sq[b]
                s = s - jnp.max(s, axis=-1, keepdims=True)
                p = jnp.exp(s)
                p = p / jnp.sum(p, axis=-1, keepdims=True)          # exact normalization
                ctx_bs.append(jnp.dot(p, v, preferred_element_type=f32))   # (S, Dh)
            ctx_heads.append(jnp.concatenate(ctx_bs, axis=0))       # (B*S, Dh)
        ctx = jnp.concatenate(ctx_heads, axis=1)                    # (B*S, H)

        # single output projection for all heads
        attn = jnp.dot(ctx, wo_ref[l], preferred_element_type=f32) \
             + lvec_ref[l, _BO:_BO + 1, :HIDDEN]
        h = layer_norm(attn + h, lvec_ref[l, _LN1G:_LN1G + 1, :HIDDEN],
                       lvec_ref[l, _LN1B:_LN1B + 1, :HIDDEN])

        # FFN
        ffn = jnp.dot(h, w1_ref[l], preferred_element_type=f32) \
            + lvec_ref[l, _B1:_B1 + 1, :INTER]
        # TODO(synk): HF BERT uses exact (erf) GELU; tanh approximation used for TPU lowering.
        ffn = jax.nn.gelu(ffn, approximate=True)
        ffn = jnp.dot(ffn, w2_ref[l], preferred_element_type=f32) \
            + lvec_ref[l, _B2:_B2 + 1, :HIDDEN]
        h = layer_norm(ffn + h, lvec_ref[l, _LN2G:_LN2G + 1, :HIDDEN],
                       lvec_ref[l, _LN2B:_LN2B + 1, :HIDDEN])

    # ---- select only the B [CLS] rows (rows 0, S, 2S, ...) via a tiny selection matmul ----
    sel_col = lax.broadcasted_iota(jnp.int32, (b_pad, bs), 1)
    sel_tgt = lax.broadcasted_iota(jnp.int32, (b_pad, bs), 0) * s_len   # >= bs for pad rows
    sel = jnp.where(sel_col == sel_tgt, 1.0, 0.0)                   # (b_pad, B*S)
    cls = jnp.dot(sel, h, preferred_element_type=f32)               # (b_pad, H)

    # pooler (dense + tanh), Dropout(p=0.3) identity in eval, fc (zero-padded to 128 lanes)
    pooled = jnp.tanh(jnp.dot(cls, poolw_ref[...], preferred_element_type=f32)
                      + glob_ref[_POOLB:_POOLB + 1, :HIDDEN])
    logits = jnp.dot(pooled, fcw_ref[...], preferred_element_type=f32) \
           + glob_ref[_FCB:_FCB + 1, :]
    o_ref[...] = logits.astype(o_ref.dtype)


# --------------------------- deterministic parameter init ------------------------
def init_params(key):
    keys = iter(jax.random.split(key, 64))

    def nrm(shape, scale=0.02):
        return scale * jax.random.normal(next(keys), shape, jnp.float32)

    def pad_to(v, n):
        return jnp.zeros((n,), jnp.float32).at[: v.shape[0]].set(v)

    q_scale = 1.0 / math.sqrt(HEAD_DIM)
    wqkv, wo, w1, w2, lvec = [], [], [], [], []
    for _ in range(LAYERS):
        wq, wk, wv = nrm((HIDDEN, HIDDEN)), nrm((HIDDEN, HIDDEN)), nrm((HIDDEN, HIDDEN))
        bq, bk, bv = nrm((HIDDEN,)), nrm((HIDDEN,)), nrm((HIDDEN,))
        # Fold the 1/sqrt(head_dim) attention scale into the Q projection (weight AND bias).
        wqkv.append(jnp.concatenate([wq * q_scale, wk, wv], axis=1))       # (H, 3H)
        bqkv = jnp.concatenate([bq * q_scale, bk, bv])                     # (3H,)
        wo.append(nrm((HIDDEN, HIDDEN)))
        w1.append(nrm((HIDDEN, INTER)))
        w2.append(nrm((INTER, HIDDEN)))
        lvec.append(jnp.stack([
            bqkv,
            pad_to(nrm((HIDDEN,)), 3 * HIDDEN),          # bo
            pad_to(jnp.ones((HIDDEN,)), 3 * HIDDEN),     # ln1 gamma
            pad_to(jnp.zeros((HIDDEN,)), 3 * HIDDEN),    # ln1 beta
            pad_to(nrm((INTER,)), 3 * HIDDEN),           # b1
            pad_to(nrm((HIDDEN,)), 3 * HIDDEN),          # b2
            pad_to(jnp.ones((HIDDEN,)), 3 * HIDDEN),     # ln2 gamma
            pad_to(jnp.zeros((HIDDEN,)), 3 * HIDDEN),    # ln2 beta
        ]))                                              # (8, 3H)

    word_emb = nrm((VOCAB, HIDDEN))
    pos_emb = nrm((MAX_POS, HIDDEN))
    type_emb = nrm((2, HIDDEN))
    # token_type_ids are all zero -> fold type_emb[0] into every position-embedding row,
    # and fuse word + position tables so the kernel needs a single one-hot matmul gather.
    emb_tab = jnp.concatenate([word_emb, pos_emb + type_emb[0][None, :]], axis=0)

    fc_w = nrm((HIDDEN, N_CLASSES))
    fc_w_pad = jnp.zeros((HIDDEN, FC_PAD), jnp.float32).at[:, :N_CLASSES].set(fc_w)
    glob = jnp.stack([
        pad_to(jnp.ones((HIDDEN,)), FC_PAD),             # embedding LN gamma
        pad_to(jnp.zeros((HIDDEN,)), FC_PAD),            # embedding LN beta
        pad_to(nrm((HIDDEN,)), FC_PAD),                  # pooler bias
        pad_to(nrm((N_CLASSES,)), FC_PAD),               # fc bias (zero lanes beyond classes)
    ])                                                   # (4, FC_PAD)

    return {
        "emb_tab": emb_tab,                              # (VOCAB+MAX_POS, H)
        "wqkv": jnp.stack(wqkv),                         # (L, H, 3H)
        "wo": jnp.stack(wo),                             # (L, H, H)
        "w1": jnp.stack(w1),                             # (L, H, INTER)
        "w2": jnp.stack(w2),                             # (L, INTER, H)
        "lvec": jnp.stack(lvec),                         # (L, 8, 3H) packed per-layer vectors
        "pool_w": nrm((HIDDEN, HIDDEN)),                 # (H, H)
        "fc_w": fc_w_pad,                                # (H, 128) zero-padded
        "glob": glob,                                    # (4, 128) packed global vectors
    }


# ------------------------------------ forward ------------------------------------
def transformer_place_model_forward(params, input_ids, attention_mask):
    B, S = input_ids.shape
    assert S <= MAX_POS
    b_pad = ((B + 7) // 8) * 8                           # lane/sublane-friendly output rows

    ids2 = input_ids.reshape(B * S, 1).astype(jnp.int32)
    amask = attention_mask.astype(jnp.int32)

    vmem = pl.BlockSpec(memory_space=pltpu.MemorySpace.VMEM)
    out = pl.pallas_call(
        _bert_fused_kernel,
        out_shape=jax.ShapeDtypeStruct((b_pad, FC_PAD), jnp.float32),
        in_specs=[vmem] * 11,
        out_specs=vmem,
    )(
        ids2, amask, params["emb_tab"],
        params["wqkv"], params["wo"], params["w1"], params["w2"], params["lvec"],
        params["pool_w"], params["fc_w"], params["glob"],
    )
    # Real logits are the first B rows and the first N_CLASSES (unpadded) columns.
    return out[:B, :N_CLASSES]


if __name__ == "__main__":
    key = jax.random.PRNGKey(0)
    k_params, k_ids = jax.random.split(key)
    params = init_params(k_params)

    B, S = 2, 8
    input_ids = jax.random.randint(k_ids, (B, S), 0, VOCAB, dtype=jnp.int32)
    attention_mask = jnp.array(
        [[1, 1, 1, 1, 1, 1, 1, 1],
         [1, 1, 1, 1, 1, 1, 0, 0]], dtype=jnp.int32)

    fwd = jax.jit(transformer_place_model_forward)
    logits = fwd(params, input_ids, attention_mask)
    logits = jax.block_until_ready(logits)
    assert logits.shape == (B, N_CLASSES)
    assert bool(jnp.all(jnp.isfinite(logits)))
    print("KERNEL_OK")
</pallas_src>

<mosaic_0001>
module attributes {stable_mosaic.version = 11 : i64} {
  func.func @_bert_fused_kernel(%arg0: memref<16x1xi32, #tpu.memory_space<vmem>>, %arg1: memref<2x8xi32, #tpu.memory_space<vmem>>, %arg2: memref<96x32xf32, #tpu.memory_space<vmem>>, %arg3: memref<2x32x96xf32, #tpu.memory_space<vmem>>, %arg4: memref<2x32x32xf32, #tpu.memory_space<vmem>>, %arg5: memref<2x32x64xf32, #tpu.memory_space<vmem>>, %arg6: memref<2x64x32xf32, #tpu.memory_space<vmem>>, %arg7: memref<2x8x96xf32, #tpu.memory_space<vmem>>, %arg8: memref<32x32xf32, #tpu.memory_space<vmem>>, %arg9: memref<32x128xf32, #tpu.memory_space<vmem>>, %arg10: memref<4x128xf32, #tpu.memory_space<vmem>>, %arg11: memref<8x128xf32, #tpu.memory_space<vmem>>) attributes {dimension_semantics = [], scalar_prefetch = 0 : i64, scratch_operands = 0 : i64, tpu.core_type = #tpu.core_type<tc>} {
    %c0 = arith.constant 0 : index
    %c0_0 = arith.constant 0 : index
    %0 = vector.load %arg0[%c0, %c0_0] : memref<16x1xi32, #tpu.memory_space<vmem>>, vector<16x1xi32>
    %1 = tpu.iota {dimensions = array<i32: 1>} : vector<16x96xi32>
    %2 = tpu.iota {dimensions = array<i32: 0>} : vector<16x96xi32>
    %c7_i32 = arith.constant 7 : i32
    %3 = vector.broadcast %c7_i32 : i32 to vector<16x96xi32>
    %4 = arith.andi %2, %3 : vector<16x96xi32>
    %5 = vector.broadcast %0 : vector<16x1xi32> to vector<16x96xi32>
    %6 = arith.cmpi eq, %1, %5 : vector<16x96xi32>
    %c64_i32 = arith.constant 64 : i32
    %7 = vector.broadcast %c64_i32 : i32 to vector<16x96xi32>
    %8 = arith.addi %7, %4 : vector<16x96xi32>
    %9 = arith.cmpi eq, %1, %8 : vector<16x96xi32>
    %10 = arith.ori %6, %9 : vector<16x96xi1>
    %cst = arith.constant 1.000000e+00 : f32
    %cst_1 = arith.constant 0.000000e+00 : f32
    %11 = vector.broadcast %cst : f32 to vector<16x96xf32>
    %12 = vector.broadcast %cst_1 : f32 to vector<16x96xf32>
    %13 = arith.select %10, %11, %12 : vector<16x96xi1>, vector<16x96xf32>
    %c0_2 = arith.constant 0 : index
    %c0_3 = arith.constant 0 : index
    %14 = vector.load %arg2[%c0_2, %c0_3] : memref<96x32xf32, #tpu.memory_space<vmem>>, vector<96x32xf32>
    %cst_4 = arith.constant dense<0.000000e+00> : vector<16x32xf32>
    %15 = tpu.matmul %13, %14, %cst_4 {dimension_numbers = #tpu.dot_dimension_numbers<[1], [0], [0], [1], [0, 0, 1, 1], [], []>} : vector<16x96xf32>, vector<96x32xf32>, vector<16x32xf32> -> vector<16x32xf32>
    %c0_5 = arith.constant 0 : index
    %c0_6 = arith.constant 0 : index
    %16 = vector.load %arg10[%c0_5, %c0_6] : memref<4x128xf32, #tpu.memory_space<vmem>>, vector<1x32xf32>
    %c1 = arith.constant 1 : index
    %c0_7 = arith.constant 0 : index
    %17 = vector.load %arg10[%c1, %c0_7] : memref<4x128xf32, #tpu.memory_space<vmem>>, vector<1x32xf32>
    %cst_8 = arith.constant dense<0.000000e+00> : vector<16xf32>
    %18 = vector.multi_reduction <add>, %15, %cst_8 [1] : vector<16x32xf32> to vector<16xf32>
    %19 = vector.shape_cast %18 : vector<16xf32> to vector<16x1xf32>
    %cst_9 = arith.constant 3.200000e+01 : f32
    %20 = vector.broadcast %cst_9 : f32 to vector<16x1xf32>
    %21 = arith.divf %19, %20 : vector<16x1xf32>
    %22 = vector.broadcast %21 : vector<16x1xf32> to vector<16x32xf32>
    %23 = arith.subf %15, %22 : vector<16x32xf32>
    %24 = arith.mulf %23, %23 : vector<16x32xf32>
    %cst_10 = arith.constant dense<0.000000e+00> : vector<16xf32>
    %25 = vector.multi_reduction <add>, %24, %cst_10 [1] : vector<16x32xf32> to vector<16xf32>
    %26 = vector.shape_cast %25 : vector<16xf32> to vector<16x1xf32>
    %cst_11 = arith.constant 3.200000e+01 : f32
    %27 = vector.broadcast %cst_11 : f32 to vector<16x1xf32>
    %28 = arith.divf %26, %27 : vector<16x1xf32>
    %cst_12 = arith.constant 9.99999996E-13 : f32
    %29 = vector.broadcast %cst_12 : f32 to vector<16x1xf32>
    %30 = arith.addf %28, %29 : vector<16x1xf32>
    %31 = math.rsqrt %30 : vector<16x1xf32>
    %32 = vector.broadcast %31 : vector<16x1xf32> to vector<16x32xf32>
    %33 = arith.mulf %23, %32 : vector<16x32xf32>
    %34 = vector.broadcast %16 : vector<1x32xf32> to vector<16x32xf32>
    %35 = arith.mulf %33, %34 : vector<16x32xf32>
    %36 = vector.broadcast %17 : vector<1x32xf32> to vector<16x32xf32>
    %37 = arith.addf %35, %36 : vector<16x32xf32>
    %c0_13 = arith.constant 0 : index
    %c0_14 = arith.constant 0 : index
    %38 = vector.load %arg1[%c0_13, %c0_14] : memref<2x8xi32, #tpu.memory_space<vmem>>, vector<2x8xi32>
    %39 = arith.sitofp %38 : vector<2x8xi32> to vector<2x8xf32>
    %cst_15 = arith.constant 1.000000e+00 : f32
    %40 = vector.broadcast %cst_15 : f32 to vector<2x8xf32>
    %41 = arith.subf %40, %39 : vector<2x8xf32>
    %cst_16 = arith.constant -1.000000e+04 : f32
    %42 = vector.broadcast %cst_16 : f32 to vector<2x8xf32>
    %43 = arith.mulf %41, %42 : vector<2x8xf32>
    %44 = vector.extract_strided_slice %43 {offsets = [0, 0], sizes = [1, 8], strides = [1, 1]} : vector<2x8xf32> to vector<1x8xf32>
    %45 = vector.shape_cast %44 : vector<1x8xf32> to vector<1x8xf32>
    %46 = vector.broadcast %45 : vector<1x8xf32> to vector<8x8xf32>
    %47 = vector.extract_strided_slice %43 {offsets = [1, 0], sizes = [1, 8], strides = [1, 1]} : vector<2x8xf32> to vector<1x8xf32>
    %48 = vector.shape_cast %47 : vector<1x8xf32> to vector<1x8xf32>
    %49 = vector.broadcast %48 : vector<1x8xf32> to vector<8x8xf32>
    %c0_17 = arith.constant 0 : index
    %c0_18 = arith.constant 0 : index
    %c0_19 = arith.constant 0 : index
    %50 = vector.load %arg3[%c0_17, %c0_18, %c0_19] : memref<2x32x96xf32, #tpu.memory_space<vmem>>, vector<1x32x96xf32>
    %51 = vector.shape_cast %50 : vector<1x32x96xf32> to vector<32x96xf32>
    %cst_20 = arith.constant dense<0.000000e+00> : vector<16x96xf32>
    %52 = tpu.matmul %37, %51, %cst_20 {dimension_numbers = #tpu.dot_dimension_numbers<[1], [0], [0], [1], [0, 0, 1, 1], [], []>} : vector<16x32xf32>, vector<32x96xf32>, vector<16x96xf32> -> vector<16x96xf32>
    %c0_21 = arith.constant 0 : index
    %c0_22 = arith.constant 0 : index
    %c0_23 = arith.constant 0 : index
    %53 = vector.load %arg7[%c0_21, %c0_22, %c0_23] : memref<2x8x96xf32, #tpu.memory_space<vmem>>, vector<1x1x96xf32>
    %54 = vector.shape_cast %53 : vector<1x1x96xf32> to vector<1x96xf32>
    %55 = vector.broadcast %54 : vector<1x96xf32> to vector<16x96xf32>
    %56 = arith.addf %52, %55 : vector<16x96xf32>
    %57 = vector.extract_strided_slice %56 {offsets = [0, 0], sizes = [16, 8], strides = [1, 1]} : vector<16x96xf32> to vector<16x8xf32>
    %58 = vector.extract_strided_slice %56 {offsets = [0, 32], sizes = [16, 8], strides = [1, 1]} : vector<16x96xf32> to vector<16x8xf32>
    %59 = vector.extract_strided_slice %56 {offsets = [0, 64], sizes = [16, 8], strides = [1, 1]} : vector<16x96xf32> to vector<16x8xf32>
    %60 = vector.extract_strided_slice %57 {offsets = [0, 0], sizes = [8, 8], strides = [1, 1]} : vector<16x8xf32> to vector<8x8xf32>
    %61 = vector.extract_strided_slice %58 {offsets = [0, 0], sizes = [8, 8], strides = [1, 1]} : vector<16x8xf32> to vector<8x8xf32>
    %62 = vector.extract_strided_slice %59 {offsets = [0, 0], sizes = [8, 8], strides = [1, 1]} : vector<16x8xf32> to vector<8x8xf32>
    %cst_24 = arith.constant dense<0.000000e+00> : vector<8x8xf32>
    %63 = tpu.matmul %60, %61, %cst_24 {dimension_numbers = #tpu.dot_dimension_numbers<[1], [1], [0], [0], [0, 0, 1, 0], [], []>} : vector<8x8xf32>, vector<8x8xf32>, vector<8x8xf32> -> vector<8x8xf32>
    %64 = arith.addf %63, %46 : vector<8x8xf32>
    %cst_25 = arith.constant dense<0xFF800000> : vector<8xf32>
    %65 = vector.multi_reduction <maximumf>, %64, %cst_25 [1] : vector<8x8xf32> to vector<8xf32>
    %66 = vector.shape_cast %65 : vector<8xf32> to vector<8x1xf32>
    %67 = vector.broadcast %66 : vector<8x1xf32> to vector<8x8xf32>
    %68 = arith.subf %64, %67 : vector<8x8xf32>
    %69 = math.exp %68 : vector<8x8xf32>
    %cst_26 = arith.constant dense<0.000000e+00> : vector<8xf32>
    %70 = vector.multi_reduction <add>, %69, %cst_26 [1] : vector<8x8xf32> to vector<8xf32>
    %71 = vector.shape_cast %70 : vector<8xf32> to vector<8x1xf32>
    %72 = vector.broadcast %71 : vector<8x1xf32> to vector<8x8xf32>
    %73 = arith.divf %69, %72 : vector<8x8xf32>
    %cst_27 = arith.constant dense<0.000000e+00> : vector<8x8xf32>
    %74 = tpu.matmul %73, %62, %cst_27 {dimension_numbers = #tpu.dot_dimension_numbers<[1], [0], [0], [1], [0, 0, 1, 1], [], []>} : vector<8x8xf32>, vector<8x8xf32>, vector<8x8xf32> -> vector<8x8xf32>
    %75 = vector.extract_strided_slice %57 {offsets = [8, 0], sizes = [8, 8], strides = [1, 1]} : vector<16x8xf32> to vector<8x8xf32>
    %76 = vector.extract_strided_slice %58 {offsets = [8, 0], sizes = [8, 8], strides = [1, 1]} : vector<16x8xf32> to vector<8x8xf32>
    %77 = vector.extract_strided_slice %59 {offsets = [8, 0], sizes = [8, 8], strides = [1, 1]} : vector<16x8xf32> to vector<8x8xf32>
    %cst_28 = arith.constant dense<0.000000e+00> : vector<8x8xf32>
    %78 = tpu.matmul %75, %76, %cst_28 {dimension_numbers = #tpu.dot_dimension_numbers<[1], [1], [0], [0], [0, 0, 1, 0], [], []>} : vector<8x8xf32>, vector<8x8xf32>, vector<8x8xf32> -> vector<8x8xf32>
    %79 = arith.addf %78, %49 : vector<8x8xf32>
    %cst_29 = arith.constant dense<0xFF800000> : vector<8xf32>
    %80 = vector.multi_reduction <maximumf>, %79, %cst_29 [1] : vector<8x8xf32> to vector<8xf32>
    %81 = vector.shape_cast %80 : vector<8xf32> to vector<8x1xf32>
    %82 = vector.broadcast %81 : vector<8x1xf32> to vector<8x8xf32>
    %83 = arith.subf %79, %82 : vector<8x8xf32>
    %84 = math.exp %83 : vector<8x8xf32>
    %cst_30 = arith.constant dense<0.000000e+00> : vector<8xf32>
    %85 = vector.multi_reduction <add>, %84, %cst_30 [1] : vector<8x8xf32> to vector<8xf32>
    %86 = vector.shape_cast %85 : vector<8xf32> to vector<8x1xf32>
    %87 = vector.broadcast %86 : vector<8x1xf32> to vector<8x8xf32>
    %88 = arith.divf %84, %87 : vector<8x8xf32>
    %cst_31 = arith.constant dense<0.000000e+00> : vector<8x8xf32>
    %89 = tpu.matmul %88, %77, %cst_31 {dimension_numbers = #tpu.dot_dimension_numbers<[1], [0], [0], [1], [0, 0, 1, 1], [], []>} : vector<8x8xf32>, vector<8x8xf32>, vector<8x8xf32> -> vector<8x8xf32>
    %90 = tpu.concatenate %74, %89 in 0 : vector<8x8xf32>, vector<8x8xf32> -> vector<16x8xf32>
    %91 = vector.extract_strided_slice %56 {offsets = [0, 8], sizes = [16, 8], strides = [1, 1]} : vector<16x96xf32> to vector<16x8xf32>
    %92 = vector.extract_strided_slice %56 {offsets = [0, 40], sizes = [16, 8], strides = [1, 1]} : vector<16x96xf32> to vector<16x8xf32>
    %93 = vector.extract_strided_slice %56 {offsets = [0, 72], sizes = [16, 8], strides = [1, 1]} : vector<16x96xf32> to vector<16x8xf32>
    %94 = vector.extract_strided_slice %91 {offsets = [0, 0], sizes = [8, 8], strides = [1, 1]} : vector<16x8xf32> to vector<8x8xf32>
    %95 = vector.extract_strided_slice %92 {offsets = [0, 0], sizes = [8, 8], strides = [1, 1]} : vector<16x8xf32> to vector<8x8xf32>
    %96 = vector.extract_strided_slice %93 {offsets = [0, 0], sizes = [8, 8], strides = [1, 1]} : vector<16x8xf32> to vector<8x8xf32>
    %cst_32 = arith.constant dense<0.000000e+00> : vector<8x8xf32>
    %97 = tpu.matmul %94, %95, %cst_32 {dimension_numbers = #tpu.dot_dimension_numbers<[1], [1], [0], [0], [0, 0, 1, 0], [], []>} : vector<8x8xf32>, vector<8x8xf32>, vector<8x8xf32> -> vector<8x8xf32>
    %98 = arith.addf %97, %46 : vector<8x8xf32>
    %cst_33 = arith.constant dense<0xFF800000> : vector<8xf32>
    %99 = vector.multi_reduction <maximumf>, %98, %cst_33 [1] : vector<8x8xf32> to vector<8xf32>
    %100 = vector.shape_cast %99 : vector<8xf32> to vector<8x1xf32>
    %101 = vector.broadcast %100 : vector<8x1xf32> to vector<8x8xf32>
    %102 = arith.subf %98, %101 : vector<8x8xf32>
    %103 = math.exp %102 : vector<8x8xf32>
    %cst_34 = arith.constant dense<0.000000e+00> : vector<8xf32>
    %104 = vector.multi_reduction <add>, %103, %cst_34 [1] : vector<8x8xf32> to vector<8xf32>
    %105 = vector.shape_cast %104 : vector<8xf32> to vector<8x1xf32>
    %106 = vector.broadcast %105 : vector<8x1xf32> to vector<8x8xf32>
    %107 = arith.divf %103, %106 : vector<8x8xf32>
    %cst_35 = arith.constant dense<0.000000e+00> : vector<8x8xf32>
    %108 = tpu.matmul %107, %96, %cst_35 {dimension_numbers = #tpu.dot_dimension_numbers<[1], [0], [0], [1], [0, 0, 1, 1], [], []>} : vector<8x8xf32>, vector<8x8xf32>, vector<8x8xf32> -> vector<8x8xf32>
    %109 = vector.extract_strided_slice %91 {offsets = [8, 0], sizes = [8, 8], strides = [1, 1]} : vector<16x8xf32> to vector<8x8xf32>
    %110 = vector.extract_strided_slice %92 {offsets = [8, 0], sizes = [8, 8], strides = [1, 1]} : vector<16x8xf32> to vector<8x8xf32>
    %111 = vector.extract_strided_slice %93 {offsets = [8, 0], sizes = [8, 8], strides = [1, 1]} : vector<16x8xf32> to vector<8x8xf32>
    %cst_36 = arith.constant dense<0.000000e+00> : vector<8x8xf32>
    %112 = tpu.matmul %109, %110, %cst_36 {dimension_numbers = #tpu.dot_dimension_numbers<[1], [1], [0], [0], [0, 0, 1, 0], [], []>} : vector<8x8xf32>, vector<8x8xf32>, vector<8x8xf32> -> vector<8x8xf32>
    %113 = arith.addf %112, %49 : vector<8x8xf32>
    %cst_37 = arith.constant dense<0xFF800000> : vector<8xf32>
    %114 = vector.multi_reduction <maximumf>, %113, %cst_37 [1] : vector<8x8xf32> to vector<8xf32>
    %115 = vector.shape_cast %114 : vector<8xf32> to vector<8x1xf32>
    %116 = vector.broadcast %115 : vector<8x1xf32> to vector<8x8xf32>
    %117 = arith.subf %113, %116 : vector<8x8xf32>
    %118 = math.exp %117 : vector<8x8xf32>
    %cst_38 = arith.constant dense<0.000000e+00> : vector<8xf32>
    %119 = vector.multi_reduction <add>, %118, %cst_38 [1] : vector<8x8xf32> to vector<8xf32>
    %120 = vector.shape_cast %119 : vector<8xf32> to vector<8x1xf32>
    %121 = vector.broadcast %120 : vector<8x1xf32> to vector<8x8xf32>
    %122 = arith.divf %118, %121 : vector<8x8xf32>
    %cst_39 = arith.constant dense<0.000000e+00> : vector<8x8xf32>
    %123 = tpu.matmul %122, %111, %cst_39 {dimension_numbers = #tpu.dot_dimension_numbers<[1], [0], [0], [1], [0, 0, 1, 1], [], []>} : vector<8x8xf32>, vector<8x8xf32>, vector<8x8xf32> -> vector<8x8xf32>
    %124 = tpu.concatenate %108, %123 in 0 : vector<8x8xf32>, vector<8x8xf32> -> vector<16x8xf32>
    %125 = vector.extract_strided_slice %56 {offsets = [0, 16], sizes = [16, 8], strides = [1, 1]} : vector<16x96xf32> to vector<16x8xf32>
    %126 = vector.extract_strided_slice %56 {offsets = [0, 48], sizes = [16, 8], strides = [1, 1]} : vector<16x96xf32> to vector<16x8xf32>
    %127 = vector.extract_strided_slice %56 {offsets = [0, 80], sizes = [16, 8], strides = [1, 1]} : vector<16x96xf32> to vector<16x8xf32>
    %128 = vector.extract_strided_slice %125 {offsets = [0, 0], sizes = [8, 8], strides = [1, 1]} : vector<16x8xf32> to vector<8x8xf32>
    %129 = vector.extract_strided_slice %126 {offsets = [0, 0], sizes = [8, 8], strides = [1, 1]} : vector<16x8xf32> to vector<8x8xf32>
    %130 = vector.extract_strided_slice %127 {offsets = [0, 0], sizes = [8, 8], strides = [1, 1]} : vector<16x8xf32> to vector<8x8xf32>
    %cst_40 = arith.constant dense<0.000000e+00> : vector<8x8xf32>
    %131 = tpu.matmul %128, %129, %cst_40 {dimension_numbers = #tpu.dot_dimension_numbers<[1], [1], [0], [0], [0, 0, 1, 0], [], []>} : vector<8x8xf32>, vector<8x8xf32>, vector<8x8xf32> -> vector<8x8xf32>
    %132 = arith.addf %131, %46 : vector<8x8xf32>
    %cst_41 = arith.constant dense<0xFF800000> : vector<8xf32>
    %133 = vector.multi_reduction <maximumf>, %132, %cst_41 [1] : vector<8x8xf32> to vector<8xf32>
    %134 = vector.shape_cast %133 : vector<8xf32> to vector<8x1xf32>
    %135 = vector.broadcast %134 : vector<8x1xf32> to vector<8x8xf32>
    %136 = arith.subf %132, %135 : vector<8x8xf32>
    %137 = math.exp %136 : vector<8x8xf32>
    %cst_42 = arith.constant dense<0.000000e+00> : vector<8xf32>
    %138 = vector.multi_reduction <add>, %137, %cst_42 [1] : vector<8x8xf32> to vector<8xf32>
    %139 = vector.shape_cast %138 : vector<8xf32> to vector<8x1xf32>
    %140 = vector.broadcast %139 : vector<8x1xf32> to vector<8x8xf32>
    %141 = arith.divf %137, %140 : vector<8x8xf32>
    %cst_43 = arith.constant dense<0.000000e+00> : vector<8x8xf32>
    %142 = tpu.matmul %141, %130, %cst_43 {dimension_numbers = #tpu.dot_dimension_numbers<[1], [0], [0], [1], [0, 0, 1, 1], [], []>} : vector<8x8xf32>, vector<8x8xf32>, vector<8x8xf32> -> vector<8x8xf32>
    %143 = vector.extract_strided_slice %125 {offsets = [8, 0], sizes = [8, 8], strides = [1, 1]} : vector<16x8xf32> to vector<8x8xf32>
    %144 = vector.extract_strided_slice %126 {offsets = [8, 0], sizes = [8, 8], strides = [1, 1]} : vector<16x8xf32> to vector<8x8xf32>
    %145 = vector.extract_strided_slice %127 {offsets = [8, 0], sizes = [8, 8], strides = [1, 1]} : vector<16x8xf32> to vector<8x8xf32>
    %cst_44 = arith.constant dense<0.000000e+00> : vector<8x8xf32>
    %146 = tpu.matmul %143, %144, %cst_44 {dimension_numbers = #tpu.dot_dimension_numbers<[1], [1], [0], [0], [0, 0, 1, 0], [], []>} : vector<8x8xf32>, vector<8x8xf32>, vector<8x8xf32> -> vector<8x8xf32>
    %147 = arith.addf %146, %49 : vector<8x8xf32>
    %cst_45 = arith.constant dense<0xFF800000> : vector<8xf32>
    %148 = vector.multi_reduction <maximumf>, %147, %cst_45 [1] : vector<8x8xf32> to vector<8xf32>
    %149 = vector.shape_cast %148 : vector<8xf32> to vector<8x1xf32>
    %150 = vector.broadcast %149 : vector<8x1xf32> to vector<8x8xf32>
    %151 = arith.subf %147, %150 : vector<8x8xf32>
    %152 = math.exp %151 : vector<8x8xf32>
    %cst_46 = arith.constant dense<0.000000e+00> : vector<8xf32>
    %153 = vector.multi_reduction <add>, %152, %cst_46 [1] : vector<8x8xf32> to vector<8xf32>
    %154 = vector.shape_cast %153 : vector<8xf32> to vector<8x1xf32>
    %155 = vector.broadcast %154 : vector<8x1xf32> to vector<8x8xf32>
    %156 = arith.divf %152, %155 : vector<8x8xf32>
    %cst_47 = arith.constant dense<0.000000e+00> : vector<8x8xf32>
    %157 = tpu.matmul %156, %145, %cst_47 {dimension_numbers = #tpu.dot_dimension_numbers<[1], [0], [0], [1], [0, 0, 1, 1], [], []>} : vector<8x8xf32>, vector<8x8xf32>, vector<8x8xf32> -> vector<8x8xf32>
    %158 = tpu.concatenate %142, %157 in 0 : vector<8x8xf32>, vector<8x8xf32> -> vector<16x8xf32>
    %159 = vector.extract_strided_slice %56 {offsets = [0, 24], sizes = [16, 8], strides = [1, 1]} : vector<16x96xf32> to vector<16x8xf32>
    %160 = vector.extract_strided_slice %56 {offsets = [0, 56], sizes = [16, 8], strides = [1, 1]} : vector<16x96xf32> to vector<16x8xf32>
    %161 = vector.extract_strided_slice %56 {offsets = [0, 88], sizes = [16, 8], strides = [1, 1]} : vector<16x96xf32> to vector<16x8xf32>
    %162 = vector.extract_strided_slice %159 {offsets = [0, 0], sizes = [8, 8], strides = [1, 1]} : vector<16x8xf32> to vector<8x8xf32>
    %163 = vector.extract_strided_slice %160 {offsets = [0, 0], sizes = [8, 8], strides = [1, 1]} : vector<16x8xf32> to vector<8x8xf32>
    %164 = vector.extract_strided_slice %161 {offsets = [0, 0], sizes = [8, 8], strides = [1, 1]} : vector<16x8xf32> to vector<8x8xf32>
    %cst_48 = arith.constant dense<0.000000e+00> : vector<8x8xf32>
    %165 = tpu.matmul %162, %163, %cst_48 {dimension_numbers = #tpu.dot_dimension_numbers<[1], [1], [0], [0], [0, 0, 1, 0], [], []>} : vector<8x8xf32>, vector<8x8xf32>, vector<8x8xf32> -> vector<8x8xf32>
    %166 = arith.addf %165, %46 : vector<8x8xf32>
    %cst_49 = arith.constant dense<0xFF800000> : vector<8xf32>
    %167 = vector.multi_reduction <maximumf>, %166, %cst_49 [1] : vector<8x8xf32> to vector<8xf32>
    %168 = vector.shape_cast %167 : vector<8xf32> to vector<8x1xf32>
    %169 = vector.broadcast %168 : vector<8x1xf32> to vector<8x8xf32>
    %170 = arith.subf %166, %169 : vector<8x8xf32>
    %171 = math.exp %170 : vector<8x8xf32>
    %cst_50 = arith.constant dense<0.000000e+00> : vector<8xf32>
    %172 = vector.multi_reduction <add>, %171, %cst_50 [1] : vector<8x8xf32> to vector<8xf32>
    %173 = vector.shape_cast %172 : vector<8xf32> to vector<8x1xf32>
    %174 = vector.broadcast %173 : vector<8x1xf32> to vector<8x8xf32>
    %175 = arith.divf %171, %174 : vector<8x8xf32>
    %cst_51 = arith.constant dense<0.000000e+00> : vector<8x8xf32>
    %176 = tpu.matmul %175, %164, %cst_51 {dimension_numbers = #tpu.dot_dimension_numbers<[1], [0], [0], [1], [0, 0, 1, 1], [], []>} : vector<8x8xf32>, vector<8x8xf32>, vector<8x8xf32> -> vector<8x8xf32>
    %177 = vector.extract_strided_slice %159 {offsets = [8, 0], sizes = [8, 8], strides = [1, 1]} : vector<16x8xf32> to vector<8x8xf32>
    %178 = vector.extract_strided_slice %160 {offsets = [8, 0], sizes = [8, 8], strides = [1, 1]} : vector<16x8xf32> to vector<8x8xf32>
    %179 = vector.extract_strided_slice %161 {offsets = [8, 0], sizes = [8, 8], strides = [1, 1]} : vector<16x8xf32> to vector<8x8xf32>
    %cst_52 = arith.constant dense<0.000000e+00> : vector<8x8xf32>
    %180 = tpu.matmul %177, %178, %cst_52 {dimension_numbers = #tpu.dot_dimension_numbers<[1], [1], [0], [0], [0, 0, 1, 0], [], []>} : vector<8x8xf32>, vector<8x8xf32>, vector<8x8xf32> -> vector<8x8xf32>
    %181 = arith.addf %180, %49 : vector<8x8xf32>
    %cst_53 = arith.constant dense<0xFF800000> : vector<8xf32>
    %182 = vector.multi_reduction <maximumf>, %181, %cst_53 [1] : vector<8x8xf32> to vector<8xf32>
    %183 = vector.shape_cast %182 : vector<8xf32> to vector<8x1xf32>
    %184 = vector.broadcast %183 : vector<8x1xf32> to vector<8x8xf32>
    %185 = arith.subf %181, %184 : vector<8x8xf32>
    %186 = math.exp %185 : vector<8x8xf32>
    %cst_54 = arith.constant dense<0.000000e+00> : vector<8xf32>
    %187 = vector.multi_reduction <add>, %186, %cst_54 [1] : vector<8x8xf32> to vector<8xf32>
    %188 = vector.shape_cast %187 : vector<8xf32> to vector<8x1xf32>
    %189 = vector.broadcast %188 : vector<8x1xf32> to vector<8x8xf32>
    %190 = arith.divf %186, %189 : vector<8x8xf32>
    %cst_55 = arith.constant dense<0.000000e+00> : vector<8x8xf32>
    %191 = tpu.matmul %190, %179, %cst_55 {dimension_numbers = #tpu.dot_dimension_numbers<[1], [0], [0], [1], [0, 0, 1, 1], [], []>} : vector<8x8xf32>, vector<8x8xf32>, vector<8x8xf32> -> vector<8x8xf32>
    %192 = tpu.concatenate %176, %191 in 0 : vector<8x8xf32>, vector<8x8xf32> -> vector<16x8xf32>
    %193 = tpu.concatenate %90, %124, %158, %192 in 1 : vector<16x8xf32>, vector<16x8xf32>, vector<16x8xf32>, vector<16x8xf32> -> vector<16x32xf32>
    %c0_56 = arith.constant 0 : index
    %c0_57 = arith.constant 0 : index
    %c0_58 = arith.constant 0 : index
    %194 = vector.load %arg4[%c0_56, %c0_57, %c0_58] : memref<2x32x32xf32, #tpu.memory_space<vmem>>, vector<1x32x32xf32>
    %195 = vector.shape_cast %194 : vector<1x32x32xf32> to vector<32x32xf32>
    %cst_59 = arith.constant dense<0.000000e+00> : vector<16x32xf32>
    %196 = tpu.matmul %193, %195, %cst_59 {dimension_numbers = #tpu.dot_dimension_numbers<[1], [0], [0], [1], [0, 0, 1, 1], [], []>} : vector<16x32xf32>, vector<32x32xf32>, vector<16x32xf32> -> vector<16x32xf32>
    %c0_60 = arith.constant 0 : index
    %c1_61 = arith.constant 1 : index
    %c0_62 = arith.constant 0 : index
    %197 = vector.load %arg7[%c0_60, %c1_61, %c0_62] : memref<2x8x96xf32, #tpu.memory_space<vmem>>, vector<1x1x32xf32>
    %198 = vector.shape_cast %197 : vector<1x1x32xf32> to vector<1x32xf32>
    %199 = vector.broadcast %198 : vector<1x32xf32> to vector<16x32xf32>
    %200 = arith.addf %196, %199 : vector<16x32xf32>
    %201 = arith.addf %200, %37 : vector<16x32xf32>
    %c0_63 = arith.constant 0 : index
    %c2 = arith.constant 2 : index
    %c0_64 = arith.constant 0 : index
    %202 = vector.load %arg7[%c0_63, %c2, %c0_64] : memref<2x8x96xf32, #tpu.memory_space<vmem>>, vector<1x1x32xf32>
    %203 = vector.shape_cast %202 : vector<1x1x32xf32> to vector<1x32xf32>
    %c0_65 = arith.constant 0 : index
    %c3 = arith.constant 3 : index
    %c0_66 = arith.constant 0 : index
    %204 = vector.load %arg7[%c0_65, %c3, %c0_66] : memref<2x8x96xf32, #tpu.memory_space<vmem>>, vector<1x1x32xf32>
    %205 = vector.shape_cast %204 : vector<1x1x32xf32> to vector<1x32xf32>
    %cst_67 = arith.constant dense<0.000000e+00> : vector<16xf32>
    %206 = vector.multi_reduction <add>, %201, %cst_67 [1] : vector<16x32xf32> to vector<16xf32>
    %207 = vector.shape_cast %206 : vector<16xf32> to vector<16x1xf32>
    %cst_68 = arith.constant 3.200000e+01 : f32
    %208 = vector.broadcast %cst_68 : f32 to vector<16x1xf32>
    %209 = arith.divf %207, %208 : vector<16x1xf32>
    %210 = vector.broadcast %209 : vector<16x1xf32> to vector<16x32xf32>
    %211 = arith.subf %201, %210 : vector<16x32xf32>
    %212 = arith.mulf %211, %211 : vector<16x32xf32>
    %cst_69 = arith.constant dense<0.000000e+00> : vector<16xf32>
    %213 = vector.multi_reduction <add>, %212, %cst_69 [1] : vector<16x32xf32> to vector<16xf32>
    %214 = vector.shape_cast %213 : vector<16xf32> to vector<16x1xf32>
    %cst_70 = arith.constant 3.200000e+01 : f32
    %215 = vector.broadcast %cst_70 : f32 to vector<16x1xf32>
    %216 = arith.divf %214, %215 : vector<16x1xf32>
    %cst_71 = arith.constant 9.99999996E-13 : f32
    %217 = vector.broadcast %cst_71 : f32 to vector<16x1xf32>
    %218 = arith.addf %216, %217 : vector<16x1xf32>
    %219 = math.rsqrt %218 : vector<16x1xf32>
    %220 = vector.broadcast %219 : vector<16x1xf32> to vector<16x32xf32>
    %221 = arith.mulf %211, %220 : vector<16x32xf32>
    %222 = vector.broadcast %203 : vector<1x32xf32> to vector<16x32xf32>
    %223 = arith.mulf %221, %222 : vector<16x32xf32>
    %224 = vector.broadcast %205 : vector<1x32xf32> to vector<16x32xf32>
    %225 = arith.addf %223, %224 : vector<16x32xf32>
    %c0_72 = arith.constant 0 : index
    %c0_73 = arith.constant 0 : index
    %c0_74 = arith.constant 0 : index
    %226 = vector.load %arg5[%c0_72, %c0_73, %c0_74] : memref<2x32x64xf32, #tpu.memory_space<vmem>>, vector<1x32x64xf32>
    %227 = vector.shape_cast %226 : vector<1x32x64xf32> to vector<32x64xf32>
    %cst_75 = arith.constant dense<0.000000e+00> : vector<16x64xf32>
    %228 = tpu.matmul %225, %227, %cst_75 {dimension_numbers = #tpu.dot_dimension_numbers<[1], [0], [0], [1], [0, 0, 1, 1], [], []>} : vector<16x32xf32>, vector<32x64xf32>, vector<16x64xf32> -> vector<16x64xf32>
    %c0_76 = arith.constant 0 : index
    %c4 = arith.constant 4 : index
    %c0_77 = arith.constant 0 : index
    %229 = vector.load %arg7[%c0_76, %c4, %c0_77] : memref<2x8x96xf32, #tpu.memory_space<vmem>>, vector<1x1x64xf32>
    %230 = vector.shape_cast %229 : vector<1x1x64xf32> to vector<1x64xf32>
    %231 = vector.broadcast %230 : vector<1x64xf32> to vector<16x64xf32>
    %232 = arith.addf %228, %231 : vector<16x64xf32>
    %233 = arith.mulf %232, %232 : vector<16x64xf32>
    %234 = arith.mulf %232, %233 : vector<16x64xf32>
    %cst_78 = arith.constant 4.471500e-02 : f32
    %235 = vector.broadcast %cst_78 : f32 to vector<16x64xf32>
    %236 = arith.mulf %235, %234 : vector<16x64xf32>
    %237 = arith.addf %232, %236 : vector<16x64xf32>
    %cst_79 = arith.constant 0.797884583 : f32
    %238 = vector.broadcast %cst_79 : f32 to vector<16x64xf32>
    %239 = arith.mulf %238, %237 : vector<16x64xf32>
    %240 = math.tanh %239 : vector<16x64xf32>
    %cst_80 = arith.constant 1.000000e+00 : f32
    %241 = vector.broadcast %cst_80 : f32 to vector<16x64xf32>
    %242 = arith.addf %241, %240 : vector<16x64xf32>
    %cst_81 = arith.constant 5.000000e-01 : f32
    %243 = vector.broadcast %cst_81 : f32 to vector<16x64xf32>
    %244 = arith.mulf %243, %242 : vector<16x64xf32>
    %245 = arith.mulf %232, %244 : vector<16x64xf32>
    %c0_82 = arith.constant 0 : index
    %c0_83 = arith.constant 0 : index
    %c0_84 = arith.constant 0 : index
    %246 = vector.load %arg6[%c0_82, %c0_83, %c0_84] : memref<2x64x32xf32, #tpu.memory_space<vmem>>, vector<1x64x32xf32>
    %247 = vector.shape_cast %246 : vector<1x64x32xf32> to vector<64x32xf32>
    %cst_85 = arith.constant dense<0.000000e+00> : vector<16x32xf32>
    %248 = tpu.matmul %245, %247, %cst_85 {dimension_numbers = #tpu.dot_dimension_numbers<[1], [0], [0], [1], [0, 0, 1, 1], [], []>} : vector<16x64xf32>, vector<64x32xf32>, vector<16x32xf32> -> vector<16x32xf32>
    %c0_86 = arith.constant 0 : index
    %c5 = arith.constant 5 : index
    %c0_87 = arith.constant 0 : index
    %249 = vector.load %arg7[%c0_86, %c5, %c0_87] : memref<2x8x96xf32, #tpu.memory_space<vmem>>, vector<1x1x32xf32>
    %250 = vector.shape_cast %249 : vector<1x1x32xf32> to vector<1x32xf32>
    %251 = vector.broadcast %250 : vector<1x32xf32> to vector<16x32xf32>
    %252 = arith.addf %248, %251 : vector<16x32xf32>
    %253 = arith.addf %252, %225 : vector<16x32xf32>
    %c0_88 = arith.constant 0 : index
    %c6 = arith.constant 6 : index
    %c0_89 = arith.constant 0 : index
    %254 = vector.load %arg7[%c0_88, %c6, %c0_89] : memref<2x8x96xf32, #tpu.memory_space<vmem>>, vector<1x1x32xf32>
    %255 = vector.shape_cast %254 : vector<1x1x32xf32> to vector<1x32xf32>
    %c0_90 = arith.constant 0 : index
    %c7 = arith.constant 7 : index
    %c0_91 = arith.constant 0 : index
    %256 = vector.load %arg7[%c0_90, %c7, %c0_91] : memref<2x8x96xf32, #tpu.memory_space<vmem>>, vector<1x1x32xf32>
    %257 = vector.shape_cast %256 : vector<1x1x32xf32> to vector<1x32xf32>
    %cst_92 = arith.constant dense<0.000000e+00> : vector<16xf32>
    %258 = vector.multi_reduction <add>, %253, %cst_92 [1] : vector<16x32xf32> to vector<16xf32>
    %259 = vector.shape_cast %258 : vector<16xf32> to vector<16x1xf32>
    %cst_93 = arith.constant 3.200000e+01 : f32
    %260 = vector.broadcast %cst_93 : f32 to vector<16x1xf32>
    %261 = arith.divf %259, %260 : vector<16x1xf32>
    %262 = vector.broadcast %261 : vector<16x1xf32> to vector<16x32xf32>
    %263 = arith.subf %253, %262 : vector<16x32xf32>
    %264 = arith.mulf %263, %263 : vector<16x32xf32>
    %cst_94 = arith.constant dense<0.000000e+00> : vector<16xf32>
    %265 = vector.multi_reduction <add>, %264, %cst_94 [1] : vector<16x32xf32> to vector<16xf32>
    %266 = vector.shape_cast %265 : vector<16xf32> to vector<16x1xf32>
    %cst_95 = arith.constant 3.200000e+01 : f32
    %267 = vector.broadcast %cst_95 : f32 to vector<16x1xf32>
    %268 = arith.divf %266, %267 : vector<16x1xf32>
    %cst_96 = arith.constant 9.99999996E-13 : f32
    %269 = vector.broadcast %cst_96 : f32 to vector<16x1xf32>
    %270 = arith.addf %268, %269 : vector<16x1xf32>
    %271 = math.rsqrt %270 : vector<16x1xf32>
    %272 = vector.broadcast %271 : vector<16x1xf32> to vector<16x32xf32>
    %273 = arith.mulf %263, %272 : vector<16x32xf32>
    %274 = vector.broadcast %255 : vector<1x32xf32> to vector<16x32xf32>
    %275 = arith.mulf %273, %274 : vector<16x32xf32>
    %276 = vector.broadcast %257 : vector<1x32xf32> to vector<16x32xf32>
    %277 = arith.addf %275, %276 : vector<16x32xf32>
    %c1_97 = arith.constant 1 : index
    %c0_98 = arith.constant 0 : index
    %c0_99 = arith.constant 0 : index
    %278 = vector.load %arg3[%c1_97, %c0_98, %c0_99] : memref<2x32x96xf32, #tpu.memory_space<vmem>>, vector<1x32x96xf32>
    %279 = vector.shape_cast %278 : vector<1x32x96xf32> to vector<32x96xf32>
    %cst_100 = arith.constant dense<0.000000e+00> : vector<16x96xf32>
    %280 = tpu.matmul %277, %279, %cst_100 {dimension_numbers = #tpu.dot_dimension_numbers<[1], [0], [0], [1], [0, 0, 1, 1], [], []>} : vector<16x32xf32>, vector<32x96xf32>, vector<16x96xf32> -> vector<16x96xf32>
    %c1_101 = arith.constant 1 : index
    %c0_102 = arith.constant 0 : index
    %c0_103 = arith.constant 0 : index
    %281 = vector.load %arg7[%c1_101, %c0_102, %c0_103] : memref<2x8x96xf32, #tpu.memory_space<vmem>>, vector<1x1x96xf32>
    %282 = vector.shape_cast %281 : vector<1x1x96xf32> to vector<1x96xf32>
    %283 = vector.broadcast %282 : vector<1x96xf32> to vector<16x96xf32>
    %284 = arith.addf %280, %283 : vector<16x96xf32>
    %285 = vector.extract_strided_slice %284 {offsets = [0, 0], sizes = [16, 8], strides = [1, 1]} : vector<16x96xf32> to vector<16x8xf32>
    %286 = vector.extract_strided_slice %284 {offsets = [0, 32], sizes = [16, 8], strides = [1, 1]} : vector<16x96xf32> to vector<16x8xf32>
    %287 = vector.extract_strided_slice %284 {offsets = [0, 64], sizes = [16, 8], strides = [1, 1]} : vector<16x96xf32> to vector<16x8xf32>
    %288 = vector.extract_strided_slice %285 {offsets = [0, 0], sizes = [8, 8], strides = [1, 1]} : vector<16x8xf32> to vector<8x8xf32>
    %289 = vector.extract_strided_slice %286 {offsets = [0, 0], sizes = [8, 8], strides = [1, 1]} : vector<16x8xf32> to vector<8x8xf32>
    %290 = vector.extract_strided_slice %287 {offsets = [0, 0], sizes = [8, 8], strides = [1, 1]} : vector<16x8xf32> to vector<8x8xf32>
    %cst_104 = arith.constant dense<0.000000e+00> : vector<8x8xf32>
    %291 = tpu.matmul %288, %289, %cst_104 {dimension_numbers = #tpu.dot_dimension_numbers<[1], [1], [0], [0], [0, 0, 1, 0], [], []>} : vector<8x8xf32>, vector<8x8xf32>, vector<8x8xf32> -> vector<8x8xf32>
    %292 = arith.addf %291, %46 : vector<8x8xf32>
    %cst_105 = arith.constant dense<0xFF800000> : vector<8xf32>
    %293 = vector.multi_reduction <maximumf>, %292, %cst_105 [1] : vector<8x8xf32> to vector<8xf32>
    %294 = vector.shape_cast %293 : vector<8xf32> to vector<8x1xf32>
    %295 = vector.broadcast %294 : vector<8x1xf32> to vector<8x8xf32>
    %296 = arith.subf %292, %295 : vector<8x8xf32>
    %297 = math.exp %296 : vector<8x8xf32>
    %cst_106 = arith.constant dense<0.000000e+00> : vector<8xf32>
    %298 = vector.multi_reduction <add>, %297, %cst_106 [1] : vector<8x8xf32> to vector<8xf32>
    %299 = vector.shape_cast %298 : vector<8xf32> to vector<8x1xf32>
    %300 = vector.broadcast %299 : vector<8x1xf32> to vector<8x8xf32>
    %301 = arith.divf %297, %300 : vector<8x8xf32>
    %cst_107 = arith.constant dense<0.000000e+00> : vector<8x8xf32>
    %302 = tpu.matmul %301, %290, %cst_107 {dimension_numbers = #tpu.dot_dimension_numbers<[1], [0], [0], [1], [0, 0, 1, 1], [], []>} : vector<8x8xf32>, vector<8x8xf32>, vector<8x8xf32> -> vector<8x8xf32>
    %303 = vector.extract_strided_slice %285 {offsets = [8, 0], sizes = [8, 8], strides = [1, 1]} : vector<16x8xf32> to vector<8x8xf32>
    %304 = vector.extract_strided_slice %286 {offsets = [8, 0], sizes = [8, 8], strides = [1, 1]} : vector<16x8xf32> to vector<8x8xf32>
    %305 = vector.extract_strided_slice %287 {offsets = [8, 0], sizes = [8, 8], strides = [1, 1]} : vector<16x8xf32> to vector<8x8xf32>
    %cst_108 = arith.constant dense<0.000000e+00> : vector<8x8xf32>
    %306 = tpu.matmul %303, %304, %cst_108 {dimension_numbers = #tpu.dot_dimension_numbers<[1], [1], [0], [0], [0, 0, 1, 0], [], []>} : vector<8x8xf32>, vector<8x8xf32>, vector<8x8xf32> -> vector<8x8xf32>
    %307 = arith.addf %306, %49 : vector<8x8xf32>
    %cst_109 = arith.constant dense<0xFF800000> : vector<8xf32>
    %308 = vector.multi_reduction <maximumf>, %307, %cst_109 [1] : vector<8x8xf32> to vector<8xf32>
    %309 = vector.shape_cast %308 : vector<8xf32> to vector<8x1xf32>
    %310 = vector.broadcast %309 : vector<8x1xf32> to vector<8x8xf32>
    %311 = arith.subf %307, %310 : vector<8x8xf32>
    %312 = math.exp %311 : vector<8x8xf32>
    %cst_110 = arith.constant dense<0.000000e+00> : vector<8xf32>
    %313 = vector.multi_reduction <add>, %312, %cst_110 [1] : vector<8x8xf32> to vector<8xf32>
    %314 = vector.shape_cast %313 : vector<8xf32> to vector<8x1xf32>
    %315 = vector.broadcast %314 : vector<8x1xf32> to vector<8x8xf32>
    %316 = arith.divf %312, %315 : vector<8x8xf32>
    %cst_111 = arith.constant dense<0.000000e+00> : vector<8x8xf32>
    %317 = tpu.matmul %316, %305, %cst_111 {dimension_numbers = #tpu.dot_dimension_numbers<[1], [0], [0], [1], [0, 0, 1, 1], [], []>} : vector<8x8xf32>, vector<8x8xf32>, vector<8x8xf32> -> vector<8x8xf32>
    %318 = tpu.concatenate %302, %317 in 0 : vector<8x8xf32>, vector<8x8xf32> -> vector<16x8xf32>
    %319 = vector.extract_strided_slice %284 {offsets = [0, 8], sizes = [16, 8], strides = [1, 1]} : vector<16x96xf32> to vector<16x8xf32>
    %320 = vector.extract_strided_slice %284 {offsets = [0, 40], sizes = [16, 8], strides = [1, 1]} : vector<16x96xf32> to vector<16x8xf32>
    %321 = vector.extract_strided_slice %284 {offsets = [0, 72], sizes = [16, 8], strides = [1, 1]} : vector<16x96xf32> to vector<16x8xf32>
    %322 = vector.extract_strided_slice %319 {offsets = [0, 0], sizes = [8, 8], strides = [1, 1]} : vector<16x8xf32> to vector<8x8xf32>
    %323 = vector.extract_strided_slice %320 {offsets = [0, 0], sizes = [8, 8], strides = [1, 1]} : vector<16x8xf32> to vector<8x8xf32>
    %324 = vector.extract_strided_slice %321 {offsets = [0, 0], sizes = [8, 8], strides = [1, 1]} : vector<16x8xf32> to vector<8x8xf32>
    %cst_112 = arith.constant dense<0.000000e+00> : vector<8x8xf32>
    %325 = tpu.matmul %322, %323, %cst_112 {dimension_numbers = #tpu.dot_dimension_numbers<[1], [1], [0], [0], [0, 0, 1, 0], [], []>} : vector<8x8xf32>, vector<8x8xf32>, vector<8x8xf32> -> vector<8x8xf32>
    %326 = arith.addf %325, %46 : vector<8x8xf32>
    %cst_113 = arith.constant dense<0xFF800000> : vector<8xf32>
    %327 = vector.multi_reduction <maximumf>, %326, %cst_113 [1] : vector<8x8xf32> to vector<8xf32>
    %328 = vector.shape_cast %327 : vector<8xf32> to vector<8x1xf32>
    %329 = vector.broadcast %328 : vector<8x1xf32> to vector<8x8xf32>
    %330 = arith.subf %326, %329 : vector<8x8xf32>
    %331 = math.exp %330 : vector<8x8xf32>
    %cst_114 = arith.constant dense<0.000000e+00> : vector<8xf32>
    %332 = vector.multi_reduction <add>, %331, %cst_114 [1] : vector<8x8xf32> to vector<8xf32>
    %333 = vector.shape_cast %332 : vector<8xf32> to vector<8x1xf32>
    %334 = vector.broadcast %333 : vector<8x1xf32> to vector<8x8xf32>
    %335 = arith.divf %331, %334 : vector<8x8xf32>
    %cst_115 = arith.constant dense<0.000000e+00> : vector<8x8xf32>
    %336 = tpu.matmul %335, %324, %cst_115 {dimension_numbers = #tpu.dot_dimension_numbers<[1], [0], [0], [1], [0, 0, 1, 1], [], []>} : vector<8x8xf32>, vector<8x8xf32>, vector<8x8xf32> -> vector<8x8xf32>
    %337 = vector.extract_strided_slice %319 {offsets = [8, 0], sizes = [8, 8], strides = [1, 1]} : vector<16x8xf32> to vector<8x8xf32>
    %338 = vector.extract_strided_slice %320 {offsets = [8, 0], sizes = [8, 8], strides = [1, 1]} : vector<16x8xf32> to vector<8x8xf32>
    %339 = vector.extract_strided_slice %321 {offsets = [8, 0], sizes = [8, 8], strides = [1, 1]} : vector<16x8xf32> to vector<8x8xf32>
    %cst_116 = arith.constant dense<0.000000e+00> : vector<8x8xf32>
    %340 = tpu.matmul %337, %338, %cst_116 {dimension_numbers = #tpu.dot_dimension_numbers<[1], [1], [0], [0], [0, 0, 1, 0], [], []>} : vector<8x8xf32>, vector<8x8xf32>, vector<8x8xf32> -> vector<8x8xf32>
    %341 = arith.addf %340, %49 : vector<8x8xf32>
    %cst_117 = arith.constant dense<0xFF800000> : vector<8xf32>
    %342 = vector.multi_reduction <maximumf>, %341, %cst_117 [1] : vector<8x8xf32> to vector<8xf32>
    %343 = vector.shape_cast %342 : vector<8xf32> to vector<8x1xf32>
    %344 = vector.broadcast %343 : vector<8x1xf32> to vector<8x8xf32>
    %345 = arith.subf %341, %344 : vector<8x8xf32>
    %346 = math.exp %345 : vector<8x8xf32>
    %cst_118 = arith.constant dense<0.000000e+00> : vector<8xf32>
    %347 = vector.multi_reduction <add>, %346, %cst_118 [1] : vector<8x8xf32> to vector<8xf32>
    %348 = vector.shape_cast %347 : vector<8xf32> to vector<8x1xf32>
    %349 = vector.broadcast %348 : vector<8x1xf32> to vector<8x8xf32>
    %350 = arith.divf %346, %349 : vector<8x8xf32>
    %cst_119 = arith.constant dense<0.000000e+00> : vector<8x8xf32>
    %351 = tpu.matmul %350, %339, %cst_119 {dimension_numbers = #tpu.dot_dimension_numbers<[1], [0], [0], [1], [0, 0, 1, 1], [], []>} : vector<8x8xf32>, vector<8x8xf32>, vector<8x8xf32> -> vector<8x8xf32>
    %352 = tpu.concatenate %336, %351 in 0 : vector<8x8xf32>, vector<8x8xf32> -> vector<16x8xf32>
    %353 = vector.extract_strided_slice %284 {offsets = [0, 16], sizes = [16, 8], strides = [1, 1]} : vector<16x96xf32> to vector<16x8xf32>
    %354 = vector.extract_strided_slice %284 {offsets = [0, 48], sizes = [16, 8], strides = [1, 1]} : vector<16x96xf32> to vector<16x8xf32>
    %355 = vector.extract_strided_slice %284 {offsets = [0, 80], sizes = [16, 8], strides = [1, 1]} : vector<16x96xf32> to vector<16x8xf32>
    %356 = vector.extract_strided_slice %353 {offsets = [0, 0], sizes = [8, 8], strides = [1, 1]} : vector<16x8xf32> to vector<8x8xf32>
    %357 = vector.extract_strided_slice %354 {offsets = [0, 0], sizes = [8, 8], strides = [1, 1]} : vector<16x8xf32> to vector<8x8xf32>
    %358 = vector.extract_strided_slice %355 {offsets = [0, 0], sizes = [8, 8], strides = [1, 1]} : vector<16x8xf32> to vector<8x8xf32>
    %cst_120 = arith.constant dense<0.000000e+00> : vector<8x8xf32>
    %359 = tpu.matmul %356, %357, %cst_120 {dimension_numbers = #tpu.dot_dimension_numbers<[1], [1], [0], [0], [0, 0, 1, 0], [], []>} : vector<8x8xf32>, vector<8x8xf32>, vector<8x8xf32> -> vector<8x8xf32>
    %360 = arith.addf %359, %46 : vector<8x8xf32>
    %cst_121 = arith.constant dense<0xFF800000> : vector<8xf32>
    %361 = vector.multi_reduction <maximumf>, %360, %cst_121 [1] : vector<8x8xf32> to vector<8xf32>
    %362 = vector.shape_cast %361 : vector<8xf32> to vector<8x1xf32>
    %363 = vector.broadcast %362 : vector<8x1xf32> to vector<8x8xf32>
    %364 = arith.subf %360, %363 : vector<8x8xf32>
    %365 = math.exp %364 : vector<8x8xf32>
    %cst_122 = arith.constant dense<0.000000e+00> : vector<8xf32>
    %366 = vector.multi_reduction <add>, %365, %cst_122 [1] : vector<8x8xf32> to vector<8xf32>
    %367 = vector.shape_cast %366 : vector<8xf32> to vector<8x1xf32>
    %368 = vector.broadcast %367 : vector<8x1xf32> to vector<8x8xf32>
    %369 = arith.divf %365, %368 : vector<8x8xf32>
    %cst_123 = arith.constant dense<0.000000e+00> : vector<8x8xf32>
    %370 = tpu.matmul %369, %358, %cst_123 {dimension_numbers = #tpu.dot_dimension_numbers<[1], [0], [0], [1], [0, 0, 1, 1], [], []>} : vector<8x8xf32>, vector<8x8xf32>, vector<8x8xf32> -> vector<8x8xf32>
    %371 = vector.extract_strided_slice %353 {offsets = [8, 0], sizes = [8, 8], strides = [1, 1]} : vector<16x8xf32> to vector<8x8xf32>
    %372 = vector.extract_strided_slice %354 {offsets = [8, 0], sizes = [8, 8], strides = [1, 1]} : vector<16x8xf32> to vector<8x8xf32>
    %373 = vector.extract_strided_slice %355 {offsets = [8, 0], sizes = [8, 8], strides = [1, 1]} : vector<16x8xf32> to vector<8x8xf32>
    %cst_124 = arith.constant dense<0.000000e+00> : vector<8x8xf32>
    %374 = tpu.matmul %371, %372, %cst_124 {dimension_numbers = #tpu.dot_dimension_numbers<[1], [1], [0], [0], [0, 0, 1, 0], [], []>} : vector<8x8xf32>, vector<8x8xf32>, vector<8x8xf32> -> vector<8x8xf32>
    %375 = arith.addf %374, %49 : vector<8x8xf32>
    %cst_125 = arith.constant dense<0xFF800000> : vector<8xf32>
    %376 = vector.multi_reduction <maximumf>, %375, %cst_125 [1] : vector<8x8xf32> to vector<8xf32>
    %377 = vector.shape_cast %376 : vector<8xf32> to vector<8x1xf32>
    %378 = vector.broadcast %377 : vector<8x1xf32> to vector<8x8xf32>
    %379 = arith.subf %375, %378 : vector<8x8xf32>
    %380 = math.exp %379 : vector<8x8xf32>
    %cst_126 = arith.constant dense<0.000000e+00> : vector<8xf32>
    %381 = vector.multi_reduction <add>, %380, %cst_126 [1] : vector<8x8xf32> to vector<8xf32>
    %382 = vector.shape_cast %381 : vector<8xf32> to vector<8x1xf32>
    %383 = vector.broadcast %382 : vector<8x1xf32> to vector<8x8xf32>
    %384 = arith.divf %380, %383 : vector<8x8xf32>
    %cst_127 = arith.constant dense<0.000000e+00> : vector<8x8xf32>
    %385 = tpu.matmul %384, %373, %cst_127 {dimension_numbers = #tpu.dot_dimension_numbers<[1], [0], [0], [1], [0, 0, 1, 1], [], []>} : vector<8x8xf32>, vector<8x8xf32>, vector<8x8xf32> -> vector<8x8xf32>
    %386 = tpu.concatenate %370, %385 in 0 : vector<8x8xf32>, vector<8x8xf32> -> vector<16x8xf32>
    %387 = vector.extract_strided_slice %284 {offsets = [0, 24], sizes = [16, 8], strides = [1, 1]} : vector<16x96xf32> to vector<16x8xf32>
    %388 = vector.extract_strided_slice %284 {offsets = [0, 56], sizes = [16, 8], strides = [1, 1]} : vector<16x96xf32> to vector<16x8xf32>
    %389 = vector.extract_strided_slice %284 {offsets = [0, 88], sizes = [16, 8], strides = [1, 1]} : vector<16x96xf32> to vector<16x8xf32>
    %390 = vector.extract_strided_slice %387 {offsets = [0, 0], sizes = [8, 8], strides = [1, 1]} : vector<16x8xf32> to vector<8x8xf32>
    %391 = vector.extract_strided_slice %388 {offsets = [0, 0], sizes = [8, 8], strides = [1, 1]} : vector<16x8xf32> to vector<8x8xf32>
    %392 = vector.extract_strided_slice %389 {offsets = [0, 0], sizes = [8, 8], strides = [1, 1]} : vector<16x8xf32> to vector<8x8xf32>
    %cst_128 = arith.constant dense<0.000000e+00> : vector<8x8xf32>
    %393 = tpu.matmul %390, %391, %cst_128 {dimension_numbers = #tpu.dot_dimension_numbers<[1], [1], [0], [0], [0, 0, 1, 0], [], []>} : vector<8x8xf32>, vector<8x8xf32>, vector<8x8xf32> -> vector<8x8xf32>
    %394 = arith.addf %393, %46 : vector<8x8xf32>
    %cst_129 = arith.constant dense<0xFF800000> : vector<8xf32>
    %395 = vector.multi_reduction <maximumf>, %394, %cst_129 [1] : vector<8x8xf32> to vector<8xf32>
    %396 = vector.shape_cast %395 : vector<8xf32> to vector<8x1xf32>
    %397 = vector.broadcast %396 : vector<8x1xf32> to vector<8x8xf32>
    %398 = arith.subf %394, %397 : vector<8x8xf32>
    %399 = math.exp %398 : vector<8x8xf32>
    %cst_130 = arith.constant dense<0.000000e+00> : vector<8xf32>
    %400 = vector.multi_reduction <add>, %399, %cst_130 [1] : vector<8x8xf32> to vector<8xf32>
    %401 = vector.shape_cast %400 : vector<8xf32> to vector<8x1xf32>
    %402 = vector.broadcast %401 : vector<8x1xf32> to vector<8x8xf32>
    %403 = arith.divf %399, %402 : vector<8x8xf32>
    %cst_131 = arith.constant dense<0.000000e+00> : vector<8x8xf32>
    %404 = tpu.matmul %403, %392, %cst_131 {dimension_numbers = #tpu.dot_dimension_numbers<[1], [0], [0], [1], [0, 0, 1, 1], [], []>} : vector<8x8xf32>, vector<8x8xf32>, vector<8x8xf32> -> vector<8x8xf32>
    %405 = vector.extract_strided_slice %387 {offsets = [8, 0], sizes = [8, 8], strides = [1, 1]} : vector<16x8xf32> to vector<8x8xf32>
    %406 = vector.extract_strided_slice %388 {offsets = [8, 0], sizes = [8, 8], strides = [1, 1]} : vector<16x8xf32> to vector<8x8xf32>
    %407 = vector.extract_strided_slice %389 {offsets = [8, 0], sizes = [8, 8], strides = [1, 1]} : vector<16x8xf32> to vector<8x8xf32>
    %cst_132 = arith.constant dense<0.000000e+00> : vector<8x8xf32>
    %408 = tpu.matmul %405, %406, %cst_132 {dimension_numbers = #tpu.dot_dimension_numbers<[1], [1], [0], [0], [0, 0, 1, 0], [], []>} : vector<8x8xf32>, vector<8x8xf32>, vector<8x8xf32> -> vector<8x8xf32>
    %409 = arith.addf %408, %49 : vector<8x8xf32>
    %cst_133 = arith.constant dense<0xFF800000> : vector<8xf32>
    %410 = vector.multi_reduction <maximumf>, %409, %cst_133 [1] : vector<8x8xf32> to vector<8xf32>
    %411 = vector.shape_cast %410 : vector<8xf32> to vector<8x1xf32>
    %412 = vector.broadcast %411 : vector<8x1xf32> to vector<8x8xf32>
    %413 = arith.subf %409, %412 : vector<8x8xf32>
    %414 = math.exp %413 : vector<8x8xf32>
    %cst_134 = arith.constant dense<0.000000e+00> : vector<8xf32>
    %415 = vector.multi_reduction <add>, %414, %cst_134 [1] : vector<8x8xf32> to vector<8xf32>
    %416 = vector.shape_cast %415 : vector<8xf32> to vector<8x1xf32>
    %417 = vector.broadcast %416 : vector<8x1xf32> to vector<8x8xf32>
    %418 = arith.divf %414, %417 : vector<8x8xf32>
    %cst_135 = arith.constant dense<0.000000e+00> : vector<8x8xf32>
    %419 = tpu.matmul %418, %407, %cst_135 {dimension_numbers = #tpu.dot_dimension_numbers<[1], [0], [0], [1], [0, 0, 1, 1], [], []>} : vector<8x8xf32>, vector<8x8xf32>, vector<8x8xf32> -> vector<8x8xf32>
    %420 = tpu.concatenate %404, %419 in 0 : vector<8x8xf32>, vector<8x8xf32> -> vector<16x8xf32>
    %421 = tpu.concatenate %318, %352, %386, %420 in 1 : vector<16x8xf32>, vector<16x8xf32>, vector<16x8xf32>, vector<16x8xf32> -> vector<16x32xf32>
    %c1_136 = arith.constant 1 : index
    %c0_137 = arith.constant 0 : index
    %c0_138 = arith.constant 0 : index
    %422 = vector.load %arg4[%c1_136, %c0_137, %c0_138] : memref<2x32x32xf32, #tpu.memory_space<vmem>>, vector<1x32x32xf32>
    %423 = vector.shape_cast %422 : vector<1x32x32xf32> to vector<32x32xf32>
    %cst_139 = arith.constant dense<0.000000e+00> : vector<16x32xf32>
    %424 = tpu.matmul %421, %423, %cst_139 {dimension_numbers = #tpu.dot_dimension_numbers<[1], [0], [0], [1], [0, 0, 1, 1], [], []>} : vector<16x32xf32>, vector<32x32xf32>, vector<16x32xf32> -> vector<16x32xf32>
    %c1_140 = arith.constant 1 : index
    %c1_141 = arith.constant 1 : index
    %c0_142 = arith.constant 0 : index
    %425 = vector.load %arg7[%c1_140, %c1_141, %c0_142] : memref<2x8x96xf32, #tpu.memory_space<vmem>>, vector<1x1x32xf32>
    %426 = vector.shape_cast %425 : vector<1x1x32xf32> to vector<1x32xf32>
    %427 = vector.broadcast %426 : vector<1x32xf32> to vector<16x32xf32>
    %428 = arith.addf %424, %427 : vector<16x32xf32>
    %429 = arith.addf %428, %277 : vector<16x32xf32>
    %c1_143 = arith.constant 1 : index
    %c2_144 = arith.constant 2 : index
    %c0_145 = arith.constant 0 : index
    %430 = vector.load %arg7[%c1_143, %c2_144, %c0_145] : memref<2x8x96xf32, #tpu.memory_space<vmem>>, vector<1x1x32xf32>
    %431 = vector.shape_cast %430 : vector<1x1x32xf32> to vector<1x32xf32>
    %c1_146 = arith.constant 1 : index
    %c3_147 = arith.constant 3 : index
    %c0_148 = arith.constant 0 : index
    %432 = vector.load %arg7[%c1_146, %c3_147, %c0_148] : memref<2x8x96xf32, #tpu.memory_space<vmem>>, vector<1x1x32xf32>
    %433 = vector.shape_cast %432 : vector<1x1x32xf32> to vector<1x32xf32>
    %cst_149 = arith.constant dense<0.000000e+00> : vector<16xf32>
    %434 = vector.multi_reduction <add>, %429, %cst_149 [1] : vector<16x32xf32> to vector<16xf32>
    %435 = vector.shape_cast %434 : vector<16xf32> to vector<16x1xf32>
    %cst_150 = arith.constant 3.200000e+01 : f32
    %436 = vector.broadcast %cst_150 : f32 to vector<16x1xf32>
    %437 = arith.divf %435, %436 : vector<16x1xf32>
    %438 = vector.broadcast %437 : vector<16x1xf32> to vector<16x32xf32>
    %439 = arith.subf %429, %438 : vector<16x32xf32>
    %440 = arith.mulf %439, %439 : vector<16x32xf32>
    %cst_151 = arith.constant dense<0.000000e+00> : vector<16xf32>
    %441 = vector.multi_reduction <add>, %440, %cst_151 [1] : vector<16x32xf32> to vector<16xf32>
    %442 = vector.shape_cast %441 : vector<16xf32> to vector<16x1xf32>
    %cst_152 = arith.constant 3.200000e+01 : f32
    %443 = vector.broadcast %cst_152 : f32 to vector<16x1xf32>
    %444 = arith.divf %442, %443 : vector<16x1xf32>
    %cst_153 = arith.constant 9.99999996E-13 : f32
    %445 = vector.broadcast %cst_153 : f32 to vector<16x1xf32>
    %446 = arith.addf %444, %445 : vector<16x1xf32>
    %447 = math.rsqrt %446 : vector<16x1xf32>
    %448 = vector.broadcast %447 : vector<16x1xf32> to vector<16x32xf32>
    %449 = arith.mulf %439, %448 : vector<16x32xf32>
    %450 = vector.broadcast %431 : vector<1x32xf32> to vector<16x32xf32>
    %451 = arith.mulf %449, %450 : vector<16x32xf32>
    %452 = vector.broadcast %433 : vector<1x32xf32> to vector<16x32xf32>
    %453 = arith.addf %451, %452 : vector<16x32xf32>
    %c1_154 = arith.constant 1 : index
    %c0_155 = arith.constant 0 : index
    %c0_156 = arith.constant 0 : index
    %454 = vector.load %arg5[%c1_154, %c0_155, %c0_156] : memref<2x32x64xf32, #tpu.memory_space<vmem>>, vector<1x32x64xf32>
    %455 = vector.shape_cast %454 : vector<1x32x64xf32> to vector<32x64xf32>
    %cst_157 = arith.constant dense<0.000000e+00> : vector<16x64xf32>
    %456 = tpu.matmul %453, %455, %cst_157 {dimension_numbers = #tpu.dot_dimension_numbers<[1], [0], [0], [1], [0, 0, 1, 1], [], []>} : vector<16x32xf32>, vector<32x64xf32>, vector<16x64xf32> -> vector<16x64xf32>
    %c1_158 = arith.constant 1 : index
    %c4_159 = arith.constant 4 : index
    %c0_160 = arith.constant 0 : index
    %457 = vector.load %arg7[%c1_158, %c4_159, %c0_160] : memref<2x8x96xf32, #tpu.memory_space<vmem>>, vector<1x1x64xf32>
    %458 = vector.shape_cast %457 : vector<1x1x64xf32> to vector<1x64xf32>
    %459 = vector.broadcast %458 : vector<1x64xf32> to vector<16x64xf32>
    %460 = arith.addf %456, %459 : vector<16x64xf32>
    %461 = arith.mulf %460, %460 : vector<16x64xf32>
    %462 = arith.mulf %460, %461 : vector<16x64xf32>
    %cst_161 = arith.constant 4.471500e-02 : f32
    %463 = vector.broadcast %cst_161 : f32 to vector<16x64xf32>
    %464 = arith.mulf %463, %462 : vector<16x64xf32>
    %465 = arith.addf %460, %464 : vector<16x64xf32>
    %cst_162 = arith.constant 0.797884583 : f32
    %466 = vector.broadcast %cst_162 : f32 to vector<16x64xf32>
    %467 = arith.mulf %466, %465 : vector<16x64xf32>
    %468 = math.tanh %467 : vector<16x64xf32>
    %cst_163 = arith.constant 1.000000e+00 : f32
    %469 = vector.broadcast %cst_163 : f32 to vector<16x64xf32>
    %470 = arith.addf %469, %468 : vector<16x64xf32>
    %cst_164 = arith.constant 5.000000e-01 : f32
    %471 = vector.broadcast %cst_164 : f32 to vector<16x64xf32>
    %472 = arith.mulf %471, %470 : vector<16x64xf32>
    %473 = arith.mulf %460, %472 : vector<16x64xf32>
    %c1_165 = arith.constant 1 : index
    %c0_166 = arith.constant 0 : index
    %c0_167 = arith.constant 0 : index
    %474 = vector.load %arg6[%c1_165, %c0_166, %c0_167] : memref<2x64x32xf32, #tpu.memory_space<vmem>>, vector<1x64x32xf32>
    %475 = vector.shape_cast %474 : vector<1x64x32xf32> to vector<64x32xf32>
    %cst_168 = arith.constant dense<0.000000e+00> : vector<16x32xf32>
    %476 = tpu.matmul %473, %475, %cst_168 {dimension_numbers = #tpu.dot_dimension_numbers<[1], [0], [0], [1], [0, 0, 1, 1], [], []>} : vector<16x64xf32>, vector<64x32xf32>, vector<16x32xf32> -> vector<16x32xf32>
    %c1_169 = arith.constant 1 : index
    %c5_170 = arith.constant 5 : index
    %c0_171 = arith.constant 0 : index
    %477 = vector.load %arg7[%c1_169, %c5_170, %c0_171] : memref<2x8x96xf32, #tpu.memory_space<vmem>>, vector<1x1x32xf32>
    %478 = vector.shape_cast %477 : vector<1x1x32xf32> to vector<1x32xf32>
    %479 = vector.broadcast %478 : vector<1x32xf32> to vector<16x32xf32>
    %480 = arith.addf %476, %479 : vector<16x32xf32>
    %481 = arith.addf %480, %453 : vector<16x32xf32>
    %c1_172 = arith.constant 1 : index
    %c6_173 = arith.constant 6 : index
    %c0_174 = arith.constant 0 : index
    %482 = vector.load %arg7[%c1_172, %c6_173, %c0_174] : memref<2x8x96xf32, #tpu.memory_space<vmem>>, vector<1x1x32xf32>
    %483 = vector.shape_cast %482 : vector<1x1x32xf32> to vector<1x32xf32>
    %c1_175 = arith.constant 1 : index
    %c7_176 = arith.constant 7 : index
    %c0_177 = arith.constant 0 : index
    %484 = vector.load %arg7[%c1_175, %c7_176, %c0_177] : memref<2x8x96xf32, #tpu.memory_space<vmem>>, vector<1x1x32xf32>
    %485 = vector.shape_cast %484 : vector<1x1x32xf32> to vector<1x32xf32>
    %cst_178 = arith.constant dense<0.000000e+00> : vector<16xf32>
    %486 = vector.multi_reduction <add>, %481, %cst_178 [1] : vector<16x32xf32> to vector<16xf32>
    %487 = vector.shape_cast %486 : vector<16xf32> to vector<16x1xf32>
    %cst_179 = arith.constant 3.200000e+01 : f32
    %488 = vector.broadcast %cst_179 : f32 to vector<16x1xf32>
    %489 = arith.divf %487, %488 : vector<16x1xf32>
    %490 = vector.broadcast %489 : vector<16x1xf32> to vector<16x32xf32>
    %491 = arith.subf %481, %490 : vector<16x32xf32>
    %492 = arith.mulf %491, %491 : vector<16x32xf32>
    %cst_180 = arith.constant dense<0.000000e+00> : vector<16xf32>
    %493 = vector.multi_reduction <add>, %492, %cst_180 [1] : vector<16x32xf32> to vector<16xf32>
    %494 = vector.shape_cast %493 : vector<16xf32> to vector<16x1xf32>
    %cst_181 = arith.constant 3.200000e+01 : f32
    %495 = vector.broadcast %cst_181 : f32 to vector<16x1xf32>
    %496 = arith.divf %494, %495 : vector<16x1xf32>
    %cst_182 = arith.constant 9.99999996E-13 : f32
    %497 = vector.broadcast %cst_182 : f32 to vector<16x1xf32>
    %498 = arith.addf %496, %497 : vector<16x1xf32>
    %499 = math.rsqrt %498 : vector<16x1xf32>
    %500 = vector.broadcast %499 : vector<16x1xf32> to vector<16x32xf32>
    %501 = arith.mulf %491, %500 : vector<16x32xf32>
    %502 = vector.broadcast %483 : vector<1x32xf32> to vector<16x32xf32>
    %503 = arith.mulf %501, %502 : vector<16x32xf32>
    %504 = vector.broadcast %485 : vector<1x32xf32> to vector<16x32xf32>
    %505 = arith.addf %503, %504 : vector<16x32xf32>
    %506 = tpu.iota {dimensions = array<i32: 1>} : vector<8x16xi32>
    %507 = tpu.iota {dimensions = array<i32: 0>} : vector<8x16xi32>
    %c8_i32 = arith.constant 8 : i32
    %508 = vector.broadcast %c8_i32 : i32 to vector<8x16xi32>
    %509 = arith.muli %507, %508 : vector<8x16xi32>
    %510 = arith.cmpi eq, %506, %509 : vector<8x16xi32>
    %cst_183 = arith.constant 1.000000e+00 : f32
    %cst_184 = arith.constant 0.000000e+00 : f32
    %511 = vector.broadcast %cst_183 : f32 to vector<8x16xf32>
    %512 = vector.broadcast %cst_184 : f32 to vector<8x16xf32>
    %513 = arith.select %510, %511, %512 : vector<8x16xi1>, vector<8x16xf32>
    %cst_185 = arith.constant dense<0.000000e+00> : vector<8x32xf32>
    %514 = tpu.matmul %513, %505, %cst_185 {dimension_numbers = #tpu.dot_dimension_numbers<[1], [0], [0], [1], [0, 0, 1, 1], [], []>} : vector<8x16xf32>, vector<16x32xf32>, vector<8x32xf32> -> vector<8x32xf32>
    %c0_186 = arith.constant 0 : index
    %c0_187 = arith.constant 0 : index
    %515 = vector.load %arg8[%c0_186, %c0_187] : memref<32x32xf32, #tpu.memory_space<vmem>>, vector<32x32xf32>
    %cst_188 = arith.constant dense<0.000000e+00> : vector<8x32xf32>
    %516 = tpu.matmul %514, %515, %cst_188 {dimension_numbers = #tpu.dot_dimension_numbers<[1], [0], [0], [1], [0, 0, 1, 1], [], []>} : vector<8x32xf32>, vector<32x32xf32>, vector<8x32xf32> -> vector<8x32xf32>
    %c2_189 = arith.constant 2 : index
    %c0_190 = arith.constant 0 : index
    %517 = vector.load %arg10[%c2_189, %c0_190] : memref<4x128xf32, #tpu.memory_space<vmem>>, vector<1x32xf32>
    %518 = vector.broadcast %517 : vector<1x32xf32> to vector<8x32xf32>
    %519 = arith.addf %516, %518 : vector<8x32xf32>
    %520 = math.tanh %519 : vector<8x32xf32>
    %c0_191 = arith.constant 0 : index
    %c0_192 = arith.constant 0 : index
    %521 = vector.load %arg9[%c0_191, %c0_192] : memref<32x128xf32, #tpu.memory_space<vmem>>, vector<32x128xf32>
    %cst_193 = arith.constant dense<0.000000e+00> : vector<8x128xf32>
    %522 = tpu.matmul %520, %521, %cst_193 {dimension_numbers = #tpu.dot_dimension_numbers<[1], [0], [0], [1], [0, 0, 1, 1], [], []>} : vector<8x32xf32>, vector<32x128xf32>, vector<8x128xf32> -> vector<8x128xf32>
    %c3_194 = arith.constant 3 : index
    %c0_195 = arith.constant 0 : index
    %523 = vector.load %arg10[%c3_194, %c0_195] : memref<4x128xf32, #tpu.memory_space<vmem>>, vector<1x128xf32>
    %524 = vector.broadcast %523 : vector<1x128xf32> to vector<8x128xf32>
    %525 = arith.addf %522, %524 : vector<8x128xf32>
    %c0_196 = arith.constant 0 : index
    %c0_197 = arith.constant 0 : index
    %526 = vector.load %arg11[%c0_196, %c0_197] : memref<8x128xf32, #tpu.memory_space<vmem>>, vector<8x128xf32>
    tpu.vector_store %arg11[%c0_196, %c0_197], %525 {strides = array<i32>} : memref<8x128xf32, #tpu.memory_space<vmem>>, vector<8x128xf32>,
    return
  }
}

</mosaic_0001>

<llo_original>
// kernel: transformer_place_model_forward.1
$region0: #{transformer_place_model_forward.1}
  #allocation0 [shape = 'u32[]', space=smem, size = 0x4, offset = 0x4, fixed_abs, tag = 'smem constant byte address 0x4 - core index']
  #allocation1 [shape = 'u32[144,128]{1,0:T(1,128)}', space=vmem, size = 0x12000, scoped, tag = 'internal scratch']
  %s0 = inlined_call_operand.vmem [shape: s32[16,1], index: 0, kind: input, shape index: {}]
  %s1 = inlined_call_operand.vmem [shape: s32[2,8], index: 1, kind: input, shape index: {}]
  %s2 = inlined_call_operand.vmem [shape: f32[96,32], index: 2, kind: input, shape index: {}]
  %s3 = inlined_call_operand.vmem [shape: f32[2,32,96], index: 3, kind: input, shape index: {}]
  %s4 = inlined_call_operand.vmem [shape: f32[2,32,32], index: 4, kind: input, shape index: {}]
  %s5 = inlined_call_operand.vmem [shape: f32[2,32,64], index: 5, kind: input, shape index: {}]
  %s6 = inlined_call_operand.vmem [shape: f32[2,64,32], index: 6, kind: input, shape index: {}]
  %s7 = inlined_call_operand.vmem [shape: f32[2,8,96], index: 7, kind: input, shape index: {}]
  %s8 = inlined_call_operand.vmem [shape: f32[32,32], index: 8, kind: input, shape index: {}]
  %s9 = inlined_call_operand.vmem [shape: f32[32,128], index: 9, kind: input, shape index: {}]
  %s10 = inlined_call_operand.vmem [shape: f32[4,128], index: 10, kind: input, shape index: {}]
  %s11 = inlined_call_operand.vmem [shape: f32[8,128], index: 11, kind: output, shape index: {}]
  %s12 = sld [smem:[#allocation0]]
  $region54: #{transformer_place_model_forward.1} parent=0
    _
  %s14 = ssub.s32 1, %s12
  %s15 = scalar_select 0, %s14, %s12
  // Predicated region
  $region2: #{transformer_place_model_forward.1} parent=0 // pred_check
    _
  $region3: #{transformer_place_model_forward.1} parent=0 // pred_check_branch
    %17 = sbr.rel (0) target = $region5
  $region4: #{transformer_place_model_forward.1} parent=0 // pred_region
    _
  $region5: #{transformer_place_model_forward.1} parent=0 // pred_fallthru
    _
  // Predicated region
  $region6: #{transformer_place_model_forward.1} parent=0 // pred_check
    _
  $region7: #{transformer_place_model_forward.1} parent=0 // pred_check_branch
    %19 = sbr.rel (0) target = $region9
  $region8: #{transformer_place_model_forward.1} parent=0 // pred_region
    _
  $region9: #{transformer_place_model_forward.1} parent=0 // pred_fallthru
    _
  // Predicated region
  $region10: #{transformer_place_model_forward.1} parent=0 // pred_check
    _
  $region11: #{transformer_place_model_forward.1} parent=0 // pred_check_branch
    %21 = sbr.rel (0) target = $region13
  $region12: #{transformer_place_model_forward.1} parent=0 // pred_region
    _
  $region13: #{transformer_place_model_forward.1} parent=0 // pred_fallthru
    _
  // Predicated region
  $region14: #{transformer_place_model_forward.1} parent=0 // pred_check
    _
  $region15: #{transformer_place_model_forward.1} parent=0 // pred_check_branch
    %23 = sbr.rel (0) target = $region17
  $region16: #{transformer_place_model_forward.1} parent=0 // pred_region
    _
  $region17: #{transformer_place_model_forward.1} parent=0 // pred_fallthru
    _
  // Predicated region
  $region18: #{transformer_place_model_forward.1} parent=0 // pred_check
    _
  $region19: #{transformer_place_model_forward.1} parent=0 // pred_check_branch
    %25 = sbr.rel (0) target = $region21
  $region20: #{transformer_place_model_forward.1} parent=0 // pred_region
    _
  $region21: #{transformer_place_model_forward.1} parent=0 // pred_fallthru
    _
  // Predicated region
  $region22: #{transformer_place_model_forward.1} parent=0 // pred_check
    _
  $region23: #{transformer_place_model_forward.1} parent=0 // pred_check_branch
    %27 = sbr.rel (0) target = $region25
  $region24: #{transformer_place_model_forward.1} parent=0 // pred_region
    _
  $region25: #{transformer_place_model_forward.1} parent=0 // pred_fallthru
    _
  // Predicated region
  $region26: #{transformer_place_model_forward.1} parent=0 // pred_check
    _
  $region27: #{transformer_place_model_forward.1} parent=0 // pred_check_branch
    %29 = sbr.rel (0) target = $region29
  $region28: #{transformer_place_model_forward.1} parent=0 // pred_region
    _
  $region29: #{transformer_place_model_forward.1} parent=0 // pred_fallthru
    _
  // Predicated region
  $region30: #{transformer_place_model_forward.1} parent=0 // pred_check
    _
  $region31: #{transformer_place_model_forward.1} parent=0 // pred_check_branch
    %31 = sbr.rel (0) target = $region33
  $region32: #{transformer_place_model_forward.1} parent=0 // pred_region
    _
  $region33: #{transformer_place_model_forward.1} parent=0 // pred_fallthru
    _
  // Predicated region
  $region34: #{transformer_place_model_forward.1} parent=0 // pred_check
    _
  $region35: #{transformer_place_model_forward.1} parent=0 // pred_check_branch
    %33 = sbr.rel (0) target = $region37
  $region36: #{transformer_place_model_forward.1} parent=0 // pred_region
    _
  $region37: #{transformer_place_model_forward.1} parent=0 // pred_fallthru
    _
  // Predicated region
  $region38: #{transformer_place_model_forward.1} parent=0 // pred_check
    _
  $region39: #{transformer_place_model_forward.1} parent=0 // pred_check_branch
    %35 = sbr.rel (0) target = $region41
  $region40: #{transformer_place_model_forward.1} parent=0 // pred_region
    _
  $region41: #{transformer_place_model_forward.1} parent=0 // pred_fallthru
    _
  // Predicated region
  $region42: #{transformer_place_model_forward.1} parent=0 // pred_check
    _
  $region43: #{transformer_place_model_forward.1} parent=0 // pred_check_branch
    %37 = sbr.rel (0) target = $region45
  $region44: #{transformer_place_model_forward.1} parent=0 // pred_region
    _
  $region45: #{transformer_place_model_forward.1} parent=0 // pred_fallthru
    _
  %v38 = vld [vmem:[%s0] sm:$0xff]
  %v39 = vld [vmem:[%s0 + $0x8] sm:$0xff]
  %v40 = vlaneseq
  %v41 = vand.u32 %v40, 127
  %v42 = vlaneseq
  %v43 = vshrl.u32 %v42, 7
  %v44 = vadd.s32 %v43, 8
  %v45 = vand.u32 %v43, 7
  %v46 = vand.u32 %v44, 7
  %47 = vset.pattern.permute.xlu0 0
  %48 = vperm.xlu0 %47, %v38
  %v49 = vpop.permute.xlu0 %48
  %50 = vset.pattern.permute.xlu0 0
  %51 = vperm.xlu0 %50, %v39
  %v52 = vpop.permute.xlu0 %51
  %vm53 = vcmp.eq.s32.totalorder %v41, %v49
  %vm54 = vcmp.eq.s32.totalorder %v41, %v52
  %v55 = vadd.s32 %v45, 64
  %v56 = vadd.s32 %v46, 64
  %vm57 = vcmp.eq.s32.totalorder %v41, %v55
  %vm58 = vcmp.eq.s32.totalorder %v41, %v56
  %vm59 = vmor %vm53, %vm57
  %vm60 = vmor %vm54, %vm58
  %v61 = vsel %vm59, 1.0, 0.0
  %v62 = vsel %vm60, 1.0, 0.0
  %v63 = vld [vmem:[%s2] sm:$0xff]
  %v64 = vld [vmem:[%s2 + $0x8] sm:$0xff]
  %v65 = vld [vmem:[%s2 + $0x10] sm:$0xff]
  %v66 = vld [vmem:[%s2 + $0x18] sm:$0xff]
  %v67 = vld [vmem:[%s2 + $0x20] sm:$0xff]
  %v68 = vld [vmem:[%s2 + $0x28] sm:$0xff]
  %v69 = vld [vmem:[%s2 + $0x30] sm:$0xff]
  %v70 = vld [vmem:[%s2 + $0x38] sm:$0xff]
  %v71 = vld [vmem:[%s2 + $0x40] sm:$0xff]
  %v72 = vld [vmem:[%s2 + $0x48] sm:$0xff]
  %v73 = vld [vmem:[%s2 + $0x50] sm:$0xff]
  %v74 = vld [vmem:[%s2 + $0x58] sm:$0xff]
  %vm75 = vcmask 785408
  %v77 = vsel %vm75, %v61, 0
  %v80 = vsel %vm75, %v62, 0
  %82 = vmatprep.subr.mxu0 0.0
  %83 = vmatpush1.msra.mxu0 0.0
  %84 = vmatprep.subr.mxu0 0.0
  %85 = vmatpush1.msra.mxu0 0.0
  %86 = vmatprep.subr.mxu0 0.0
  %87 = vmatpush1.msra.mxu0 0.0
  %88 = vmatprep.subr.mxu0 0.0
  %89 = vmatpush1.msra.mxu0 0.0
  %90 = vmatprep.subr.mxu0 0.0
  %91 = vmatpush1.msra.mxu0 %v74
  %92 = vmatprep.subr.mxu0 0.0
  %93 = vmatpush1.msra.mxu0 %v73
  %94 = vmatprep.subr.mxu0 0.0
  %95 = vmatpush1.msra.mxu0 %v72
  %96 = vmatprep.subr.mxu0 0.0
  %97 = vmatpush1.msra.mxu0 %v71
  %98 = vmatprep.subr.mxu0 0.0
  %99 = vmatpush1.msra.mxu0 %v70
  %100 = vmatprep.subr.mxu0 0.0
  %101 = vmatpush1.msra.mxu0 %v69
  %102 = vmatprep.subr.mxu0 0.0
  %103 = vmatpush1.msra.mxu0 %v68
  %104 = vmatprep.subr.mxu0 0.0
  %105 = vmatpush1.msra.mxu0 %v67
  %106 = vmatprep.subr.mxu0 0.0
  %107 = vmatpush1.msra.mxu0 %v66
  %108 = vmatprep.subr.mxu0 0.0
  %109 = vmatpush1.msra.mxu0 %v65
  %110 = vmatprep.subr.mxu0 0.0
  %111 = vmatpush1.msra.mxu0 %v64
  %112 = vmatprep.subr.mxu0 0.0
  %113 = vmatpush1.msra.mxu0 %v63
  %114 = vmatprep.subr.mxu0 0.0
  %115 = vmatpush2.msra.mxu0 0.0
  %116 = vmatprep.subr.mxu0 0.0
  %117 = vmatpush2.msra.mxu0 0.0
  %118 = vmatprep.subr.mxu0 0.0
  %119 = vmatpush2.msra.mxu0 0.0
  %120 = vmatprep.subr.mxu0 0.0
  %121 = vmatpush2.msra.mxu0 0.0
  %122 = vmatprep.subr.mxu0 0.0
  %123 = vmatpush2.msra.mxu0 0.0
  %124 = vmatprep.subr.mxu0 0.0
  %125 = vmatpush2.msra.mxu0 0.0
  %126 = vmatprep.subr.mxu0 0.0
  %127 = vmatpush2.msra.mxu0 0.0
  %128 = vmatprep.subr.mxu0 0.0
  %129 = vmatpush2.msra.mxu0 0.0
  %130 = vmatprep.subr.mxu0 0.0
  %131 = vmatpush2.msra.mxu0 0.0
  %132 = vmatprep.subr.mxu0 0.0
  %133 = vmatpush2.msra.mxu0 0.0
  %134 = vmatprep.subr.mxu0 0.0
  %135 = vmatpush2.msra.mxu0 0.0
  %136 = vmatprep.subr.mxu0 0.0
  %137 = vmatpush2.msra.mxu0 0.0
  %138 = vmatprep.subr.mxu0 0.0
  %139 = vmatpush2.msra.mxu0 0.0
  %140 = vmatprep.subr.mxu0 0.0
  %141 = vmatpush2.msra.mxu0 0.0
  %142 = vmatprep.subr.mxu0 0.0
  %143 = vmatpush2.msra.mxu0 0.0
  %144 = vmatprep.subr.mxu0 0.0
  %145 = vmatpush2.msra.mxu0 0.0
  %146 = vmatprep.mubr.f32.mxu0 0.0
  %147 = vmatmul.mubr.f32.gmra.mxu0 %v77
  %v148 = vpop.f32.mrf.mxu0
  %v149 = vadd.f32 0.0, %v148
  %v150 = vpop.f32.mrf.mxu0
  %151 = vmatprep.mubr.f32.mxu0 0.0
  %152 = vmatmul.mubr.f32.gmra.mxu0 %v80
  %v153 = vpop.f32.mrf.mxu0
  %v154 = vadd.f32 0.0, %v153
  %v155 = vpop.f32.mrf.mxu0
  %156 = vdwg.mxu0
  %v157 = vld [vmem:[%s10] sm:$0x1]
  %v158 = vld [vmem:[%s10 + $0x1] sm:$0x1]
  %vm159 = vcmask 261120
  %v160 = vsel %vm159, %v149, 0.0
  %161 = vadd.xlane.f32.xlu0 %v160
  %v162 = vpop.xlane.xlu0 %161
  %v163 = vsel %vm159, %v154, 0.0
  %164 = vadd.xlane.f32.xlu0 %v163
  %v165 = vpop.xlane.xlu0 %164
  %v166 = vrcp.pop 32.0
  %v167 = vmul.f32 %v162, %v166
  %v168 = vmul.f32 %v165, %v166
  %v169 = vsub.f32 %v149, %v167
  %v170 = vsub.f32 %v154, %v168
  %v171 = vmul.f32 %v169, %v169
  %v172 = vmul.f32 %v170, %v170
  %v173 = vsel %vm159, %v171, 0.0
  %174 = vadd.xlane.f32.xlu0 %v173
  %v175 = vpop.xlane.xlu0 %174
  %v176 = vsel %vm159, %v172, 0.0
  %177 = vadd.xlane.f32.xlu0 %v176
  %v178 = vpop.xlane.xlu0 %177
  %v179 = vmul.f32 %v175, %v166
  %v180 = vmul.f32 %v178, %v166
  %v181 = vadd.f32 %v179, 1e-12
  %v182 = vadd.f32 %v180, 1e-12
  %v183 = vrsqrt.pop %v181
  %v184 = vrsqrt.pop %v182
  %v185 = vmul.f32 %v169, %v183
  %v186 = vmul.f32 %v170, %v184
  %v187 = vlaneseq
  %v188 = vshrl.u32 %v187, 7
  %v189 = vsub.s32 0, %v188
  %v190 = vrot.slane %v157, %v189
  %v191 = vmul.f32 %v185, %v190
  %v192 = vmul.f32 %v186, %v190
  %v193 = vlaneseq
  %v194 = vshrl.u32 %v193, 7
  %v195 = vsub.s32 0, %v194
  %v196 = vrot.slane %v158, %v195
  %v197 = vadd.f32 %v191, %v196
  %v198 = vadd.f32 %v192, %v196
  %v199 = vld [vmem:[%s1] sm:$0x3]
  %v200 = vcvt.s32.f32 %v199
  %v201 = vsub.f32 1.0, %v200
  %v202 = vmul.f32 %v201, -10000.0
  %v203 = vlaneseq
  %v204 = vshrl.u32 %v203, 7
  %v205 = vsub.s32 0, %v204
  %v206 = vrot.slane %v202, %v205
  %v207 = vlaneseq
  %v208 = vshrl.u32 %v207, 7
  %v209 = vsub.s32 1, %v208
  %v210 = vrot.slane %v202, %v209
  %v211 = vld [vmem:[%s3] sm:$0xff]
  %v212 = vld [vmem:[%s3 + $0x8] sm:$0xff]
  %v213 = vld [vmem:[%s3 + $0x10] sm:$0xff]
  %v214 = vld [vmem:[%s3 + $0x18] sm:$0xff]
  %v215 = vld [vmem:[%s7] sm:$0x1]
  %v216 = vlaneseq
  %v217 = vshrl.u32 %v216, 7
  %v218 = vsub.s32 0, %v217
  %v219 = vrot.slane %v215, %v218
  %v221 = vsel %vm159, %v197, 0
  %v224 = vsel %vm159, %v198, 0
  %226 = vmatprep.subr.mxu0 0.0
  %227 = vmatpush1.msra.mxu0 0.0
  %228 = vmatprep.subr.mxu0 0.0
  %229 = vmatpush1.msra.mxu0 0.0
  %230 = vmatprep.subr.mxu0 0.0
  %231 = vmatpush1.msra.mxu0 0.0
  %232 = vmatprep.subr.mxu0 0.0
  %233 = vmatpush1.msra.mxu0 0.0
  %234 = vmatprep.subr.mxu0 0.0
  %235 = vmatpush1.msra.mxu0 0.0
  %236 = vmatprep.subr.mxu0 0.0
  %237 = vmatpush1.msra.mxu0 0.0
  %238 = vmatprep.subr.mxu0 0.0
  %239 = vmatpush1.msra.mxu0 0.0
  %240 = vmatprep.subr.mxu0 0.0
  %241 = vmatpush1.msra.mxu0 0.0
  %242 = vmatprep.subr.mxu0 0.0
  %243 = vmatpush1.msra.mxu0 0.0
  %244 = vmatprep.subr.mxu0 0.0
  %245 = vmatpush1.msra.mxu0 0.0
  %246 = vmatprep.subr.mxu0 0.0
  %247 = vmatpush1.msra.mxu0 0.0
  %248 = vmatprep.subr.mxu0 0.0
  %249 = vmatpush1.msra.mxu0 0.0
  %250 = vmatprep.subr.mxu0 0.0
  %251 = vmatpush1.msra.mxu0 %v214
  %252 = vmatprep.subr.mxu0 0.0
  %253 = vmatpush1.msra.mxu0 %v213
  %254 = vmatprep.subr.mxu0 0.0
  %255 = vmatpush1.msra.mxu0 %v212
  %256 = vmatprep.subr.mxu0 0.0
  %257 = vmatpush1.msra.mxu0 %v211
  %258 = vmatprep.subr.mxu0 0.0
  %259 = vmatpush2.msra.mxu0 0.0
  %260 = vmatprep.subr.mxu0 0.0
  %261 = vmatpush2.msra.mxu0 0.0
  %262 = vmatprep.subr.mxu0 0.0
  %263 = vmatpush2.msra.mxu0 0.0
  %264 = vmatprep.subr.mxu0 0.0
  %265 = vmatpush2.msra.mxu0 0.0
  %266 = vmatprep.subr.mxu0 0.0
  %267 = vmatpush2.msra.mxu0 0.0
  %268 = vmatprep.subr.mxu0 0.0
  %269 = vmatpush2.msra.mxu0 0.0
  %270 = vmatprep.subr.mxu0 0.0
  %271 = vmatpush2.msra.mxu0 0.0
  %272 = vmatprep.subr.mxu0 0.0
  %273 = vmatpush2.msra.mxu0 0.0
  %274 = vmatprep.subr.mxu0 0.0
  %275 = vmatpush2.msra.mxu0 0.0
  %276 = vmatprep.subr.mxu0 0.0
  %277 = vmatpush2.msra.mxu0 0.0
  %278 = vmatprep.subr.mxu0 0.0
  %279 = vmatpush2.msra.mxu0 0.0
  %280 = vmatprep.subr.mxu0 0.0
  %281 = vmatpush2.msra.mxu0 0.0
  %282 = vmatprep.subr.mxu0 0.0
  %283 = vmatpush2.msra.mxu0 0.0
  %284 = vmatprep.subr.mxu0 0.0
  %285 = vmatpush2.msra.mxu0 0.0
  %286 = vmatprep.subr.mxu0 0.0
  %287 = vmatpush2.msra.mxu0 0.0
  %288 = vmatprep.subr.mxu0 0.0
  %289 = vmatpush2.msra.mxu0 0.0
  %290 = vmatprep.mubr.f32.mxu0 0.0
  %291 = vmatmul.mubr.f32.gmra.mxu0 %v221
  %v292 = vpop.f32.mrf.mxu0
  %v293 = vadd.f32 %v219, %v292
  %v294 = vpop.f32.mrf.mxu0
  %295 = vmatprep.mubr.f32.mxu0 0.0
  %296 = vmatmul.mubr.f32.gmra.mxu0 %v224
  %v297 = vpop.f32.mrf.mxu0
  %v298 = vadd.f32 %v219, %v297
  %v299 = vpop.f32.mrf.mxu0
  %300 = vdwg.mxu0
  %302 = vrot.lane.b32.xlu0 %v293, 96
  %v303 = vpop.permute.xlu0 %302
  %vm304 = vcmask 64512
  %v305 = vsel %vm304, %v293, 0
  %v307 = vsel %vm304, %v303, 0
  %309 = vmatprep.subr.mxu0 0.0
  %310 = vmatpush1.xpose.msra.mxu0 0.0
  %311 = vmatprep.subr.mxu0 0.0
  %312 = vmatpush1.xpose.msra.mxu0 0.0
  %313 = vmatprep.subr.mxu0 0.0
  %314 = vmatpush1.xpose.msra.mxu0 0.0
  %315 = vmatprep.subr.mxu0 0.0
  %316 = vmatpush1.xpose.msra.mxu0 0.0
  %317 = vmatprep.subr.mxu0 0.0
  %318 = vmatpush1.xpose.msra.mxu0 0.0
  %319 = vmatprep.subr.mxu0 0.0
  %320 = vmatpush1.xpose.msra.mxu0 0.0
  %321 = vmatprep.subr.mxu0 0.0
  %322 = vmatpush1.xpose.msra.mxu0 0.0
  %323 = vmatprep.subr.mxu0 0.0
  %324 = vmatpush1.xpose.msra.mxu0 0.0
  %325 = vmatprep.subr.mxu0 0.0
  %326 = vmatpush1.xpose.msra.mxu0 0.0
  %327 = vmatprep.subr.mxu0 0.0
  %328 = vmatpush1.xpose.msra.mxu0 0.0
  %329 = vmatprep.subr.mxu0 0.0
  %330 = vmatpush1.xpose.msra.mxu0 0.0
  %331 = vmatprep.subr.mxu0 0.0
  %332 = vmatpush1.xpose.msra.mxu0 0.0
  %333 = vmatprep.subr.mxu0 0.0
  %334 = vmatpush1.xpose.msra.mxu0 0.0
  %335 = vmatprep.subr.mxu0 0.0
  %336 = vmatpush1.xpose.msra.mxu0 0.0
  %337 = vmatprep.subr.mxu0 0.0
  %338 = vmatpush1.xpose.msra.mxu0 0.0
  %339 = vmatprep.subr.mxu0 0.0
  %340 = vmatpush1.xpose.msra.mxu0 %v307
  %341 = vmatprep.subr.mxu0 0.0
  %342 = vmatpush2.xpose.msra.mxu0 0.0
  %343 = vmatprep.subr.mxu0 0.0
  %344 = vmatpush2.xpose.msra.mxu0 0.0
  %345 = vmatprep.subr.mxu0 0.0
  %346 = vmatpush2.xpose.msra.mxu0 0.0
  %347 = vmatprep.subr.mxu0 0.0
  %348 = vmatpush2.xpose.msra.mxu0 0.0
  %349 = vmatprep.subr.mxu0 0.0
  %350 = vmatpush2.xpose.msra.mxu0 0.0
  %351 = vmatprep.subr.mxu0 0.0
  %352 = vmatpush2.xpose.msra.mxu0 0.0
  %353 = vmatprep.subr.mxu0 0.0
  %354 = vmatpush2.xpose.msra.mxu0 0.0
  %355 = vmatprep.subr.mxu0 0.0
  %356 = vmatpush2.xpose.msra.mxu0 0.0
  %357 = vmatprep.subr.mxu0 0.0
  %358 = vmatpush2.xpose.msra.mxu0 0.0
  %359 = vmatprep.subr.mxu0 0.0
  %360 = vmatpush2.xpose.msra.mxu0 0.0
  %361 = vmatprep.subr.mxu0 0.0
  %362 = vmatpush2.xpose.msra.mxu0 0.0
  %363 = vmatprep.subr.mxu0 0.0
  %364 = vmatpush2.xpose.msra.mxu0 0.0
  %365 = vmatprep.subr.mxu0 0.0
  %366 = vmatpush2.xpose.msra.mxu0 0.0
  %367 = vmatprep.subr.mxu0 0.0
  %368 = vmatpush2.xpose.msra.mxu0 0.0
  %369 = vmatprep.subr.mxu0 0.0
  %370 = vmatpush2.xpose.msra.mxu0 0.0
  %371 = vmatprep.subr.mxu0 0.0
  %372 = vmatpush2.xpose.msra.mxu0 0.0
  %373 = vmatprep.mubr.f32.mxu0 0.0
  %374 = vmatmul.mubr.f32.gmra.mxu0 %v305
  %v375 = vpop.f32.mrf.mxu0
  %v376 = vadd.f32 %v206, %v375
  %v377 = vpop.f32.mrf.mxu0
  %378 = vdwg.mxu0
  %v379 = vsel %vm304, %v376, -inf
  %380 = vmax.xlane.f32.xlu0 %v379
  %v381 = vpop.xlane.xlu0 %380
  %v382 = vsub.f32 %v376, %v381
  %v383 = vmul.f32 %v382, 1.442695
  %v384 = vpow.pop %v383
  %v385 = vsel %vm304, %v384, 0.0
  %386 = vadd.xlane.f32.xlu0 %v385
  %v387 = vpop.xlane.xlu0 %386
  %v388 = vrcp.pop %v387
  %v389 = vmul.f32 %v384, %v388
  %390 = vrot.lane.b32.xlu0 %v293, 64
  %v391 = vpop.permute.xlu0 %390
  %v394 = vsel %vm304, %v389, 0
  %396 = vmatprep.subr.mxu0 0.0
  %397 = vmatpush1.msra.mxu0 0.0
  %398 = vmatprep.subr.mxu0 0.0
  %399 = vmatpush1.msra.mxu0 0.0
  %400 = vmatprep.subr.mxu0 0.0
  %401 = vmatpush1.msra.mxu0 0.0
  %402 = vmatprep.subr.mxu0 0.0
  %403 = vmatpush1.msra.mxu0 0.0
  %404 = vmatprep.subr.mxu0 0.0
  %405 = vmatpush1.msra.mxu0 0.0
  %406 = vmatprep.subr.mxu0 0.0
  %407 = vmatpush1.msra.mxu0 0.0
  %408 = vmatprep.subr.mxu0 0.0
  %409 = vmatpush1.msra.mxu0 0.0
  %410 = vmatprep.subr.mxu0 0.0
  %411 = vmatpush1.msra.mxu0 0.0
  %412 = vmatprep.subr.mxu0 0.0
  %413 = vmatpush1.msra.mxu0 0.0
  %414 = vmatprep.subr.mxu0 0.0
  %415 = vmatpush1.msra.mxu0 0.0
  %416 = vmatprep.subr.mxu0 0.0
  %417 = vmatpush1.msra.mxu0 0.0
  %418 = vmatprep.subr.mxu0 0.0
  %419 = vmatpush1.msra.mxu0 0.0
  %420 = vmatprep.subr.mxu0 0.0
  %421 = vmatpush1.msra.mxu0 0.0
  %422 = vmatprep.subr.mxu0 0.0
  %423 = vmatpush1.msra.mxu0 0.0
  %424 = vmatprep.subr.mxu0 0.0
  %425 = vmatpush1.msra.mxu0 0.0
  %426 = vmatprep.subr.mxu0 0.0
  %427 = vmatpush1.msra.mxu0 %v391
  %428 = vmatprep.subr.mxu0 0.0
  %429 = vmatpush2.msra.mxu0 0.0
  %430 = vmatprep.subr.mxu0 0.0
  %431 = vmatpush2.msra.mxu0 0.0
  %432 = vmatprep.subr.mxu0 0.0
  %433 = vmatpush2.msra.mxu0 0.0
  %434 = vmatprep.subr.mxu0 0.0
  %435 = vmatpush2.msra.mxu0 0.0
  %436 = vmatprep.subr.mxu0 0.0
  %437 = vmatpush2.msra.mxu0 0.0
  %438 = vmatprep.subr.mxu0 0.0
  %439 = vmatpush2.msra.mxu0 0.0
  %440 = vmatprep.subr.mxu0 0.0
  %441 = vmatpush2.msra.mxu0 0.0
  %442 = vmatprep.subr.mxu0 0.0
  %443 = vmatpush2.msra.mxu0 0.0
  %444 = vmatprep.subr.mxu0 0.0
  %445 = vmatpush2.msra.mxu0 0.0
  %446 = vmatprep.subr.mxu0 0.0
  %447 = vmatpush2.msra.mxu0 0.0
  %448 = vmatprep.subr.mxu0 0.0
  %449 = vmatpush2.msra.mxu0 0.0
  %450 = vmatprep.subr.mxu0 0.0
  %451 = vmatpush2.msra.mxu0 0.0
  %452 = vmatprep.subr.mxu0 0.0
  %453 = vmatpush2.msra.mxu0 0.0
  %454 = vmatprep.subr.mxu0 0.0
  %455 = vmatpush2.msra.mxu0 0.0
  %456 = vmatprep.subr.mxu0 0.0
  %457 = vmatpush2.msra.mxu0 0.0
  %458 = vmatprep.subr.mxu0 0.0
  %459 = vmatpush2.msra.mxu0 0.0
  %460 = vmatprep.mubr.f32.mxu0 0.0
  %461 = vmatmul.mubr.f32.gmra.mxu0 %v394
  %v462 = vpop.f32.mrf.mxu0
  %v463 = vadd.f32 0.0, %v462
  %v464 = vpop.f32.mrf.mxu0
  %465 = vdwg.mxu0
  %467 = vrot.lane.b32.xlu0 %v298, 96
  %v468 = vpop.permute.xlu0 %467
  %v469 = vsel %vm304, %v298, 0
  %v471 = vsel %vm304, %v468, 0
  %473 = vmatprep.subr.mxu0 0.0
  %474 = vmatpush1.xpose.msra.mxu0 0.0
  %475 = vmatprep.subr.mxu0 0.0
  %476 = vmatpush1.xpose.msra.mxu0 0.0
  %477 = vmatprep.subr.mxu0 0.0
  %478 = vmatpush1.xpose.msra.mxu0 0.0
  %479 = vmatprep.subr.mxu0 0.0
  %480 = vmatpush1.xpose.msra.mxu0 0.0
  %481 = vmatprep.subr.mxu0 0.0
  %482 = vmatpush1.xpose.msra.mxu0 0.0
  %483 = vmatprep.subr.mxu0 0.0
  %484 = vmatpush1.xpose.msra.mxu0 0.0
  %485 = vmatprep.subr.mxu0 0.0
  %486 = vmatpush1.xpose.msra.mxu0 0.0
  %487 = vmatprep.subr.mxu0 0.0
  %488 = vmatpush1.xpose.msra.mxu0 0.0
  %489 = vmatprep.subr.mxu0 0.0
  %490 = vmatpush1.xpose.msra.mxu0 0.0
  %491 = vmatprep.subr.mxu0 0.0
  %492 = vmatpush1.xpose.msra.mxu0 0.0
  %493 = vmatprep.subr.mxu0 0.0
  %494 = vmatpush1.xpose.msra.mxu0 0.0
  %495 = vmatprep.subr.mxu0 0.0
  %496 = vmatpush1.xpose.msra.mxu0 0.0
  %497 = vmatprep.subr.mxu0 0.0
  %498 = vmatpush1.xpose.msra.mxu0 0.0
  %499 = vmatprep.subr.mxu0 0.0
  %500 = vmatpush1.xpose.msra.mxu0 0.0
  %501 = vmatprep.subr.mxu0 0.0
  %502 = vmatpush1.xpose.msra.mxu0 0.0
  %503 = vmatprep.subr.mxu0 0.0
  %504 = vmatpush1.xpose.msra.mxu0 %v471
  %505 = vmatprep.subr.mxu0 0.0
  %506 = vmatpush2.xpose.msra.mxu0 0.0
  %507 = vmatprep.subr.mxu0 0.0
  %508 = vmatpush2.xpose.msra.mxu0 0.0
  %509 = vmatprep.subr.mxu0 0.0
  %510 = vmatpush2.xpose.msra.mxu0 0.0
  %511 = vmatprep.subr.mxu0 0.0
  %512 = vmatpush2.xpose.msra.mxu0 0.0
  %513 = vmatprep.subr.mxu0 0.0
  %514 = vmatpush2.xpose.msra.mxu0 0.0
  %515 = vmatprep.subr.mxu0 0.0
  %516 = vmatpush2.xpose.msra.mxu0 0.0
  %517 = vmatprep.subr.mxu0 0.0
  %518 = vmatpush2.xpose.msra.mxu0 0.0
  %519 = vmatprep.subr.mxu0 0.0
  %520 = vmatpush2.xpose.msra.mxu0 0.0
  %521 = vmatprep.subr.mxu0 0.0
  %522 = vmatpush2.xpose.msra.mxu0 0.0
  %523 = vmatprep.subr.mxu0 0.0
  %524 = vmatpush2.xpose.msra.mxu0 0.0
  %525 = vmatprep.subr.mxu0 0.0
  %526 = vmatpush2.xpose.msra.mxu0 0.0
  %527 = vmatprep.subr.mxu0 0.0
  %528 = vmatpush2.xpose.msra.mxu0 0.0
  %529 = vmatprep.subr.mxu0 0.0
  %530 = vmatpush2.xpose.msra.mxu0 0.0
  %531 = vmatprep.subr.mxu0 0.0
  %532 = vmatpush2.xpose.msra.mxu0 0.0
  %533 = vmatprep.subr.mxu0 0.0
  %534 = vmatpush2.xpose.msra.mxu0 0.0
  %535 = vmatprep.subr.mxu0 0.0
  %536 = vmatpush2.xpose.msra.mxu0 0.0
  %537 = vmatprep.mubr.f32.mxu0 0.0
  %538 = vmatmul.mubr.f32.gmra.mxu0 %v469
  %v539 = vpop.f32.mrf.mxu0
  %v540 = vadd.f32 %v210, %v539
  %v541 = vpop.f32.mrf.mxu0
  %542 = vdwg.mxu0
  %v543 = vsel %vm304, %v540, -inf
  %544 = vmax.xlane.f32.xlu0 %v543
  %v545 = vpop.xlane.xlu0 %544
  %v546 = vsub.f32 %v540, %v545
  %v547 = vmul.f32 %v546, 1.442695
  %v548 = vpow.pop %v547
  %v549 = vsel %vm304, %v548, 0.0
  %550 = vadd.xlane.f32.xlu0 %v549
  %v551 = vpop.xlane.xlu0 %550
  %v552 = vrcp.pop %v551
  %v553 = vmul.f32 %v548, %v552
  %554 = vrot.lane.b32.xlu0 %v298, 64
  %v555 = vpop.permute.xlu0 %554
  %v558 = vsel %vm304, %v553, 0
  %560 = vmatprep.subr.mxu0 0.0
  %561 = vmatpush1.msra.mxu0 0.0
  %562 = vmatprep.subr.mxu0 0.0
  %563 = vmatpush1.msra.mxu0 0.0
  %564 = vmatprep.subr.mxu0 0.0
  %565 = vmatpush1.msra.mxu0 0.0
  %566 = vmatprep.subr.mxu0 0.0
  %567 = vmatpush1.msra.mxu0 0.0
  %568 = vmatprep.subr.mxu0 0.0
  %569 = vmatpush1.msra.mxu0 0.0
  %570 = vmatprep.subr.mxu0 0.0
  %571 = vmatpush1.msra.mxu0 0.0
  %572 = vmatprep.subr.mxu0 0.0
  %573 = vmatpush1.msra.mxu0 0.0
  %574 = vmatprep.subr.mxu0 0.0
  %575 = vmatpush1.msra.mxu0 0.0
  %576 = vmatprep.subr.mxu0 0.0
  %577 = vmatpush1.msra.mxu0 0.0
  %578 = vmatprep.subr.mxu0 0.0
  %579 = vmatpush1.msra.mxu0 0.0
  %580 = vmatprep.subr.mxu0 0.0
  %581 = vmatpush1.msra.mxu0 0.0
  %582 = vmatprep.subr.mxu0 0.0
  %583 = vmatpush1.msra.mxu0 0.0
  %584 = vmatprep.subr.mxu0 0.0
  %585 = vmatpush1.msra.mxu0 0.0
  %586 = vmatprep.subr.mxu0 0.0
  %587 = vmatpush1.msra.mxu0 0.0
  %588 = vmatprep.subr.mxu0 0.0
  %589 = vmatpush1.msra.mxu0 0.0
  %590 = vmatprep.subr.mxu0 0.0
  %591 = vmatpush1.msra.mxu0 %v555
  %592 = vmatprep.subr.mxu0 0.0
  %593 = vmatpush2.msra.mxu0 0.0
  %594 = vmatprep.subr.mxu0 0.0
  %595 = vmatpush2.msra.mxu0 0.0
  %596 = vmatprep.subr.mxu0 0.0
  %597 = vmatpush2.msra.mxu0 0.0
  %598 = vmatprep.subr.mxu0 0.0
  %599 = vmatpush2.msra.mxu0 0.0
  %600 = vmatprep.subr.mxu0 0.0
  %601 = vmatpush2.msra.mxu0 0.0
  %602 = vmatprep.subr.mxu0 0.0
  %603 = vmatpush2.msra.mxu0 0.0
  %604 = vmatprep.subr.mxu0 0.0
  %605 = vmatpush2.msra.mxu0 0.0
  %606 = vmatprep.subr.mxu0 0.0
  %607 = vmatpush2.msra.mxu0 0.0
  %608 = vmatprep.subr.mxu0 0.0
  %609 = vmatpush2.msra.mxu0 0.0
  %610 = vmatprep.subr.mxu0 0.0
  %611 = vmatpush2.msra.mxu0 0.0
  %612 = vmatprep.subr.mxu0 0.0
  %613 = vmatpush2.msra.mxu0 0.0
  %614 = vmatprep.subr.mxu0 0.0
  %615 = vmatpush2.msra.mxu0 0.0
  %616 = vmatprep.subr.mxu0 0.0
  %617 = vmatpush2.msra.mxu0 0.0
  %618 = vmatprep.subr.mxu0 0.0
  %619 = vmatpush2.msra.mxu0 0.0
  %620 = vmatprep.subr.mxu0 0.0
  %621 = vmatpush2.msra.mxu0 0.0
  %622 = vmatprep.subr.mxu0 0.0
  %623 = vmatpush2.msra.mxu0 0.0
  %624 = vmatprep.mubr.f32.mxu0 0.0
  %625 = vmatmul.mubr.f32.gmra.mxu0 %v558
  %v626 = vpop.f32.mrf.mxu0
  %v627 = vadd.f32 0.0, %v626
  %v628 = vpop.f32.mrf.mxu0
  %629 = vdwg.mxu0
  %630 = vrot.lane.b32.xlu0 %v293, 120
  %v631 = vpop.permute.xlu0 %630
  %632 = vrot.lane.b32.xlu0 %v293, 88
  %v633 = vpop.permute.xlu0 %632
  %v634 = vsel %vm304, %v631, 0
  %v636 = vsel %vm304, %v633, 0
  %638 = vmatprep.subr.mxu0 0.0
  %639 = vmatpush1.xpose.msra.mxu0 0.0
  %640 = vmatprep.subr.mxu0 0.0
  %641 = vmatpush1.xpose.msra.mxu0 0.0
  %642 = vmatprep.subr.mxu0 0.0
  %643 = vmatpush1.xpose.msra.mxu0 0.0
  %644 = vmatprep.subr.mxu0 0.0
  %645 = vmatpush1.xpose.msra.mxu0 0.0
  %646 = vmatprep.subr.mxu0 0.0
  %647 = vmatpush1.xpose.msra.mxu0 0.0
  %648 = vmatprep.subr.mxu0 0.0
  %649 = vmatpush1.xpose.msra.mxu0 0.0
  %650 = vmatprep.subr.mxu0 0.0
  %651 = vmatpush1.xpose.msra.mxu0 0.0
  %652 = vmatprep.subr.mxu0 0.0
  %653 = vmatpush1.xpose.msra.mxu0 0.0
  %654 = vmatprep.subr.mxu0 0.0
  %655 = vmatpush1.xpose.msra.mxu0 0.0
  %656 = vmatprep.subr.mxu0 0.0
  %657 = vmatpush1.xpose.msra.mxu0 0.0
  %658 = vmatprep.subr.mxu0 0.0
  %659 = vmatpush1.xpose.msra.mxu0 0.0
  %660 = vmatprep.subr.mxu0 0.0
  %661 = vmatpush1.xpose.msra.mxu0 0.0
  %662 = vmatprep.subr.mxu0 0.0
  %663 = vmatpush1.xpose.msra.mxu0 0.0
  %664 = vmatprep.subr.mxu0 0.0
  %665 = vmatpush1.xpose.msra.mxu0 0.0
  %666 = vmatprep.subr.mxu0 0.0
  %667 = vmatpush1.xpose.msra.mxu0 0.0
  %668 = vmatprep.subr.mxu0 0.0
  %669 = vmatpush1.xpose.msra.mxu0 %v636
  %670 = vmatprep.subr.mxu0 0.0
  %671 = vmatpush2.xpose.msra.mxu0 0.0
  %672 = vmatprep.subr.mxu0 0.0
  %673 = vmatpush2.xpose.msra.mxu0 0.0
  %674 = vmatprep.subr.mxu0 0.0
  %675 = vmatpush2.xpose.msra.mxu0 0.0
  %676 = vmatprep.subr.mxu0 0.0
  %677 = vmatpush2.xpose.msra.mxu0 0.0
  %678 = vmatprep.subr.mxu0 0.0
  %679 = vmatpush2.xpose.msra.mxu0 0.0
  %680 = vmatprep.subr.mxu0 0.0
  %681 = vmatpush2.xpose.msra.mxu0 0.0
  %682 = vmatprep.subr.mxu0 0.0
  %683 = vmatpush2.xpose.msra.mxu0 0.0
  %684 = vmatprep.subr.mxu0 0.0
  %685 = vmatpush2.xpose.msra.mxu0 0.0
  %686 = vmatprep.subr.mxu0 0.0
  %687 = vmatpush2.xpose.msra.mxu0 0.0
  %688 = vmatprep.subr.mxu0 0.0
  %689 = vmatpush2.xpose.msra.mxu0 0.0
  %690 = vmatprep.subr.mxu0 0.0
  %691 = vmatpush2.xpose.msra.mxu0 0.0
  %692 = vmatprep.subr.mxu0 0.0
  %693 = vmatpush2.xpose.msra.mxu0 0.0
  %694 = vmatprep.subr.mxu0 0.0
  %695 = vmatpush2.xpose.msra.mxu0 0.0
  %696 = vmatprep.subr.mxu0 0.0
  %697 = vmatpush2.xpose.msra.mxu0 0.0
  %698 = vmatprep.subr.mxu0 0.0
  %699 = vmatpush2.xpose.msra.mxu0 0.0
  %700 = vmatprep.subr.mxu0 0.0
  %701 = vmatpush2.xpose.msra.mxu0 0.0
  %702 = vmatprep.mubr.f32.mxu0 0.0
  %703 = vmatmul.mubr.f32.gmra.mxu0 %v634
  %v704 = vpop.f32.mrf.mxu0
  %v705 = vadd.f32 %v206, %v704
  %v706 = vpop.f32.mrf.mxu0
  %707 = vdwg.mxu0
  %v708 = vsel %vm304, %v705, -inf
  %709 = vmax.xlane.f32.xlu0 %v708
  %v710 = vpop.xlane.xlu0 %709
  %v711 = vsub.f32 %v705, %v710
  %v712 = vmul.f32 %v711, 1.442695
  %v713 = vpow.pop %v712
  %v714 = vsel %vm304, %v713, 0.0
  %715 = vadd.xlane.f32.xlu0 %v714
  %v716 = vpop.xlane.xlu0 %715
  %v717 = vrcp.pop %v716
  %v718 = vmul.f32 %v713, %v717
  %719 = vrot.lane.b32.xlu0 %v293, 56
  %v720 = vpop.permute.xlu0 %719
  %v723 = vsel %vm304, %v718, 0
  %725 = vmatprep.subr.mxu0 0.0
  %726 = vmatpush1.msra.mxu0 0.0
  %727 = vmatprep.subr.mxu0 0.0
  %728 = vmatpush1.msra.mxu0 0.0
  %729 = vmatprep.subr.mxu0 0.0
  %730 = vmatpush1.msra.mxu0 0.0
  %731 = vmatprep.subr.mxu0 0.0
  %732 = vmatpush1.msra.mxu0 0.0
  %733 = vmatprep.subr.mxu0 0.0
  %734 = vmatpush1.msra.mxu0 0.0
  %735 = vmatprep.subr.mxu0 0.0
  %736 = vmatpush1.msra.mxu0 0.0
  %737 = vmatprep.subr.mxu0 0.0
  %738 = vmatpush1.msra.mxu0 0.0
  %739 = vmatprep.subr.mxu0 0.0
  %740 = vmatpush1.msra.mxu0 0.0
  %741 = vmatprep.subr.mxu0 0.0
  %742 = vmatpush1.msra.mxu0 0.0
  %743 = vmatprep.subr.mxu0 0.0
  %744 = vmatpush1.msra.mxu0 0.0
  %745 = vmatprep.subr.mxu0 0.0
  %746 = vmatpush1.msra.mxu0 0.0
  %747 = vmatprep.subr.mxu0 0.0
  %748 = vmatpush1.msra.mxu0 0.0
  %749 = vmatprep.subr.mxu0 0.0
  %750 = vmatpush1.msra.mxu0 0.0
  %751 = vmatprep.subr.mxu0 0.0
  %752 = vmatpush1.msra.mxu0 0.0
  %753 = vmatprep.subr.mxu0 0.0
  %754 = vmatpush1.msra.mxu0 0.0
  %755 = vmatprep.subr.mxu0 0.0
  %756 = vmatpush1.msra.mxu0 %v720
  %757 = vmatprep.subr.mxu0 0.0
  %758 = vmatpush2.msra.mxu0 0.0
  %759 = vmatprep.subr.mxu0 0.0
  %760 = vmatpush2.msra.mxu0 0.0
  %761 = vmatprep.subr.mxu0 0.0
  %762 = vmatpush2.msra.mxu0 0.0
  %763 = vmatprep.subr.mxu0 0.0
  %764 = vmatpush2.msra.mxu0 0.0
  %765 = vmatprep.subr.mxu0 0.0
  %766 = vmatpush2.msra.mxu0 0.0
  %767 = vmatprep.subr.mxu0 0.0
  %768 = vmatpush2.msra.mxu0 0.0
  %769 = vmatprep.subr.mxu0 0.0
  %770 = vmatpush2.msra.mxu0 0.0
  %771 = vmatprep.subr.mxu0 0.0
  %772 = vmatpush2.msra.mxu0 0.0
  %773 = vmatprep.subr.mxu0 0.0
  %774 = vmatpush2.msra.mxu0 0.0
  %775 = vmatprep.subr.mxu0 0.0
  %776 = vmatpush2.msra.mxu0 0.0
  %777 = vmatprep.subr.mxu0 0.0
  %778 = vmatpush2.msra.mxu0 0.0
  %779 = vmatprep.subr.mxu0 0.0
  %780 = vmatpush2.msra.mxu0 0.0
  %781 = vmatprep.subr.mxu0 0.0
  %782 = vmatpush2.msra.mxu0 0.0
  %783 = vmatprep.subr.mxu0 0.0
  %784 = vmatpush2.msra.mxu0 0.0
  %785 = vmatprep.subr.mxu0 0.0
  %786 = vmatpush2.msra.mxu0 0.0
  %787 = vmatprep.subr.mxu0 0.0
  %788 = vmatpush2.msra.mxu0 0.0
  %789 = vmatprep.mubr.f32.mxu0 0.0
  %790 = vmatmul.mubr.f32.gmra.mxu0 %v723
  %v791 = vpop.f32.mrf.mxu0
  %v792 = vadd.f32 0.0, %v791
  %v793 = vpop.f32.mrf.mxu0
  %794 = vdwg.mxu0
  %795 = vrot.lane.b32.xlu0 %v298, 120
  %v796 = vpop.permute.xlu0 %795
  %797 = vrot.lane.b32.xlu0 %v298, 88
  %v798 = vpop.permute.xlu0 %797
  %v799 = vsel %vm304, %v796, 0
  %v801 = vsel %vm304, %v798, 0
  %803 = vmatprep.subr.mxu0 0.0
  %804 = vmatpush1.xpose.msra.mxu0 0.0
  %805 = vmatprep.subr.mxu0 0.0
  %806 = vmatpush1.xpose.msra.mxu0 0.0
  %807 = vmatprep.subr.mxu0 0.0
  %808 = vmatpush1.xpose.msra.mxu0 0.0
  %809 = vmatprep.subr.mxu0 0.0
  %810 = vmatpush1.xpose.msra.mxu0 0.0
  %811 = vmatprep.subr.mxu0 0.0
  %812 = vmatpush1.xpose.msra.mxu0 0.0
  %813 = vmatprep.subr.mxu0 0.0
  %814 = vmatpush1.xpose.msra.mxu0 0.0
  %815 = vmatprep.subr.mxu0 0.0
  %816 = vmatpush1.xpose.msra.mxu0 0.0
  %817 = vmatprep.subr.mxu0 0.0
  %818 = vmatpush1.xpose.msra.mxu0 0.0
  %819 = vmatprep.subr.mxu0 0.0
  %820 = vmatpush1.xpose.msra.mxu0 0.0
  %821 = vmatprep.subr.mxu0 0.0
  %822 = vmatpush1.xpose.msra.mxu0 0.0
  %823 = vmatprep.subr.mxu0 0.0
  %824 = vmatpush1.xpose.msra.mxu0 0.0
  %825 = vmatprep.subr.mxu0 0.0
  %826 = vmatpush1.xpose.msra.mxu0 0.0
  %827 = vmatprep.subr.mxu0 0.0
  %828 = vmatpush1.xpose.msra.mxu0 0.0
  %829 = vmatprep.subr.mxu0 0.0
  %830 = vmatpush1.xpose.msra.mxu0 0.0
  %831 = vmatprep.subr.mxu0 0.0
  %832 = vmatpush1.xpose.msra.mxu0 0.0
  %833 = vmatprep.subr.mxu0 0.0
  %834 = vmatpush1.xpose.msra.mxu0 %v801
  %835 = vmatprep.subr.mxu0 0.0
  %836 = vmatpush2.xpose.msra.mxu0 0.0
  %837 = vmatprep.subr.mxu0 0.0
  %838 = vmatpush2.xpose.msra.mxu0 0.0
  %839 = vmatprep.subr.mxu0 0.0
  %840 = vmatpush2.xpose.msra.mxu0 0.0
  %841 = vmatprep.subr.mxu0 0.0
  %842 = vmatpush2.xpose.msra.mxu0 0.0
  %843 = vmatprep.subr.mxu0 0.0
  %844 = vmatpush2.xpose.msra.mxu0 0.0
  %845 = vmatprep.subr.mxu0 0.0
  %846 = vmatpush2.xpose.msra.mxu0 0.0
  %847 = vmatprep.subr.mxu0 0.0
  %848 = vmatpush2.xpose.msra.mxu0 0.0
  %849 = vmatprep.subr.mxu0 0.0
  %850 = vmatpush2.xpose.msra.mxu0 0.0
  %851 = vmatprep.subr.mxu0 0.0
  %852 = vmatpush2.xpose.msra.mxu0 0.0
  %853 = vmatprep.subr.mxu0 0.0
  %854 = vmatpush2.xpose.msra.mxu0 0.0
  %855 = vmatprep.subr.mxu0 0.0
  %856 = vmatpush2.xpose.msra.mxu0 0.0
  %857 = vmatprep.subr.mxu0 0.0
  %858 = vmatpush2.xpose.msra.mxu0 0.0
  %859 = vmatprep.subr.mxu0 0.0
  %860 = vmatpush2.xpose.msra.mxu0 0.0
  %861 = vmatprep.subr.mxu0 0.0
  %862 = vmatpush2.xpose.msra.mxu0 0.0
  %863 = vmatprep.subr.mxu0 0.0
  %864 = vmatpush2.xpose.msra.mxu0 0.0
  %865 = vmatprep.subr.mxu0 0.0
  %866 = vmatpush2.xpose.msra.mxu0 0.0
  %867 = vmatprep.mubr.f32.mxu0 0.0
  %868 = vmatmul.mubr.f32.gmra.mxu0 %v799
  %v869 = vpop.f32.mrf.mxu0
  %v870 = vadd.f32 %v210, %v869
  %v871 = vpop.f32.mrf.mxu0
  %872 = vdwg.mxu0
  %v873 = vsel %vm304, %v870, -inf
  %874 = vmax.xlane.f32.xlu0 %v873
  %v875 = vpop.xlane.xlu0 %874
  %v876 = vsub.f32 %v870, %v875
  %v877 = vmul.f32 %v876, 1.442695
  %v878 = vpow.pop %v877
  %v879 = vsel %vm304, %v878, 0.0
  %880 = vadd.xlane.f32.xlu0 %v879
  %v881 = vpop.xlane.xlu0 %880
  %v882 = vrcp.pop %v881
  %v883 = vmul.f32 %v878, %v882
  %884 = vrot.lane.b32.xlu0 %v298, 56
  %v885 = vpop.permute.xlu0 %884
  %v888 = vsel %vm304, %v883, 0
  %890 = vmatprep.subr.mxu0 0.0
  %891 = vmatpush1.msra.mxu0 0.0
  %892 = vmatprep.subr.mxu0 0.0
  %893 = vmatpush1.msra.mxu0 0.0
  %894 = vmatprep.subr.mxu0 0.0
  %895 = vmatpush1.msra.mxu0 0.0
  %896 = vmatprep.subr.mxu0 0.0
  %897 = vmatpush1.msra.mxu0 0.0
  %898 = vmatprep.subr.mxu0 0.0
  %899 = vmatpush1.msra.mxu0 0.0
  %900 = vmatprep.subr.mxu0 0.0
  %901 = vmatpush1.msra.mxu0 0.0
  %902 = vmatprep.subr.mxu0 0.0
  %903 = vmatpush1.msra.mxu0 0.0
  %904 = vmatprep.subr.mxu0 0.0
  %905 = vmatpush1.msra.mxu0 0.0
  %906 = vmatprep.subr.mxu0 0.0
  %907 = vmatpush1.msra.mxu0 0.0
  %908 = vmatprep.subr.mxu0 0.0
  %909 = vmatpush1.msra.mxu0 0.0
  %910 = vmatprep.subr.mxu0 0.0
  %911 = vmatpush1.msra.mxu0 0.0
  %912 = vmatprep.subr.mxu0 0.0
  %913 = vmatpush1.msra.mxu0 0.0
  %914 = vmatprep.subr.mxu0 0.0
  %915 = vmatpush1.msra.mxu0 0.0
  %916 = vmatprep.subr.mxu0 0.0
  %917 = vmatpush1.msra.mxu0 0.0
  %918 = vmatprep.subr.mxu0 0.0
  %919 = vmatpush1.msra.mxu0 0.0
  %920 = vmatprep.subr.mxu0 0.0
  %921 = vmatpush1.msra.mxu0 %v885
  %922 = vmatprep.subr.mxu0 0.0
  %923 = vmatpush2.msra.mxu0 0.0
  %924 = vmatprep.subr.mxu0 0.0
  %925 = vmatpush2.msra.mxu0 0.0
  %926 = vmatprep.subr.mxu0 0.0
  %927 = vmatpush2.msra.mxu0 0.0
  %928 = vmatprep.subr.mxu0 0.0
  %929 = vmatpush2.msra.mxu0 0.0
  %930 = vmatprep.subr.mxu0 0.0
  %931 = vmatpush2.msra.mxu0 0.0
  %932 = vmatprep.subr.mxu0 0.0
  %933 = vmatpush2.msra.mxu0 0.0
  %934 = vmatprep.subr.mxu0 0.0
  %935 = vmatpush2.msra.mxu0 0.0
  %936 = vmatprep.subr.mxu0 0.0
  %937 = vmatpush2.msra.mxu0 0.0
  %938 = vmatprep.subr.mxu0 0.0
  %939 = vmatpush2.msra.mxu0 0.0
  %940 = vmatprep.subr.mxu0 0.0
  %941 = vmatpush2.msra.mxu0 0.0
  %942 = vmatprep.subr.mxu0 0.0
  %943 = vmatpush2.msra.mxu0 0.0
  %944 = vmatprep.subr.mxu0 0.0
  %945 = vmatpush2.msra.mxu0 0.0
  %946 = vmatprep.subr.mxu0 0.0
  %947 = vmatpush2.msra.mxu0 0.0
  %948 = vmatprep.subr.mxu0 0.0
  %949 = vmatpush2.msra.mxu0 0.0
  %950 = vmatprep.subr.mxu0 0.0
  %951 = vmatpush2.msra.mxu0 0.0
  %952 = vmatprep.subr.mxu0 0.0
  %953 = vmatpush2.msra.mxu0 0.0
  %954 = vmatprep.mubr.f32.mxu0 0.0
  %955 = vmatmul.mubr.f32.gmra.mxu0 %v888
  %v956 = vpop.f32.mrf.mxu0
  %v957 = vadd.f32 0.0, %v956
  %v958 = vpop.f32.mrf.mxu0
  %959 = vdwg.mxu0
  %960 = vrot.lane.b32.xlu0 %v293, 112
  %v961 = vpop.permute.xlu0 %960
  %962 = vrot.lane.b32.xlu0 %v293, 80
  %v963 = vpop.permute.xlu0 %962
  %v964 = vsel %vm304, %v961, 0
  %v966 = vsel %vm304, %v963, 0
  %968 = vmatprep.subr.mxu0 0.0
  %969 = vmatpush1.xpose.msra.mxu0 0.0
  %970 = vmatprep.subr.mxu0 0.0
  %971 = vmatpush1.xpose.msra.mxu0 0.0
  %972 = vmatprep.subr.mxu0 0.0
  %973 = vmatpush1.xpose.msra.mxu0 0.0
  %974 = vmatprep.subr.mxu0 0.0
  %975 = vmatpush1.xpose.msra.mxu0 0.0
  %976 = vmatprep.subr.mxu0 0.0
  %977 = vmatpush1.xpose.msra.mxu0 0.0
  %978 = vmatprep.subr.mxu0 0.0
  %979 = vmatpush1.xpose.msra.mxu0 0.0
  %980 = vmatprep.subr.mxu0 0.0
  %981 = vmatpush1.xpose.msra.mxu0 0.0
  %982 = vmatprep.subr.mxu0 0.0
  %983 = vmatpush1.xpose.msra.mxu0 0.0
  %984 = vmatprep.subr.mxu0 0.0
  %985 = vmatpush1.xpose.msra.mxu0 0.0
  %986 = vmatprep.subr.mxu0 0.0
  %987 = vmatpush1.xpose.msra.mxu0 0.0
  %988 = vmatprep.subr.mxu0 0.0
  %989 = vmatpush1.xpose.msra.mxu0 0.0
  %990 = vmatprep.subr.mxu0 0.0
  %991 = vmatpush1.xpose.msra.mxu0 0.0
  %992 = vmatprep.subr.mxu0 0.0
  %993 = vmatpush1.xpose.msra.mxu0 0.0
  %994 = vmatprep.subr.mxu0 0.0
  %995 = vmatpush1.xpose.msra.mxu0 0.0
  %996 = vmatprep.subr.mxu0 0.0
  %997 = vmatpush1.xpose.msra.mxu0 0.0
  %998 = vmatprep.subr.mxu0 0.0
  %999 = vmatpush1.xpose.msra.mxu0 %v966
  %1000 = vmatprep.subr.mxu0 0.0
  %1001 = vmatpush2.xpose.msra.mxu0 0.0
  %1002 = vmatprep.subr.mxu0 0.0
  %1003 = vmatpush2.xpose.msra.mxu0 0.0
  %1004 = vmatprep.subr.mxu0 0.0
  %1005 = vmatpush2.xpose.msra.mxu0 0.0
  %1006 = vmatprep.subr.mxu0 0.0
  %1007 = vmatpush2.xpose.msra.mxu0 0.0
  %1008 = vmatprep.subr.mxu0 0.0
  %1009 = vmatpush2.xpose.msra.mxu0 0.0
  %1010 = vmatprep.subr.mxu0 0.0
  %1011 = vmatpush2.xpose.msra.mxu0 0.0
  %1012 = vmatprep.subr.mxu0 0.0
  %1013 = vmatpush2.xpose.msra.mxu0 0.0
  %1014 = vmatprep.subr.mxu0 0.0
  %1015 = vmatpush2.xpose.msra.mxu0 0.0
  %1016 = vmatprep.subr.mxu0 0.0
  %1017 = vmatpush2.xpose.msra.mxu0 0.0
  %1018 = vmatprep.subr.mxu0 0.0
  %1019 = vmatpush2.xpose.msra.mxu0 0.0
  %1020 = vmatprep.subr.mxu0 0.0
  %1021 = vmatpush2.xpose.msra.mxu0 0.0
  %1022 = vmatprep.subr.mxu0 0.0
  %1023 = vmatpush2.xpose.msra.mxu0 0.0
  %1024 = vmatprep.subr.mxu0 0.0
  %1025 = vmatpush2.xpose.msra.mxu0 0.0
  %1026 = vmatprep.subr.mxu0 0.0
  %1027 = vmatpush2.xpose.msra.mxu0 0.0
  %1028 = vmatprep.subr.mxu0 0.0
  %1029 = vmatpush2.xpose.msra.mxu0 0.0
  %1030 = vmatprep.subr.mxu0 0.0
  %1031 = vmatpush2.xpose.msra.mxu0 0.0
  %1032 = vmatprep.mubr.f32.mxu0 0.0
  %1033 = vmatmul.mubr.f32.gmra.mxu0 %v964
  %v1034 = vpop.f32.mrf.mxu0
  %v1035 = vadd.f32 %v206, %v1034
  %v1036 = vpop.f32.mrf.mxu0
  %1037 = vdwg.mxu0
  %v1038 = vsel %vm304, %v1035, -inf
  %1039 = vmax.xlane.f32.xlu0 %v1038
  %v1040 = vpop.xlane.xlu0 %1039
  %v1041 = vsub.f32 %v1035, %v1040
  %v1042 = vmul.f32 %v1041, 1.442695
  %v1043 = vpow.pop %v1042
  %v1044 = vsel %vm304, %v1043, 0.0
  %1045 = vadd.xlane.f32.xlu0 %v1044
  %v1046 = vpop.xlane.xlu0 %1045
  %v1047 = vrcp.pop %v1046
  %v1048 = vmul.f32 %v1043, %v1047
  %1049 = vrot.lane.b32.xlu0 %v293, 48
  %v1050 = vpop.permute.xlu0 %1049
  %v1053 = vsel %vm304, %v1048, 0
  %1055 = vmatprep.subr.mxu0 0.0
  %1056 = vmatpush1.msra.mxu0 0.0
  %1057 = vmatprep.subr.mxu0 0.0
  %1058 = vmatpush1.msra.mxu0 0.0
  %1059 = vmatprep.subr.mxu0 0.0
  %1060 = vmatpush1.msra.mxu0 0.0
  %1061 = vmatprep.subr.mxu0 0.0
  %1062 = vmatpush1.msra.mxu0 0.0
  %1063 = vmatprep.subr.mxu0 0.0
  %1064 = vmatpush1.msra.mxu0 0.0
  %1065 = vmatprep.subr.mxu0 0.0
  %1066 = vmatpush1.msra.mxu0 0.0
  %1067 = vmatprep.subr.mxu0 0.0
  %1068 = vmatpush1.msra.mxu0 0.0
  %1069 = vmatprep.subr.mxu0 0.0
  %1070 = vmatpush1.msra.mxu0 0.0
  %1071 = vmatprep.subr.mxu0 0.0
  %1072 = vmatpush1.msra.mxu0 0.0
  %1073 = vmatprep.subr.mxu0 0.0
  %1074 = vmatpush1.msra.mxu0 0.0
  %1075 = vmatprep.subr.mxu0 0.0
  %1076 = vmatpush1.msra.mxu0 0.0
  %1077 = vmatprep.subr.mxu0 0.0
  %1078 = vmatpush1.msra.mxu0 0.0
  %1079 = vmatprep.subr.mxu0 0.0
  %1080 = vmatpush1.msra.mxu0 0.0
  %1081 = vmatprep.subr.mxu0 0.0
  %1082 = vmatpush1.msra.mxu0 0.0
  %1083 = vmatprep.subr.mxu0 0.0
  %1084 = vmatpush1.msra.mxu0 0.0
  %1085 = vmatprep.subr.mxu0 0.0
  %1086 = vmatpush1.msra.mxu0 %v1050
  %1087 = vmatprep.subr.mxu0 0.0
  %1088 = vmatpush2.msra.mxu0 0.0
  %1089 = vmatprep.subr.mxu0 0.0
  %1090 = vmatpush2.msra.mxu0 0.0
  %1091 = vmatprep.subr.mxu0 0.0
  %1092 = vmatpush2.msra.mxu0 0.0
  %1093 = vmatprep.subr.mxu0 0.0
  %1094 = vmatpush2.msra.mxu0 0.0
  %1095 = vmatprep.subr.mxu0 0.0
  %1096 = vmatpush2.msra.mxu0 0.0
  %1097 = vmatprep.subr.mxu0 0.0
  %1098 = vmatpush2.msra.mxu0 0.0
  %1099 = vmatprep.subr.mxu0 0.0
  %1100 = vmatpush2.msra.mxu0 0.0
  %1101 = vmatprep.subr.mxu0 0.0
  %1102 = vmatpush2.msra.mxu0 0.0
  %1103 = vmatprep.subr.mxu0 0.0
  %1104 = vmatpush2.msra.mxu0 0.0
  %1105 = vmatprep.subr.mxu0 0.0
  %1106 = vmatpush2.msra.mxu0 0.0
  %1107 = vmatprep.subr.mxu0 0.0
  %1108 = vmatpush2.msra.mxu0 0.0
  %1109 = vmatprep.subr.mxu0 0.0
  %1110 = vmatpush2.msra.mxu0 0.0
  %1111 = vmatprep.subr.mxu0 0.0
  %1112 = vmatpush2.msra.mxu0 0.0
  %1113 = vmatprep.subr.mxu0 0.0
  %1114 = vmatpush2.msra.mxu0 0.0
  %1115 = vmatprep.subr.mxu0 0.0
  %1116 = vmatpush2.msra.mxu0 0.0
  %1117 = vmatprep.subr.mxu0 0.0
  %1118 = vmatpush2.msra.mxu0 0.0
  %1119 = vmatprep.mubr.f32.mxu0 0.0
  %1120 = vmatmul.mubr.f32.gmra.mxu0 %v1053
  %v1121 = vpop.f32.mrf.mxu0
  %v1122 = vadd.f32 0.0, %v1121
  %v1123 = vpop.f32.mrf.mxu0
  %1124 = vdwg.mxu0
  %1125 = vrot.lane.b32.xlu0 %v298, 112
  %v1126 = vpop.permute.xlu0 %1125
  %1127 = vrot.lane.b32.xlu0 %v298, 80
  %v1128 = vpop.permute.xlu0 %1127
  %v1129 = vsel %vm304, %v1126, 0
  %v1131 = vsel %vm304, %v1128, 0
  %1133 = vmatprep.subr.mxu0 0.0
  %1134 = vmatpush1.xpose.msra.mxu0 0.0
  %1135 = vmatprep.subr.mxu0 0.0
  %1136 = vmatpush1.xpose.msra.mxu0 0.0
  %1137 = vmatprep.subr.mxu0 0.0
  %1138 = vmatpush1.xpose.msra.mxu0 0.0
  %1139 = vmatprep.subr.mxu0 0.0
  %1140 = vmatpush1.xpose.msra.mxu0 0.0
  %1141 = vmatprep.subr.mxu0 0.0
  %1142 = vmatpush1.xpose.msra.mxu0 0.0
  %1143 = vmatprep.subr.mxu0 0.0
  %1144 = vmatpush1.xpose.msra.mxu0 0.0
  %1145 = vmatprep.subr.mxu0 0.0
  %1146 = vmatpush1.xpose.msra.mxu0 0.0
  %1147 = vmatprep.subr.mxu0 0.0
  %1148 = vmatpush1.xpose.msra.mxu0 0.0
  %1149 = vmatprep.subr.mxu0 0.0
  %1150 = vmatpush1.xpose.msra.mxu0 0.0
  %1151 = vmatprep.subr.mxu0 0.0
  %1152 = vmatpush1.xpose.msra.mxu0 0.0
  %1153 = vmatprep.subr.mxu0 0.0
  %1154 = vmatpush1.xpose.msra.mxu0 0.0
  %1155 = vmatprep.subr.mxu0 0.0
  %1156 = vmatpush1.xpose.msra.mxu0 0.0
  %1157 = vmatprep.subr.mxu0 0.0
  %1158 = vmatpush1.xpose.msra.mxu0 0.0
  %1159 = vmatprep.subr.mxu0 0.0
  %1160 = vmatpush1.xpose.msra.mxu0 0.0
  %1161 = vmatprep.subr.mxu0 0.0
  %1162 = vmatpush1.xpose.msra.mxu0 0.0
  %1163 = vmatprep.subr.mxu0 0.0
  %1164 = vmatpush1.xpose.msra.mxu0 %v1131
  %1165 = vmatprep.subr.mxu0 0.0
  %1166 = vmatpush2.xpose.msra.mxu0 0.0
  %1167 = vmatprep.subr.mxu0 0.0
  %1168 = vmatpush2.xpose.msra.mxu0 0.0
  %1169 = vmatprep.subr.mxu0 0.0
  %1170 = vmatpush2.xpose.msra.mxu0 0.0
  %1171 = vmatprep.subr.mxu0 0.0
  %1172 = vmatpush2.xpose.msra.mxu0 0.0
  %1173 = vmatprep.subr.mxu0 0.0
  %1174 = vmatpush2.xpose.msra.mxu0 0.0
  %1175 = vmatprep.subr.mxu0 0.0
  %1176 = vmatpush2.xpose.msra.mxu0 0.0
  %1177 = vmatprep.subr.mxu0 0.0
  %1178 = vmatpush2.xpose.msra.mxu0 0.0
  %1179 = vmatprep.subr.mxu0 0.0
  %1180 = vmatpush2.xpose.msra.mxu0 0.0
  %1181 = vmatprep.subr.mxu0 0.0
  %1182 = vmatpush2.xpose.msra.mxu0 0.0
  %1183 = vmatprep.subr.mxu0 0.0
  %1184 = vmatpush2.xpose.msra.mxu0 0.0
  %1185 = vmatprep.subr.mxu0 0.0
  %1186 = vmatpush2.xpose.msra.mxu0 0.0
  %1187 = vmatprep.subr.mxu0 0.0
  %1188 = vmatpush2.xpose.msra.mxu0 0.0
  %1189 = vmatprep.subr.mxu0 0.0
  %1190 = vmatpush2.xpose.msra.mxu0 0.0
  %1191 = vmatprep.subr.mxu0 0.0
  %1192 = vmatpush2.xpose.msra.mxu0 0.0
  %1193 = vmatprep.subr.mxu0 0.0
  %1194 = vmatpush2.xpose.msra.mxu0 0.0
  %1195 = vmatprep.subr.mxu0 0.0
  %1196 = vmatpush2.xpose.msra.mxu0 0.0
  %1197 = vmatprep.mubr.f32.mxu0 0.0
  %1198 = vmatmul.mubr.f32.gmra.mxu0 %v1129
  %v1199 = vpop.f32.mrf.mxu0
  %v1200 = vadd.f32 %v210, %v1199
  %v1201 = vpop.f32.mrf.mxu0
  %1202 = vdwg.mxu0
  %v1203 = vsel %vm304, %v1200, -inf
  %1204 = vmax.xlane.f32.xlu0 %v1203
  %v1205 = vpop.xlane.xlu0 %1204
  %v1206 = vsub.f32 %v1200, %v1205
  %v1207 = vmul.f32 %v1206, 1.442695
  %v1208 = vpow.pop %v1207
  %v1209 = vsel %vm304, %v1208, 0.0
  %1210 = vadd.xlane.f32.xlu0 %v1209
  %v1211 = vpop.xlane.xlu0 %1210
  %v1212 = vrcp.pop %v1211
  %v1213 = vmul.f32 %v1208, %v1212
  %1214 = vrot.lane.b32.xlu0 %v298, 48
  %v1215 = vpop.permute.xlu0 %1214
  %v1218 = vsel %vm304, %v1213, 0
  %1220 = vmatprep.subr.mxu0 0.0
  %1221 = vmatpush1.msra.mxu0 0.0
  %1222 = vmatprep.subr.mxu0 0.0
  %1223 = vmatpush1.msra.mxu0 0.0
  %1224 = vmatprep.subr.mxu0 0.0
  %1225 = vmatpush1.msra.mxu0 0.0
  %1226 = vmatprep.subr.mxu0 0.0
  %1227 = vmatpush1.msra.mxu0 0.0
  %1228 = vmatprep.subr.mxu0 0.0
  %1229 = vmatpush1.msra.mxu0 0.0
  %1230 = vmatprep.subr.mxu0 0.0
  %1231 = vmatpush1.msra.mxu0 0.0
  %1232 = vmatprep.subr.mxu0 0.0
  %1233 = vmatpush1.msra.mxu0 0.0
  %1234 = vmatprep.subr.mxu0 0.0
  %1235 = vmatpush1.msra.mxu0 0.0
  %1236 = vmatprep.subr.mxu0 0.0
  %1237 = vmatpush1.msra.mxu0 0.0
  %1238 = vmatprep.subr.mxu0 0.0
  %1239 = vmatpush1.msra.mxu0 0.0
  %1240 = vmatprep.subr.mxu0 0.0
  %1241 = vmatpush1.msra.mxu0 0.0
  %1242 = vmatprep.subr.mxu0 0.0
  %1243 = vmatpush1.msra.mxu0 0.0
  %1244 = vmatprep.subr.mxu0 0.0
  %1245 = vmatpush1.msra.mxu0 0.0
  %1246 = vmatprep.subr.mxu0 0.0
  %1247 = vmatpush1.msra.mxu0 0.0
  %1248 = vmatprep.subr.mxu0 0.0
  %1249 = vmatpush1.msra.mxu0 0.0
  %1250 = vmatprep.subr.mxu0 0.0
  %1251 = vmatpush1.msra.mxu0 %v1215
  %1252 = vmatprep.subr.mxu0 0.0
  %1253 = vmatpush2.msra.mxu0 0.0
  %1254 = vmatprep.subr.mxu0 0.0
  %1255 = vmatpush2.msra.mxu0 0.0
  %1256 = vmatprep.subr.mxu0 0.0
  %1257 = vmatpush2.msra.mxu0 0.0
  %1258 = vmatprep.subr.mxu0 0.0
  %1259 = vmatpush2.msra.mxu0 0.0
  %1260 = vmatprep.subr.mxu0 0.0
  %1261 = vmatpush2.msra.mxu0 0.0
  %1262 = vmatprep.subr.mxu0 0.0
  %1263 = vmatpush2.msra.mxu0 0.0
  %1264 = vmatprep.subr.mxu0 0.0
  %1265 = vmatpush2.msra.mxu0 0.0
  %1266 = vmatprep.subr.mxu0 0.0
  %1267 = vmatpush2.msra.mxu0 0.0
  %1268 = vmatprep.subr.mxu0 0.0
  %1269 = vmatpush2.msra.mxu0 0.0
  %1270 = vmatprep.subr.mxu0 0.0
  %1271 = vmatpush2.msra.mxu0 0.0
  %1272 = vmatprep.subr.mxu0 0.0
  %1273 = vmatpush2.msra.mxu0 0.0
  %1274 = vmatprep.subr.mxu0 0.0
  %1275 = vmatpush2.msra.mxu0 0.0
  %1276 = vmatprep.subr.mxu0 0.0
  %1277 = vmatpush2.msra.mxu0 0.0
  %1278 = vmatprep.subr.mxu0 0.0
  %1279 = vmatpush2.msra.mxu0 0.0
  %1280 = vmatprep.subr.mxu0 0.0
  %1281 = vmatpush2.msra.mxu0 0.0
  %1282 = vmatprep.subr.mxu0 0.0
  %1283 = vmatpush2.msra.mxu0 0.0
  %1284 = vmatprep.mubr.f32.mxu0 0.0
  %1285 = vmatmul.mubr.f32.gmra.mxu0 %v1218
  %v1286 = vpop.f32.mrf.mxu0
  %v1287 = vadd.f32 0.0, %v1286
  %v1288 = vpop.f32.mrf.mxu0
  %1289 = vdwg.mxu0
  %1290 = vrot.lane.b32.xlu0 %v293, 104
  %v1291 = vpop.permute.xlu0 %1290
  %1292 = vrot.lane.b32.xlu0 %v293, 72
  %v1293 = vpop.permute.xlu0 %1292
  %v1294 = vsel %vm304, %v1291, 0
  %v1296 = vsel %vm304, %v1293, 0
  %1298 = vmatprep.subr.mxu0 0.0
  %1299 = vmatpush1.xpose.msra.mxu0 0.0
  %1300 = vmatprep.subr.mxu0 0.0
  %1301 = vmatpush1.xpose.msra.mxu0 0.0
  %1302 = vmatprep.subr.mxu0 0.0
  %1303 = vmatpush1.xpose.msra.mxu0 0.0
  %1304 = vmatprep.subr.mxu0 0.0
  %1305 = vmatpush1.xpose.msra.mxu0 0.0
  %1306 = vmatprep.subr.mxu0 0.0
  %1307 = vmatpush1.xpose.msra.mxu0 0.0
  %1308 = vmatprep.subr.mxu0 0.0
  %1309 = vmatpush1.xpose.msra.mxu0 0.0
  %1310 = vmatprep.subr.mxu0 0.0
  %1311 = vmatpush1.xpose.msra.mxu0 0.0
  %1312 = vmatprep.subr.mxu0 0.0
  %1313 = vmatpush1.xpose.msra.mxu0 0.0
  %1314 = vmatprep.subr.mxu0 0.0
  %1315 = vmatpush1.xpose.msra.mxu0 0.0
  %1316 = vmatprep.subr.mxu0 0.0
  %1317 = vmatpush1.xpose.msra.mxu0 0.0
  %1318 = vmatprep.subr.mxu0 0.0
  %1319 = vmatpush1.xpose.msra.mxu0 0.0
  %1320 = vmatprep.subr.mxu0 0.0
  %1321 = vmatpush1.xpose.msra.mxu0 0.0
  %1322 = vmatprep.subr.mxu0 0.0
  %1323 = vmatpush1.xpose.msra.mxu0 0.0
  %1324 = vmatprep.subr.mxu0 0.0
  %1325 = vmatpush1.xpose.msra.mxu0 0.0
  %1326 = vmatprep.subr.mxu0 0.0
  %1327 = vmatpush1.xpose.msra.mxu0 0.0
  %1328 = vmatprep.subr.mxu0 0.0
  %1329 = vmatpush1.xpose.msra.mxu0 %v1296
  %1330 = vmatprep.subr.mxu0 0.0
  %1331 = vmatpush2.xpose.msra.mxu0 0.0
  %1332 = vmatprep.subr.mxu0 0.0
  %1333 = vmatpush2.xpose.msra.mxu0 0.0
  %1334 = vmatprep.subr.mxu0 0.0
  %1335 = vmatpush2.xpose.msra.mxu0 0.0
  %1336 = vmatprep.subr.mxu0 0.0
  %1337 = vmatpush2.xpose.msra.mxu0 0.0
  %1338 = vmatprep.subr.mxu0 0.0
  %1339 = vmatpush2.xpose.msra.mxu0 0.0
  %1340 = vmatprep.subr.mxu0 0.0
  %1341 = vmatpush2.xpose.msra.mxu0 0.0
  %1342 = vmatprep.subr.mxu0 0.0
  %1343 = vmatpush2.xpose.msra.mxu0 0.0
  %1344 = vmatprep.subr.mxu0 0.0
  %1345 = vmatpush2.xpose.msra.mxu0 0.0
  %1346 = vmatprep.subr.mxu0 0.0
  %1347 = vmatpush2.xpose.msra.mxu0 0.0
  %1348 = vmatprep.subr.mxu0 0.0
  %1349 = vmatpush2.xpose.msra.mxu0 0.0
  %1350 = vmatprep.subr.mxu0 0.0
  %1351 = vmatpush2.xpose.msra.mxu0 0.0
  %1352 = vmatprep.subr.mxu0 0.0
  %1353 = vmatpush2.xpose.msra.mxu0 0.0
  %1354 = vmatprep.subr.mxu0 0.0
  %1355 = vmatpush2.xpose.msra.mxu0 0.0
  %1356 = vmatprep.subr.mxu0 0.0
  %1357 = vmatpush2.xpose.msra.mxu0 0.0
  %1358 = vmatprep.subr.mxu0 0.0
  %1359 = vmatpush2.xpose.msra.mxu0 0.0
  %1360 = vmatprep.subr.mxu0 0.0
  %1361 = vmatpush2.xpose.msra.mxu0 0.0
  %1362 = vmatprep.mubr.f32.mxu0 0.0
  %1363 = vmatmul.mubr.f32.gmra.mxu0 %v1294
  %v1364 = vpop.f32.mrf.mxu0
  %v1365 = vadd.f32 %v206, %v1364
  %v1366 = vpop.f32.mrf.mxu0
  %1367 = vdwg.mxu0
  %v1368 = vsel %vm304, %v1365, -inf
  %1369 = vmax.xlane.f32.xlu0 %v1368
  %v1370 = vpop.xlane.xlu0 %1369
  %v1371 = vsub.f32 %v1365, %v1370
  %v1372 = vmul.f32 %v1371, 1.442695
  %v1373 = vpow.pop %v1372
  %v1374 = vsel %vm304, %v1373, 0.0
  %1375 = vadd.xlane.f32.xlu0 %v1374
  %v1376 = vpop.xlane.xlu0 %1375
  %v1377 = vrcp.pop %v1376
  %v1378 = vmul.f32 %v1373, %v1377
  %1379 = vrot.lane.b32.xlu0 %v293, 40
  %v1380 = vpop.permute.xlu0 %1379
  %v1383 = vsel %vm304, %v1378, 0
  %1385 = vmatprep.subr.mxu0 0.0
  %1386 = vmatpush1.msra.mxu0 0.0
  %1387 = vmatprep.subr.mxu0 0.0
  %1388 = vmatpush1.msra.mxu0 0.0
  %1389 = vmatprep.subr.mxu0 0.0
  %1390 = vmatpush1.msra.mxu0 0.0
  %1391 = vmatprep.subr.mxu0 0.0
  %1392 = vmatpush1.msra.mxu0 0.0
  %1393 = vmatprep.subr.mxu0 0.0
  %1394 = vmatpush1.msra.mxu0 0.0
  %1395 = vmatprep.subr.mxu0 0.0
  %1396 = vmatpush1.msra.mxu0 0.0
  %1397 = vmatprep.subr.mxu0 0.0
  %1398 = vmatpush1.msra.mxu0 0.0
  %1399 = vmatprep.subr.mxu0 0.0
  %1400 = vmatpush1.msra.mxu0 0.0
  %1401 = vmatprep.subr.mxu0 0.0
  %1402 = vmatpush1.msra.mxu0 0.0
  %1403 = vmatprep.subr.mxu0 0.0
  %1404 = vmatpush1.msra.mxu0 0.0
  %1405 = vmatprep.subr.mxu0 0.0
  %1406 = vmatpush1.msra.mxu0 0.0
  %1407 = vmatprep.subr.mxu0 0.0
  %1408 = vmatpush1.msra.mxu0 0.0
  %1409 = vmatprep.subr.mxu0 0.0
  %1410 = vmatpush1.msra.mxu0 0.0
  %1411 = vmatprep.subr.mxu0 0.0
  %1412 = vmatpush1.msra.mxu0 0.0
  %1413 = vmatprep.subr.mxu0 0.0
  %1414 = vmatpush1.msra.mxu0 0.0
  %1415 = vmatprep.subr.mxu0 0.0
  %1416 = vmatpush1.msra.mxu0 %v1380
  %1417 = vmatprep.subr.mxu0 0.0
  %1418 = vmatpush2.msra.mxu0 0.0
  %1419 = vmatprep.subr.mxu0 0.0
  %1420 = vmatpush2.msra.mxu0 0.0
  %1421 = vmatprep.subr.mxu0 0.0
  %1422 = vmatpush2.msra.mxu0 0.0
  %1423 = vmatprep.subr.mxu0 0.0
  %1424 = vmatpush2.msra.mxu0 0.0
  %1425 = vmatprep.subr.mxu0 0.0
  %1426 = vmatpush2.msra.mxu0 0.0
  %1427 = vmatprep.subr.mxu0 0.0
  %1428 = vmatpush2.msra.mxu0 0.0
  %1429 = vmatprep.subr.mxu0 0.0
  %1430 = vmatpush2.msra.mxu0 0.0
  %1431 = vmatprep.subr.mxu0 0.0
  %1432 = vmatpush2.msra.mxu0 0.0
  %1433 = vmatprep.subr.mxu0 0.0
  %1434 = vmatpush2.msra.mxu0 0.0
  %1435 = vmatprep.subr.mxu0 0.0
  %1436 = vmatpush2.msra.mxu0 0.0
  %1437 = vmatprep.subr.mxu0 0.0
  %1438 = vmatpush2.msra.mxu0 0.0
  %1439 = vmatprep.subr.mxu0 0.0
  %1440 = vmatpush2.msra.mxu0 0.0
  %1441 = vmatprep.subr.mxu0 0.0
  %1442 = vmatpush2.msra.mxu0 0.0
  %1443 = vmatprep.subr.mxu0 0.0
  %1444 = vmatpush2.msra.mxu0 0.0
  %1445 = vmatprep.subr.mxu0 0.0
  %1446 = vmatpush2.msra.mxu0 0.0
  %1447 = vmatprep.subr.mxu0 0.0
  %1448 = vmatpush2.msra.mxu0 0.0
  %1449 = vmatprep.mubr.f32.mxu0 0.0
  %1450 = vmatmul.mubr.f32.gmra.mxu0 %v1383
  %v1451 = vpop.f32.mrf.mxu0
  %v1452 = vadd.f32 0.0, %v1451
  %v1453 = vpop.f32.mrf.mxu0
  %1454 = vdwg.mxu0
  %1455 = vrot.lane.b32.xlu0 %v298, 104
  %v1456 = vpop.permute.xlu0 %1455
  %1457 = vrot.lane.b32.xlu0 %v298, 72
  %v1458 = vpop.permute.xlu0 %1457
  %v1459 = vsel %vm304, %v1456, 0
  %v1461 = vsel %vm304, %v1458, 0
  %1463 = vmatprep.subr.mxu0 0.0
  %1464 = vmatpush1.xpose.msra.mxu0 0.0
  %1465 = vmatprep.subr.mxu0 0.0
  %1466 = vmatpush1.xpose.msra.mxu0 0.0
  %1467 = vmatprep.subr.mxu0 0.0
  %1468 = vmatpush1.xpose.msra.mxu0 0.0
  %1469 = vmatprep.subr.mxu0 0.0
  %1470 = vmatpush1.xpose.msra.mxu0 0.0
  %1471 = vmatprep.subr.mxu0 0.0
  %1472 = vmatpush1.xpose.msra.mxu0 0.0
  %1473 = vmatprep.subr.mxu0 0.0
  %1474 = vmatpush1.xpose.msra.mxu0 0.0
  %1475 = vmatprep.subr.mxu0 0.0
  %1476 = vmatpush1.xpose.msra.mxu0 0.0
  %1477 = vmatprep.subr.mxu0 0.0
  %1478 = vmatpush1.xpose.msra.mxu0 0.0
  %1479 = vmatprep.subr.mxu0 0.0
  %1480 = vmatpush1.xpose.msra.mxu0 0.0
  %1481 = vmatprep.subr.mxu0 0.0
  %1482 = vmatpush1.xpose.msra.mxu0 0.0
  %1483 = vmatprep.subr.mxu0 0.0
  %1484 = vmatpush1.xpose.msra.mxu0 0.0
  %1485 = vmatprep.subr.mxu0 0.0
  %1486 = vmatpush1.xpose.msra.mxu0 0.0
  %1487 = vmatprep.subr.mxu0 0.0
  %1488 = vmatpush1.xpose.msra.mxu0 0.0
  %1489 = vmatprep.subr.mxu0 0.0
  %1490 = vmatpush1.xpose.msra.mxu0 0.0
  %1491 = vmatprep.subr.mxu0 0.0
  %1492 = vmatpush1.xpose.msra.mxu0 0.0
  %1493 = vmatprep.subr.mxu0 0.0
  %1494 = vmatpush1.xpose.msra.mxu0 %v1461
  %1495 = vmatprep.subr.mxu0 0.0
  %1496 = vmatpush2.xpose.msra.mxu0 0.0
  %1497 = vmatprep.subr.mxu0 0.0
  %1498 = vmatpush2.xpose.msra.mxu0 0.0
  %1499 = vmatprep.subr.mxu0 0.0
  %1500 = vmatpush2.xpose.msra.mxu0 0.0
  %1501 = vmatprep.subr.mxu0 0.0
  %1502 = vmatpush2.xpose.msra.mxu0 0.0
  %1503 = vmatprep.subr.mxu0 0.0
  %1504 = vmatpush2.xpose.msra.mxu0 0.0
  %1505 = vmatprep.subr.mxu0 0.0
  %1506 = vmatpush2.xpose.msra.mxu0 0.0
  %1507 = vmatprep.subr.mxu0 0.0
  %1508 = vmatpush2.xpose.msra.mxu0 0.0
  %1509 = vmatprep.subr.mxu0 0.0
  %1510 = vmatpush2.xpose.msra.mxu0 0.0
  %1511 = vmatprep.subr.mxu0 0.0
  %1512 = vmatpush2.xpose.msra.mxu0 0.0
  %1513 = vmatprep.subr.mxu0 0.0
  %1514 = vmatpush2.xpose.msra.mxu0 0.0
  %1515 = vmatprep.subr.mxu0 0.0
  %1516 = vmatpush2.xpose.msra.mxu0 0.0
  %1517 = vmatprep.subr.mxu0 0.0
  %1518 = vmatpush2.xpose.msra.mxu0 0.0
  %1519 = vmatprep.subr.mxu0 0.0
  %1520 = vmatpush2.xpose.msra.mxu0 0.0
  %1521 = vmatprep.subr.mxu0 0.0
  %1522 = vmatpush2.xpose.msra.mxu0 0.0
  %1523 = vmatprep.subr.mxu0 0.0
  %1524 = vmatpush2.xpose.msra.mxu0 0.0
  %1525 = vmatprep.subr.mxu0 0.0
  %1526 = vmatpush2.xpose.msra.mxu0 0.0
  %1527 = vmatprep.mubr.f32.mxu0 0.0
  %1528 = vmatmul.mubr.f32.gmra.mxu0 %v1459
  %v1529 = vpop.f32.mrf.mxu0
  %v1530 = vadd.f32 %v210, %v1529
  %v1531 = vpop.f32.mrf.mxu0
  %1532 = vdwg.mxu0
  %v1533 = vsel %vm304, %v1530, -inf
  %1534 = vmax.xlane.f32.xlu0 %v1533
  %v1535 = vpop.xlane.xlu0 %1534
  %v1536 = vsub.f32 %v1530, %v1535
  %v1537 = vmul.f32 %v1536, 1.442695
  %v1538 = vpow.pop %v1537
  %v1539 = vsel %vm304, %v1538, 0.0
  %1540 = vadd.xlane.f32.xlu0 %v1539
  %v1541 = vpop.xlane.xlu0 %1540
  %v1542 = vrcp.pop %v1541
  %v1543 = vmul.f32 %v1538, %v1542
  %1544 = vrot.lane.b32.xlu0 %v298, 40
  %v1545 = vpop.permute.xlu0 %1544
  %v1548 = vsel %vm304, %v1543, 0
  %1550 = vmatprep.subr.mxu0 0.0
  %1551 = vmatpush1.msra.mxu0 0.0
  %1552 = vmatprep.subr.mxu0 0.0
  %1553 = vmatpush1.msra.mxu0 0.0
  %1554 = vmatprep.subr.mxu0 0.0
  %1555 = vmatpush1.msra.mxu0 0.0
  %1556 = vmatprep.subr.mxu0 0.0
  %1557 = vmatpush1.msra.mxu0 0.0
  %1558 = vmatprep.subr.mxu0 0.0
  %1559 = vmatpush1.msra.mxu0 0.0
  %1560 = vmatprep.subr.mxu0 0.0
  %1561 = vmatpush1.msra.mxu0 0.0
  %1562 = vmatprep.subr.mxu0 0.0
  %1563 = vmatpush1.msra.mxu0 0.0
  %1564 = vmatprep.subr.mxu0 0.0
  %1565 = vmatpush1.msra.mxu0 0.0
  %1566 = vmatprep.subr.mxu0 0.0
  %1567 = vmatpush1.msra.mxu0 0.0
  %1568 = vmatprep.subr.mxu0 0.0
  %1569 = vmatpush1.msra.mxu0 0.0
  %1570 = vmatprep.subr.mxu0 0.0
  %1571 = vmatpush1.msra.mxu0 0.0
  %1572 = vmatprep.subr.mxu0 0.0
  %1573 = vmatpush1.msra.mxu0 0.0
  %1574 = vmatprep.subr.mxu0 0.0
  %1575 = vmatpush1.msra.mxu0 0.0
  %1576 = vmatprep.subr.mxu0 0.0
  %1577 = vmatpush1.msra.mxu0 0.0
  %1578 = vmatprep.subr.mxu0 0.0
  %1579 = vmatpush1.msra.mxu0 0.0
  %1580 = vmatprep.subr.mxu0 0.0
  %1581 = vmatpush1.msra.mxu0 %v1545
  %1582 = vmatprep.subr.mxu0 0.0
  %1583 = vmatpush2.msra.mxu0 0.0
  %1584 = vmatprep.subr.mxu0 0.0
  %1585 = vmatpush2.msra.mxu0 0.0
  %1586 = vmatprep.subr.mxu0 0.0
  %1587 = vmatpush2.msra.mxu0 0.0
  %1588 = vmatprep.subr.mxu0 0.0
  %1589 = vmatpush2.msra.mxu0 0.0
  %1590 = vmatprep.subr.mxu0 0.0
  %1591 = vmatpush2.msra.mxu0 0.0
  %1592 = vmatprep.subr.mxu0 0.0
  %1593 = vmatpush2.msra.mxu0 0.0
  %1594 = vmatprep.subr.mxu0 0.0
  %1595 = vmatpush2.msra.mxu0 0.0
  %1596 = vmatprep.subr.mxu0 0.0
  %1597 = vmatpush2.msra.mxu0 0.0
  %1598 = vmatprep.subr.mxu0 0.0
  %1599 = vmatpush2.msra.mxu0 0.0
  %1600 = vmatprep.subr.mxu0 0.0
  %1601 = vmatpush2.msra.mxu0 0.0
  %1602 = vmatprep.subr.mxu0 0.0
  %1603 = vmatpush2.msra.mxu0 0.0
  %1604 = vmatprep.subr.mxu0 0.0
  %1605 = vmatpush2.msra.mxu0 0.0
  %1606 = vmatprep.subr.mxu0 0.0
  %1607 = vmatpush2.msra.mxu0 0.0
  %1608 = vmatprep.subr.mxu0 0.0
  %1609 = vmatpush2.msra.mxu0 0.0
  %1610 = vmatprep.subr.mxu0 0.0
  %1611 = vmatpush2.msra.mxu0 0.0
  %1612 = vmatprep.subr.mxu0 0.0
  %1613 = vmatpush2.msra.mxu0 0.0
  %1614 = vmatprep.mubr.f32.mxu0 0.0
  %1615 = vmatmul.mubr.f32.gmra.mxu0 %v1548
  %v1616 = vpop.f32.mrf.mxu0
  %v1617 = vadd.f32 0.0, %v1616
  %v1618 = vpop.f32.mrf.mxu0
  %1619 = vdwg.mxu0
  %1622 = vrot.lane.b32.xlu0 %v792, 8
  %v1623 = vpop.permute.xlu0 %1622
  %1624 = vrot.lane.b32.xlu0 %v957, 8
  %v1625 = vpop.permute.xlu0 %1624
  %1630 = vrot.lane.b32.xlu0 %v1122, 16
  %v1631 = vpop.permute.xlu0 %1630
  %1632 = vrot.lane.b32.xlu0 %v1287, 16
  %v1633 = vpop.permute.xlu0 %1632
  %1638 = vrot.lane.b32.xlu0 %v1452, 24
  %v1639 = vpop.permute.xlu0 %1638
  %1640 = vrot.lane.b32.xlu0 %v1617, 24
  %v1641 = vpop.permute.xlu0 %1640
  %v1644 = vsel %vm304, %v463, %v1623
  %v1645 = vsel %vm304, %v627, %v1625
  %vm1646 = vcmask 130048
  %v1647 = vsel %vm1646, %v1644, %v1631
  %v1648 = vsel %vm1646, %v1645, %v1633
  %vm1649 = vcmask 195584
  %v1650 = vsel %vm1649, %v1647, %v1639
  %v1651 = vsel %vm1649, %v1648, %v1641
  %v1652 = vld [vmem:[%s4] sm:$0xff]
  %v1653 = vld [vmem:[%s4 + $0x8] sm:$0xff]
  %v1654 = vld [vmem:[%s4 + $0x10] sm:$0xff]
  %v1655 = vld [vmem:[%s4 + $0x18] sm:$0xff]
  %v1656 = vld [vmem:[%s7 + $0x1] sm:$0x1]
  %v1657 = vlaneseq
  %v1658 = vshrl.u32 %v1657, 7
  %v1659 = vsub.s32 0, %v1658
  %v1660 = vrot.slane %v1656, %v1659
  %v1662 = vsel %vm159, %v1650, 0
  %v1665 = vsel %vm159, %v1651, 0
  %1667 = vmatprep.subr.mxu0 0.0
  %1668 = vmatpush1.msra.mxu0 0.0
  %1669 = vmatprep.subr.mxu0 0.0
  %1670 = vmatpush1.msra.mxu0 0.0
  %1671 = vmatprep.subr.mxu0 0.0
  %1672 = vmatpush1.msra.mxu0 0.0
  %1673 = vmatprep.subr.mxu0 0.0
  %1674 = vmatpush1.msra.mxu0 0.0
  %1675 = vmatprep.subr.mxu0 0.0
  %1676 = vmatpush1.msra.mxu0 0.0
  %1677 = vmatprep.subr.mxu0 0.0
  %1678 = vmatpush1.msra.mxu0 0.0
  %1679 = vmatprep.subr.mxu0 0.0
  %1680 = vmatpush1.msra.mxu0 0.0
  %1681 = vmatprep.subr.mxu0 0.0
  %1682 = vmatpush1.msra.mxu0 0.0
  %1683 = vmatprep.subr.mxu0 0.0
  %1684 = vmatpush1.msra.mxu0 0.0
  %1685 = vmatprep.subr.mxu0 0.0
  %1686 = vmatpush1.msra.mxu0 0.0
  %1687 = vmatprep.subr.mxu0 0.0
  %1688 = vmatpush1.msra.mxu0 0.0
  %1689 = vmatprep.subr.mxu0 0.0
  %1690 = vmatpush1.msra.mxu0 0.0
  %1691 = vmatprep.subr.mxu0 0.0
  %1692 = vmatpush1.msra.mxu0 %v1655
  %1693 = vmatprep.subr.mxu0 0.0
  %1694 = vmatpush1.msra.mxu0 %v1654
  %1695 = vmatprep.subr.mxu0 0.0
  %1696 = vmatpush1.msra.mxu0 %v1653
  %1697 = vmatprep.subr.mxu0 0.0
  %1698 = vmatpush1.msra.mxu0 %v1652
  %1699 = vmatprep.subr.mxu0 0.0
  %1700 = vmatpush2.msra.mxu0 0.0
  %1701 = vmatprep.subr.mxu0 0.0
  %1702 = vmatpush2.msra.mxu0 0.0
  %1703 = vmatprep.subr.mxu0 0.0
  %1704 = vmatpush2.msra.mxu0 0.0
  %1705 = vmatprep.subr.mxu0 0.0
  %1706 = vmatpush2.msra.mxu0 0.0
  %1707 = vmatprep.subr.mxu0 0.0
  %1708 = vmatpush2.msra.mxu0 0.0
  %1709 = vmatprep.subr.mxu0 0.0
  %1710 = vmatpush2.msra.mxu0 0.0
  %1711 = vmatprep.subr.mxu0 0.0
  %1712 = vmatpush2.msra.mxu0 0.0
  %1713 = vmatprep.subr.mxu0 0.0
  %1714 = vmatpush2.msra.mxu0 0.0
  %1715 = vmatprep.subr.mxu0 0.0
  %1716 = vmatpush2.msra.mxu0 0.0
  %1717 = vmatprep.subr.mxu0 0.0
  %1718 = vmatpush2.msra.mxu0 0.0
  %1719 = vmatprep.subr.mxu0 0.0
  %1720 = vmatpush2.msra.mxu0 0.0
  %1721 = vmatprep.subr.mxu0 0.0
  %1722 = vmatpush2.msra.mxu0 0.0
  %1723 = vmatprep.subr.mxu0 0.0
  %1724 = vmatpush2.msra.mxu0 0.0
  %1725 = vmatprep.subr.mxu0 0.0
  %1726 = vmatpush2.msra.mxu0 0.0
  %1727 = vmatprep.subr.mxu0 0.0
  %1728 = vmatpush2.msra.mxu0 0.0
  %1729 = vmatprep.subr.mxu0 0.0
  %1730 = vmatpush2.msra.mxu0 0.0
  %1731 = vmatprep.mubr.f32.mxu0 0.0
  %1732 = vmatmul.mubr.f32.gmra.mxu0 %v1662
  %v1733 = vpop.f32.mrf.mxu0
  %v1734 = vadd.f32 %v1660, %v1733
  %v1735 = vpop.f32.mrf.mxu0
  %1736 = vmatprep.mubr.f32.mxu0 0.0
  %1737 = vmatmul.mubr.f32.gmra.mxu0 %v1665
  %v1738 = vpop.f32.mrf.mxu0
  %v1739 = vadd.f32 %v1660, %v1738
  %v1740 = vpop.f32.mrf.mxu0
  %1741 = vdwg.mxu0
  %v1742 = vadd.f32 %v1734, %v197
  %v1743 = vadd.f32 %v1739, %v198
  %v1744 = vld [vmem:[%s7 + $0x2] sm:$0x1]
  %v1745 = vld [vmem:[%s7 + $0x3] sm:$0x1]
  %v1746 = vsel %vm159, %v1742, 0.0
  %1747 = vadd.xlane.f32.xlu0 %v1746
  %v1748 = vpop.xlane.xlu0 %1747
  %v1749 = vsel %vm159, %v1743, 0.0
  %1750 = vadd.xlane.f32.xlu0 %v1749
  %v1751 = vpop.xlane.xlu0 %1750
  %v1752 = vmul.f32 %v1748, %v166
  %v1753 = vmul.f32 %v1751, %v166
  %v1754 = vsub.f32 %v1742, %v1752
  %v1755 = vsub.f32 %v1743, %v1753
  %v1756 = vmul.f32 %v1754, %v1754
  %v1757 = vmul.f32 %v1755, %v1755
  %v1758 = vsel %vm159, %v1756, 0.0
  %1759 = vadd.xlane.f32.xlu0 %v1758
  %v1760 = vpop.xlane.xlu0 %1759
  %v1761 = vsel %vm159, %v1757, 0.0
  %1762 = vadd.xlane.f32.xlu0 %v1761
  %v1763 = vpop.xlane.xlu0 %1762
  %v1764 = vmul.f32 %v1760, %v166
  %v1765 = vmul.f32 %v1763, %v166
  %v1766 = vadd.f32 %v1764, 1e-12
  %v1767 = vadd.f32 %v1765, 1e-12
  %v1768 = vrsqrt.pop %v1766
  %v1769 = vrsqrt.pop %v1767
  %v1770 = vmul.f32 %v1754, %v1768
  %v1771 = vmul.f32 %v1755, %v1769
  %v1772 = vlaneseq
  %v1773 = vshrl.u32 %v1772, 7
  %v1774 = vsub.s32 0, %v1773
  %v1775 = vrot.slane %v1744, %v1774
  %v1776 = vmul.f32 %v1770, %v1775
  %v1777 = vmul.f32 %v1771, %v1775
  %v1778 = vlaneseq
  %v1779 = vshrl.u32 %v1778, 7
  %v1780 = vsub.s32 0, %v1779
  %v1781 = vrot.slane %v1745, %v1780
  %v1782 = vadd.f32 %v1776, %v1781
  %v1783 = vadd.f32 %v1777, %v1781
  %v1784 = vld [vmem:[%s5] sm:$0xff]
  %v1785 = vld [vmem:[%s5 + $0x8] sm:$0xff]
  %v1786 = vld [vmem:[%s5 + $0x10] sm:$0xff]
  %v1787 = vld [vmem:[%s5 + $0x18] sm:$0xff]
  %v1788 = vld [vmem:[%s7 + $0x4] sm:$0x1]
  %v1789 = vlaneseq
  %v1790 = vshrl.u32 %v1789, 7
  %v1791 = vsub.s32 0, %v1790
  %v1792 = vrot.slane %v1788, %v1791
  %v1794 = vsel %vm159, %v1782, 0
  %v1797 = vsel %vm159, %v1783, 0
  %1799 = vmatprep.subr.mxu0 0.0
  %1800 = vmatpush1.msra.mxu0 0.0
  %1801 = vmatprep.subr.mxu0 0.0
  %1802 = vmatpush1.msra.mxu0 0.0
  %1803 = vmatprep.subr.mxu0 0.0
  %1804 = vmatpush1.msra.mxu0 0.0
  %1805 = vmatprep.subr.mxu0 0.0
  %1806 = vmatpush1.msra.mxu0 0.0
  %1807 = vmatprep.subr.mxu0 0.0
  %1808 = vmatpush1.msra.mxu0 0.0
  %1809 = vmatprep.subr.mxu0 0.0
  %1810 = vmatpush1.msra.mxu0 0.0
  %1811 = vmatprep.subr.mxu0 0.0
  %1812 = vmatpush1.msra.mxu0 0.0
  %1813 = vmatprep.subr.mxu0 0.0
  %1814 = vmatpush1.msra.mxu0 0.0
  %1815 = vmatprep.subr.mxu0 0.0
  %1816 = vmatpush1.msra.mxu0 0.0
  %1817 = vmatprep.subr.mxu0 0.0
  %1818 = vmatpush1.msra.mxu0 0.0
  %1819 = vmatprep.subr.mxu0 0.0
  %1820 = vmatpush1.msra.mxu0 0.0
  %1821 = vmatprep.subr.mxu0 0.0
  %1822 = vmatpush1.msra.mxu0 0.0
  %1823 = vmatprep.subr.mxu0 0.0
  %1824 = vmatpush1.msra.mxu0 %v1787
  %1825 = vmatprep.subr.mxu0 0.0
  %1826 = vmatpush1.msra.mxu0 %v1786
  %1827 = vmatprep.subr.mxu0 0.0
  %1828 = vmatpush1.msra.mxu0 %v1785
  %1829 = vmatprep.subr.mxu0 0.0
  %1830 = vmatpush1.msra.mxu0 %v1784
  %1831 = vmatprep.subr.mxu0 0.0
  %1832 = vmatpush2.msra.mxu0 0.0
  %1833 = vmatprep.subr.mxu0 0.0
  %1834 = vmatpush2.msra.mxu0 0.0
  %1835 = vmatprep.subr.mxu0 0.0
  %1836 = vmatpush2.msra.mxu0 0.0
  %1837 = vmatprep.subr.mxu0 0.0
  %1838 = vmatpush2.msra.mxu0 0.0
  %1839 = vmatprep.subr.mxu0 0.0
  %1840 = vmatpush2.msra.mxu0 0.0
  %1841 = vmatprep.subr.mxu0 0.0
  %1842 = vmatpush2.msra.mxu0 0.0
  %1843 = vmatprep.subr.mxu0 0.0
  %1844 = vmatpush2.msra.mxu0 0.0
  %1845 = vmatprep.subr.mxu0 0.0
  %1846 = vmatpush2.msra.mxu0 0.0
  %1847 = vmatprep.subr.mxu0 0.0
  %1848 = vmatpush2.msra.mxu0 0.0
  %1849 = vmatprep.subr.mxu0 0.0
  %1850 = vmatpush2.msra.mxu0 0.0
  %1851 = vmatprep.subr.mxu0 0.0
  %1852 = vmatpush2.msra.mxu0 0.0
  %1853 = vmatprep.subr.mxu0 0.0
  %1854 = vmatpush2.msra.mxu0 0.0
  %1855 = vmatprep.subr.mxu0 0.0
  %1856 = vmatpush2.msra.mxu0 0.0
  %1857 = vmatprep.subr.mxu0 0.0
  %1858 = vmatpush2.msra.mxu0 0.0
  %1859 = vmatprep.subr.mxu0 0.0
  %1860 = vmatpush2.msra.mxu0 0.0
  %1861 = vmatprep.subr.mxu0 0.0
  %1862 = vmatpush2.msra.mxu0 0.0
  %1863 = vmatprep.mubr.f32.mxu0 0.0
  %1864 = vmatmul.mubr.f32.gmra.mxu0 %v1794
  %v1865 = vpop.f32.mrf.mxu0
  %v1866 = vadd.f32 %v1792, %v1865
  %v1867 = vpop.f32.mrf.mxu0
  %1868 = vmatprep.mubr.f32.mxu0 0.0
  %1869 = vmatmul.mubr.f32.gmra.mxu0 %v1797
  %v1870 = vpop.f32.mrf.mxu0
  %v1871 = vadd.f32 %v1792, %v1870
  %v1872 = vpop.f32.mrf.mxu0
  %1873 = vdwg.mxu0
  %v1874 = vmul.f32 %v1866, %v1866
  %v1875 = vmul.f32 %v1871, %v1871
  %v1876 = vmul.f32 %v1866, %v1874
  %v1877 = vmul.f32 %v1871, %v1875
  %v1878 = vmul.f32 %v1876, 0.044715
  %v1879 = vmul.f32 %v1877, 0.044715
  %v1880 = vadd.f32 %v1866, %v1878
  %v1881 = vadd.f32 %v1871, %v1879
  %v1882 = vmul.f32 %v1880, 0.7978846
  %v1883 = vmul.f32 %v1881, 0.7978846
  %v1884 = vtanh.pop %v1882
  %v1885 = vtanh.pop %v1883
  %v1886 = vadd.f32 %v1884, 1.0
  %v1887 = vadd.f32 %v1885, 1.0
  %v1888 = vmul.f32 %v1886, 0.5
  %v1889 = vmul.f32 %v1887, 0.5
  %v1890 = vmul.f32 %v1866, %v1888
  %v1891 = vmul.f32 %v1871, %v1889
  %v1892 = vld [vmem:[%s6] sm:$0xff]
  %v1893 = vld [vmem:[%s6 + $0x8] sm:$0xff]
  %v1894 = vld [vmem:[%s6 + $0x10] sm:$0xff]
  %v1895 = vld [vmem:[%s6 + $0x18] sm:$0xff]
  %v1896 = vld [vmem:[%s6 + $0x20] sm:$0xff]
  %v1897 = vld [vmem:[%s6 + $0x28] sm:$0xff]
  %v1898 = vld [vmem:[%s6 + $0x30] sm:$0xff]
  %v1899 = vld [vmem:[%s6 + $0x38] sm:$0xff]
  %v1900 = vld [vmem:[%s7 + $0x5] sm:$0x1]
  %v1901 = vlaneseq
  %v1902 = vshrl.u32 %v1901, 7
  %v1903 = vsub.s32 0, %v1902
  %v1904 = vrot.slane %v1900, %v1903
  %vm1905 = vcmask 523264
  %v1907 = vsel %vm1905, %v1890, 0
  %v1910 = vsel %vm1905, %v1891, 0
  %1912 = vmatprep.subr.mxu0 0.0
  %1913 = vmatpush1.msra.mxu0 0.0
  %1914 = vmatprep.subr.mxu0 0.0
  %1915 = vmatpush1.msra.mxu0 0.0
  %1916 = vmatprep.subr.mxu0 0.0
  %1917 = vmatpush1.msra.mxu0 0.0
  %1918 = vmatprep.subr.mxu0 0.0
  %1919 = vmatpush1.msra.mxu0 0.0
  %1920 = vmatprep.subr.mxu0 0.0
  %1921 = vmatpush1.msra.mxu0 0.0
  %1922 = vmatprep.subr.mxu0 0.0
  %1923 = vmatpush1.msra.mxu0 0.0
  %1924 = vmatprep.subr.mxu0 0.0
  %1925 = vmatpush1.msra.mxu0 0.0
  %1926 = vmatprep.subr.mxu0 0.0
  %1927 = vmatpush1.msra.mxu0 0.0
  %1928 = vmatprep.subr.mxu0 0.0
  %1929 = vmatpush1.msra.mxu0 %v1899
  %1930 = vmatprep.subr.mxu0 0.0
  %1931 = vmatpush1.msra.mxu0 %v1898
  %1932 = vmatprep.subr.mxu0 0.0
  %1933 = vmatpush1.msra.mxu0 %v1897
  %1934 = vmatprep.subr.mxu0 0.0
  %1935 = vmatpush1.msra.mxu0 %v1896
  %1936 = vmatprep.subr.mxu0 0.0
  %1937 = vmatpush1.msra.mxu0 %v1895
  %1938 = vmatprep.subr.mxu0 0.0
  %1939 = vmatpush1.msra.mxu0 %v1894
  %1940 = vmatprep.subr.mxu0 0.0
  %1941 = vmatpush1.msra.mxu0 %v1893
  %1942 = vmatprep.subr.mxu0 0.0
  %1943 = vmatpush1.msra.mxu0 %v1892
  %1944 = vmatprep.subr.mxu0 0.0
  %1945 = vmatpush2.msra.mxu0 0.0
  %1946 = vmatprep.subr.mxu0 0.0
  %1947 = vmatpush2.msra.mxu0 0.0
  %1948 = vmatprep.subr.mxu0 0.0
  %1949 = vmatpush2.msra.mxu0 0.0
  %1950 = vmatprep.subr.mxu0 0.0
  %1951 = vmatpush2.msra.mxu0 0.0
  %1952 = vmatprep.subr.mxu0 0.0
  %1953 = vmatpush2.msra.mxu0 0.0
  %1954 = vmatprep.subr.mxu0 0.0
  %1955 = vmatpush2.msra.mxu0 0.0
  %1956 = vmatprep.subr.mxu0 0.0
  %1957 = vmatpush2.msra.mxu0 0.0
  %1958 = vmatprep.subr.mxu0 0.0
  %1959 = vmatpush2.msra.mxu0 0.0
  %1960 = vmatprep.subr.mxu0 0.0
  %1961 = vmatpush2.msra.mxu0 0.0
  %1962 = vmatprep.subr.mxu0 0.0
  %1963 = vmatpush2.msra.mxu0 0.0
  %1964 = vmatprep.subr.mxu0 0.0
  %1965 = vmatpush2.msra.mxu0 0.0
  %1966 = vmatprep.subr.mxu0 0.0
  %1967 = vmatpush2.msra.mxu0 0.0
  %1968 = vmatprep.subr.mxu0 0.0
  %1969 = vmatpush2.msra.mxu0 0.0
  %1970 = vmatprep.subr.mxu0 0.0
  %1971 = vmatpush2.msra.mxu0 0.0
  %1972 = vmatprep.subr.mxu0 0.0
  %1973 = vmatpush2.msra.mxu0 0.0
  %1974 = vmatprep.subr.mxu0 0.0
  %1975 = vmatpush2.msra.mxu0 0.0
  %1976 = vmatprep.mubr.f32.mxu0 0.0
  %1977 = vmatmul.mubr.f32.gmra.mxu0 %v1907
  %v1978 = vpop.f32.mrf.mxu0
  %v1979 = vadd.f32 %v1904, %v1978
  %v1980 = vpop.f32.mrf.mxu0
  %1981 = vmatprep.mubr.f32.mxu0 0.0
  %1982 = vmatmul.mubr.f32.gmra.mxu0 %v1910
  %v1983 = vpop.f32.mrf.mxu0
  %v1984 = vadd.f32 %v1904, %v1983
  %v1985 = vpop.f32.mrf.mxu0
  %1986 = vdwg.mxu0
  %v1987 = vadd.f32 %v1979, %v1782
  %v1988 = vadd.f32 %v1984, %v1783
  %v1989 = vld [vmem:[%s7 + $0x6] sm:$0x1]
  %v1990 = vld [vmem:[%s7 + $0x7] sm:$0x1]
  %v1991 = vsel %vm159, %v1987, 0.0
  %1992 = vadd.xlane.f32.xlu0 %v1991
  %v1993 = vpop.xlane.xlu0 %1992
  %v1994 = vsel %vm159, %v1988, 0.0
  %1995 = vadd.xlane.f32.xlu0 %v1994
  %v1996 = vpop.xlane.xlu0 %1995
  %v1997 = vmul.f32 %v1993, %v166
  %v1998 = vmul.f32 %v1996, %v166
  %v1999 = vsub.f32 %v1987, %v1997
  %v2000 = vsub.f32 %v1988, %v1998
  %v2001 = vmul.f32 %v1999, %v1999
  %v2002 = vmul.f32 %v2000, %v2000
  %v2003 = vsel %vm159, %v2001, 0.0
  %2004 = vadd.xlane.f32.xlu0 %v2003
  %v2005 = vpop.xlane.xlu0 %2004
  %v2006 = vsel %vm159, %v2002, 0.0
  %2007 = vadd.xlane.f32.xlu0 %v2006
  %v2008 = vpop.xlane.xlu0 %2007
  %v2009 = vmul.f32 %v2005, %v166
  %v2010 = vmul.f32 %v2008, %v166
  %v2011 = vadd.f32 %v2009, 1e-12
  %v2012 = vadd.f32 %v2010, 1e-12
  %v2013 = vrsqrt.pop %v2011
  %v2014 = vrsqrt.pop %v2012
  %v2015 = vmul.f32 %v1999, %v2013
  %v2016 = vmul.f32 %v2000, %v2014
  %v2017 = vlaneseq
  %v2018 = vshrl.u32 %v2017, 7
  %v2019 = vsub.s32 0, %v2018
  %v2020 = vrot.slane %v1989, %v2019
  %v2021 = vmul.f32 %v2015, %v2020
  %v2022 = vmul.f32 %v2016, %v2020
  %v2023 = vlaneseq
  %v2024 = vshrl.u32 %v2023, 7
  %v2025 = vsub.s32 0, %v2024
  %v2026 = vrot.slane %v1990, %v2025
  %v2027 = vadd.f32 %v2021, %v2026
  %v2028 = vadd.f32 %v2022, %v2026
  %s2029 = scalar_lea.vmem %s3, 32
  %v2030 = vld [vmem:[%s2029] sm:$0xff]
  %v2031 = vld [vmem:[%s2029 + $0x8] sm:$0xff]
  %v2032 = vld [vmem:[%s2029 + $0x10] sm:$0xff]
  %v2033 = vld [vmem:[%s2029 + $0x18] sm:$0xff]
  %s2034 = scalar_lea.vmem %s7, 8
  %v2035 = vld [vmem:[%s2034] sm:$0x1]
  %v2036 = vlaneseq
  %v2037 = vshrl.u32 %v2036, 7
  %v2038 = vsub.s32 0, %v2037
  %v2039 = vrot.slane %v2035, %v2038
  %v2041 = vsel %vm159, %v2027, 0
  %v2044 = vsel %vm159, %v2028, 0
  %2046 = vmatprep.subr.mxu0 0.0
  %2047 = vmatpush1.msra.mxu0 0.0
  %2048 = vmatprep.subr.mxu0 0.0
  %2049 = vmatpush1.msra.mxu0 0.0
  %2050 = vmatprep.subr.mxu0 0.0
  %2051 = vmatpush1.msra.mxu0 0.0
  %2052 = vmatprep.subr.mxu0 0.0
  %2053 = vmatpush1.msra.mxu0 0.0
  %2054 = vmatprep.subr.mxu0 0.0
  %2055 = vmatpush1.msra.mxu0 0.0
  %2056 = vmatprep.subr.mxu0 0.0
  %2057 = vmatpush1.msra.mxu0 0.0
  %2058 = vmatprep.subr.mxu0 0.0
  %2059 = vmatpush1.msra.mxu0 0.0
  %2060 = vmatprep.subr.mxu0 0.0
  %2061 = vmatpush1.msra.mxu0 0.0
  %2062 = vmatprep.subr.mxu0 0.0
  %2063 = vmatpush1.msra.mxu0 0.0
  %2064 = vmatprep.subr.mxu0 0.0
  %2065 = vmatpush1.msra.mxu0 0.0
  %2066 = vmatprep.subr.mxu0 0.0
  %2067 = vmatpush1.msra.mxu0 0.0
  %2068 = vmatprep.subr.mxu0 0.0
  %2069 = vmatpush1.msra.mxu0 0.0
  %2070 = vmatprep.subr.mxu0 0.0
  %2071 = vmatpush1.msra.mxu0 %v2033
  %2072 = vmatprep.subr.mxu0 0.0
  %2073 = vmatpush1.msra.mxu0 %v2032
  %2074 = vmatprep.subr.mxu0 0.0
  %2075 = vmatpush1.msra.mxu0 %v2031
  %2076 = vmatprep.subr.mxu0 0.0
  %2077 = vmatpush1.msra.mxu0 %v2030
  %2078 = vmatprep.subr.mxu0 0.0
  %2079 = vmatpush2.msra.mxu0 0.0
  %2080 = vmatprep.subr.mxu0 0.0
  %2081 = vmatpush2.msra.mxu0 0.0
  %2082 = vmatprep.subr.mxu0 0.0
  %2083 = vmatpush2.msra.mxu0 0.0
  %2084 = vmatprep.subr.mxu0 0.0
  %2085 = vmatpush2.msra.mxu0 0.0
  %2086 = vmatprep.subr.mxu0 0.0
  %2087 = vmatpush2.msra.mxu0 0.0
  %2088 = vmatprep.subr.mxu0 0.0
  %2089 = vmatpush2.msra.mxu0 0.0
  %2090 = vmatprep.subr.mxu0 0.0
  %2091 = vmatpush2.msra.mxu0 0.0
  %2092 = vmatprep.subr.mxu0 0.0
  %2093 = vmatpush2.msra.mxu0 0.0
  %2094 = vmatprep.subr.mxu0 0.0
  %2095 = vmatpush2.msra.mxu0 0.0
  %2096 = vmatprep.subr.mxu0 0.0
  %2097 = vmatpush2.msra.mxu0 0.0
  %2098 = vmatprep.subr.mxu0 0.0
  %2099 = vmatpush2.msra.mxu0 0.0
  %2100 = vmatprep.subr.mxu0 0.0
  %2101 = vmatpush2.msra.mxu0 0.0
  %2102 = vmatprep.subr.mxu0 0.0
  %2103 = vmatpush2.msra.mxu0 0.0
  %2104 = vmatprep.subr.mxu0 0.0
  %2105 = vmatpush2.msra.mxu0 0.0
  %2106 = vmatprep.subr.mxu0 0.0
  %2107 = vmatpush2.msra.mxu0 0.0
  %2108 = vmatprep.subr.mxu0 0.0
  %2109 = vmatpush2.msra.mxu0 0.0
  %2110 = vmatprep.mubr.f32.mxu0 0.0
  %2111 = vmatmul.mubr.f32.gmra.mxu0 %v2041
  %v2112 = vpop.f32.mrf.mxu0
  %v2113 = vadd.f32 %v2039, %v2112
  %v2114 = vpop.f32.mrf.mxu0
  %2115 = vmatprep.mubr.f32.mxu0 0.0
  %2116 = vmatmul.mubr.f32.gmra.mxu0 %v2044
  %v2117 = vpop.f32.mrf.mxu0
  %v2118 = vadd.f32 %v2039, %v2117
  %v2119 = vpop.f32.mrf.mxu0
  %2120 = vdwg.mxu0
  %2122 = vrot.lane.b32.xlu0 %v2113, 96
  %v2123 = vpop.permute.xlu0 %2122
  %v2124 = vsel %vm304, %v2113, 0
  %v2126 = vsel %vm304, %v2123, 0
  %2128 = vmatprep.subr.mxu0 0.0
  %2129 = vmatpush1.xpose.msra.mxu0 0.0
  %2130 = vmatprep.subr.mxu0 0.0
  %2131 = vmatpush1.xpose.msra.mxu0 0.0
  %2132 = vmatprep.subr.mxu0 0.0
  %2133 = vmatpush1.xpose.msra.mxu0 0.0
  %2134 = vmatprep.subr.mxu0 0.0
  %2135 = vmatpush1.xpose.msra.mxu0 0.0
  %2136 = vmatprep.subr.mxu0 0.0
  %2137 = vmatpush1.xpose.msra.mxu0 0.0
  %2138 = vmatprep.subr.mxu0 0.0
  %2139 = vmatpush1.xpose.msra.mxu0 0.0
  %2140 = vmatprep.subr.mxu0 0.0
  %2141 = vmatpush1.xpose.msra.mxu0 0.0
  %2142 = vmatprep.subr.mxu0 0.0
  %2143 = vmatpush1.xpose.msra.mxu0 0.0
  %2144 = vmatprep.subr.mxu0 0.0
  %2145 = vmatpush1.xpose.msra.mxu0 0.0
  %2146 = vmatprep.subr.mxu0 0.0
  %2147 = vmatpush1.xpose.msra.mxu0 0.0
  %2148 = vmatprep.subr.mxu0 0.0
  %2149 = vmatpush1.xpose.msra.mxu0 0.0
  %2150 = vmatprep.subr.mxu0 0.0
  %2151 = vmatpush1.xpose.msra.mxu0 0.0
  %2152 = vmatprep.subr.mxu0 0.0
  %2153 = vmatpush1.xpose.msra.mxu0 0.0
  %2154 = vmatprep.subr.mxu0 0.0
  %2155 = vmatpush1.xpose.msra.mxu0 0.0
  %2156 = vmatprep.subr.mxu0 0.0
  %2157 = vmatpush1.xpose.msra.mxu0 0.0
  %2158 = vmatprep.subr.mxu0 0.0
  %2159 = vmatpush1.xpose.msra.mxu0 %v2126
  %2160 = vmatprep.subr.mxu0 0.0
  %2161 = vmatpush2.xpose.msra.mxu0 0.0
  %2162 = vmatprep.subr.mxu0 0.0
  %2163 = vmatpush2.xpose.msra.mxu0 0.0
  %2164 = vmatprep.subr.mxu0 0.0
  %2165 = vmatpush2.xpose.msra.mxu0 0.0
  %2166 = vmatprep.subr.mxu0 0.0
  %2167 = vmatpush2.xpose.msra.mxu0 0.0
  %2168 = vmatprep.subr.mxu0 0.0
  %2169 = vmatpush2.xpose.msra.mxu0 0.0
  %2170 = vmatprep.subr.mxu0 0.0
  %2171 = vmatpush2.xpose.msra.mxu0 0.0
  %2172 = vmatprep.subr.mxu0 0.0
  %2173 = vmatpush2.xpose.msra.mxu0 0.0
  %2174 = vmatprep.subr.mxu0 0.0
  %2175 = vmatpush2.xpose.msra.mxu0 0.0
  %2176 = vmatprep.subr.mxu0 0.0
  %2177 = vmatpush2.xpose.msra.mxu0 0.0
  %2178 = vmatprep.subr.mxu0 0.0
  %2179 = vmatpush2.xpose.msra.mxu0 0.0
  %2180 = vmatprep.subr.mxu0 0.0
  %2181 = vmatpush2.xpose.msra.mxu0 0.0
  %2182 = vmatprep.subr.mxu0 0.0
  %2183 = vmatpush2.xpose.msra.mxu0 0.0
  %2184 = vmatprep.subr.mxu0 0.0
  %2185 = vmatpush2.xpose.msra.mxu0 0.0
  %2186 = vmatprep.subr.mxu0 0.0
  %2187 = vmatpush2.xpose.msra.mxu0 0.0
  %2188 = vmatprep.subr.mxu0 0.0
  %2189 = vmatpush2.xpose.msra.mxu0 0.0
  %2190 = vmatprep.subr.mxu0 0.0
  %2191 = vmatpush2.xpose.msra.mxu0 0.0
  %2192 = vmatprep.mubr.f32.mxu0 0.0
  %2193 = vmatmul.mubr.f32.gmra.mxu0 %v2124
  %v2194 = vpop.f32.mrf.mxu0
  %v2195 = vadd.f32 %v206, %v2194
  %v2196 = vpop.f32.mrf.mxu0
  %2197 = vdwg.mxu0
  %v2198 = vsel %vm304, %v2195, -inf
  %2199 = vmax.xlane.f32.xlu0 %v2198
  %v2200 = vpop.xlane.xlu0 %2199
  %v2201 = vsub.f32 %v2195, %v2200
  %v2202 = vmul.f32 %v2201, 1.442695
  %v2203 = vpow.pop %v2202
  %v2204 = vsel %vm304, %v2203, 0.0
  %2205 = vadd.xlane.f32.xlu0 %v2204
  %v2206 = vpop.xlane.xlu0 %2205
  %v2207 = vrcp.pop %v2206
  %v2208 = vmul.f32 %v2203, %v2207
  %2209 = vrot.lane.b32.xlu0 %v2113, 64
  %v2210 = vpop.permute.xlu0 %2209
  %v2213 = vsel %vm304, %v2208, 0
  %2215 = vmatprep.subr.mxu0 0.0
  %2216 = vmatpush1.msra.mxu0 0.0
  %2217 = vmatprep.subr.mxu0 0.0
  %2218 = vmatpush1.msra.mxu0 0.0
  %2219 = vmatprep.subr.mxu0 0.0
  %2220 = vmatpush1.msra.mxu0 0.0
  %2221 = vmatprep.subr.mxu0 0.0
  %2222 = vmatpush1.msra.mxu0 0.0
  %2223 = vmatprep.subr.mxu0 0.0
  %2224 = vmatpush1.msra.mxu0 0.0
  %2225 = vmatprep.subr.mxu0 0.0
  %2226 = vmatpush1.msra.mxu0 0.0
  %2227 = vmatprep.subr.mxu0 0.0
  %2228 = vmatpush1.msra.mxu0 0.0
  %2229 = vmatprep.subr.mxu0 0.0
  %2230 = vmatpush1.msra.mxu0 0.0
  %2231 = vmatprep.subr.mxu0 0.0
  %2232 = vmatpush1.msra.mxu0 0.0
  %2233 = vmatprep.subr.mxu0 0.0
  %2234 = vmatpush1.msra.mxu0 0.0
  %2235 = vmatprep.subr.mxu0 0.0
  %2236 = vmatpush1.msra.mxu0 0.0
  %2237 = vmatprep.subr.mxu0 0.0
  %2238 = vmatpush1.msra.mxu0 0.0
  %2239 = vmatprep.subr.mxu0 0.0
  %2240 = vmatpush1.msra.mxu0 0.0
  %2241 = vmatprep.subr.mxu0 0.0
  %2242 = vmatpush1.msra.mxu0 0.0
  %2243 = vmatprep.subr.mxu0 0.0
  %2244 = vmatpush1.msra.mxu0 0.0
  %2245 = vmatprep.subr.mxu0 0.0
  %2246 = vmatpush1.msra.mxu0 %v2210
  %2247 = vmatprep.subr.mxu0 0.0
  %2248 = vmatpush2.msra.mxu0 0.0
  %2249 = vmatprep.subr.mxu0 0.0
  %2250 = vmatpush2.msra.mxu0 0.0
  %2251 = vmatprep.subr.mxu0 0.0
  %2252 = vmatpush2.msra.mxu0 0.0
  %2253 = vmatprep.subr.mxu0 0.0
  %2254 = vmatpush2.msra.mxu0 0.0
  %2255 = vmatprep.subr.mxu0 0.0
  %2256 = vmatpush2.msra.mxu0 0.0
  %2257 = vmatprep.subr.mxu0 0.0
  %2258 = vmatpush2.msra.mxu0 0.0
  %2259 = vmatprep.subr.mxu0 0.0
  %2260 = vmatpush2.msra.mxu0 0.0
  %2261 = vmatprep.subr.mxu0 0.0
  %2262 = vmatpush2.msra.mxu0 0.0
  %2263 = vmatprep.subr.mxu0 0.0
  %2264 = vmatpush2.msra.mxu0 0.0
  %2265 = vmatprep.subr.mxu0 0.0
  %2266 = vmatpush2.msra.mxu0 0.0
  %2267 = vmatprep.subr.mxu0 0.0
  %2268 = vmatpush2.msra.mxu0 0.0
  %2269 = vmatprep.subr.mxu0 0.0
  %2270 = vmatpush2.msra.mxu0 0.0
  %2271 = vmatprep.subr.mxu0 0.0
  %2272 = vmatpush2.msra.mxu0 0.0
  %2273 = vmatprep.subr.mxu0 0.0
  %2274 = vmatpush2.msra.mxu0 0.0
  %2275 = vmatprep.subr.mxu0 0.0
  %2276 = vmatpush2.msra.mxu0 0.0
  %2277 = vmatprep.subr.mxu0 0.0
  %2278 = vmatpush2.msra.mxu0 0.0
  %2279 = vmatprep.mubr.f32.mxu0 0.0
  %2280 = vmatmul.mubr.f32.gmra.mxu0 %v2213
  %v2281 = vpop.f32.mrf.mxu0
  %v2282 = vadd.f32 0.0, %v2281
  %v2283 = vpop.f32.mrf.mxu0
  %2284 = vdwg.mxu0
  %2286 = vrot.lane.b32.xlu0 %v2118, 96
  %v2287 = vpop.permute.xlu0 %2286
  %v2288 = vsel %vm304, %v2118, 0
  %v2290 = vsel %vm304, %v2287, 0
  %2292 = vmatprep.subr.mxu0 0.0
  %2293 = vmatpush1.xpose.msra.mxu0 0.0
  %2294 = vmatprep.subr.mxu0 0.0
  %2295 = vmatpush1.xpose.msra.mxu0 0.0
  %2296 = vmatprep.subr.mxu0 0.0
  %2297 = vmatpush1.xpose.msra.mxu0 0.0
  %2298 = vmatprep.subr.mxu0 0.0
  %2299 = vmatpush1.xpose.msra.mxu0 0.0
  %2300 = vmatprep.subr.mxu0 0.0
  %2301 = vmatpush1.xpose.msra.mxu0 0.0
  %2302 = vmatprep.subr.mxu0 0.0
  %2303 = vmatpush1.xpose.msra.mxu0 0.0
  %2304 = vmatprep.subr.mxu0 0.0
  %2305 = vmatpush1.xpose.msra.mxu0 0.0
  %2306 = vmatprep.subr.mxu0 0.0
  %2307 = vmatpush1.xpose.msra.mxu0 0.0
  %2308 = vmatprep.subr.mxu0 0.0
  %2309 = vmatpush1.xpose.msra.mxu0 0.0
  %2310 = vmatprep.subr.mxu0 0.0
  %2311 = vmatpush1.xpose.msra.mxu0 0.0
  %2312 = vmatprep.subr.mxu0 0.0
  %2313 = vmatpush1.xpose.msra.mxu0 0.0
  %2314 = vmatprep.subr.mxu0 0.0
  %2315 = vmatpush1.xpose.msra.mxu0 0.0
  %2316 = vmatprep.subr.mxu0 0.0
  %2317 = vmatpush1.xpose.msra.mxu0 0.0
  %2318 = vmatprep.subr.mxu0 0.0
  %2319 = vmatpush1.xpose.msra.mxu0 0.0
  %2320 = vmatprep.subr.mxu0 0.0
  %2321 = vmatpush1.xpose.msra.mxu0 0.0
  %2322 = vmatprep.subr.mxu0 0.0
  %2323 = vmatpush1.xpose.msra.mxu0 %v2290
  %2324 = vmatprep.subr.mxu0 0.0
  %2325 = vmatpush2.xpose.msra.mxu0 0.0
  %2326 = vmatprep.subr.mxu0 0.0
  %2327 = vmatpush2.xpose.msra.mxu0 0.0
  %2328 = vmatprep.subr.mxu0 0.0
  %2329 = vmatpush2.xpose.msra.mxu0 0.0
  %2330 = vmatprep.subr.mxu0 0.0
  %2331 = vmatpush2.xpose.msra.mxu0 0.0
  %2332 = vmatprep.subr.mxu0 0.0
  %2333 = vmatpush2.xpose.msra.mxu0 0.0
  %2334 = vmatprep.subr.mxu0 0.0
  %2335 = vmatpush2.xpose.msra.mxu0 0.0
  %2336 = vmatprep.subr.mxu0 0.0
  %2337 = vmatpush2.xpose.msra.mxu0 0.0
  %2338 = vmatprep.subr.mxu0 0.0
  %2339 = vmatpush2.xpose.msra.mxu0 0.0
  %2340 = vmatprep.subr.mxu0 0.0
  %2341 = vmatpush2.xpose.msra.mxu0 0.0
  %2342 = vmatprep.subr.mxu0 0.0
  %2343 = vmatpush2.xpose.msra.mxu0 0.0
  %2344 = vmatprep.subr.mxu0 0.0
  %2345 = vmatpush2.xpose.msra.mxu0 0.0
  %2346 = vmatprep.subr.mxu0 0.0
  %2347 = vmatpush2.xpose.msra.mxu0 0.0
  %2348 = vmatprep.subr.mxu0 0.0
  %2349 = vmatpush2.xpose.msra.mxu0 0.0
  %2350 = vmatprep.subr.mxu0 0.0
  %2351 = vmatpush2.xpose.msra.mxu0 0.0
  %2352 = vmatprep.subr.mxu0 0.0
  %2353 = vmatpush2.xpose.msra.mxu0 0.0
  %2354 = vmatprep.subr.mxu0 0.0
  %2355 = vmatpush2.xpose.msra.mxu0 0.0
  %2356 = vmatprep.mubr.f32.mxu0 0.0
  %2357 = vmatmul.mubr.f32.gmra.mxu0 %v2288
  %v2358 = vpop.f32.mrf.mxu0
  %v2359 = vadd.f32 %v210, %v2358
  %v2360 = vpop.f32.mrf.mxu0
  %2361 = vdwg.mxu0
  %v2362 = vsel %vm304, %v2359, -inf
  %2363 = vmax.xlane.f32.xlu0 %v2362
  %v2364 = vpop.xlane.xlu0 %2363
  %v2365 = vsub.f32 %v2359, %v2364
  %v2366 = vmul.f32 %v2365, 1.442695
  %v2367 = vpow.pop %v2366
  %v2368 = vsel %vm304, %v2367, 0.0
  %2369 = vadd.xlane.f32.xlu0 %v2368
  %v2370 = vpop.xlane.xlu0 %2369
  %v2371 = vrcp.pop %v2370
  %v2372 = vmul.f32 %v2367, %v2371
  %2373 = vrot.lane.b32.xlu0 %v2118, 64
  %v2374 = vpop.permute.xlu0 %2373
  %v2377 = vsel %vm304, %v2372, 0
  %2379 = vmatprep.subr.mxu0 0.0
  %2380 = vmatpush1.msra.mxu0 0.0
  %2381 = vmatprep.subr.mxu0 0.0
  %2382 = vmatpush1.msra.mxu0 0.0
  %2383 = vmatprep.subr.mxu0 0.0
  %2384 = vmatpush1.msra.mxu0 0.0
  %2385 = vmatprep.subr.mxu0 0.0
  %2386 = vmatpush1.msra.mxu0 0.0
  %2387 = vmatprep.subr.mxu0 0.0
  %2388 = vmatpush1.msra.mxu0 0.0
  %2389 = vmatprep.subr.mxu0 0.0
  %2390 = vmatpush1.msra.mxu0 0.0
  %2391 = vmatprep.subr.mxu0 0.0
  %2392 = vmatpush1.msra.mxu0 0.0
  %2393 = vmatprep.subr.mxu0 0.0
  %2394 = vmatpush1.msra.mxu0 0.0
  %2395 = vmatprep.subr.mxu0 0.0
  %2396 = vmatpush1.msra.mxu0 0.0
  %2397 = vmatprep.subr.mxu0 0.0
  %2398 = vmatpush1.msra.mxu0 0.0
  %2399 = vmatprep.subr.mxu0 0.0
  %2400 = vmatpush1.msra.mxu0 0.0
  %2401 = vmatprep.subr.mxu0 0.0
  %2402 = vmatpush1.msra.mxu0 0.0
  %2403 = vmatprep.subr.mxu0 0.0
  %2404 = vmatpush1.msra.mxu0 0.0
  %2405 = vmatprep.subr.mxu0 0.0
  %2406 = vmatpush1.msra.mxu0 0.0
  %2407 = vmatprep.subr.mxu0 0.0
  %2408 = vmatpush1.msra.mxu0 0.0
  %2409 = vmatprep.subr.mxu0 0.0
  %2410 = vmatpush1.msra.mxu0 %v2374
  %2411 = vmatprep.subr.mxu0 0.0
  %2412 = vmatpush2.msra.mxu0 0.0
  %2413 = vmatprep.subr.mxu0 0.0
  %2414 = vmatpush2.msra.mxu0 0.0
  %2415 = vmatprep.subr.mxu0 0.0
  %2416 = vmatpush2.msra.mxu0 0.0
  %2417 = vmatprep.subr.mxu0 0.0
  %2418 = vmatpush2.msra.mxu0 0.0
  %2419 = vmatprep.subr.mxu0 0.0
  %2420 = vmatpush2.msra.mxu0 0.0
  %2421 = vmatprep.subr.mxu0 0.0
  %2422 = vmatpush2.msra.mxu0 0.0
  %2423 = vmatprep.subr.mxu0 0.0
  %2424 = vmatpush2.msra.mxu0 0.0
  %2425 = vmatprep.subr.mxu0 0.0
  %2426 = vmatpush2.msra.mxu0 0.0
  %2427 = vmatprep.subr.mxu0 0.0
  %2428 = vmatpush2.msra.mxu0 0.0
  %2429 = vmatprep.subr.mxu0 0.0
  %2430 = vmatpush2.msra.mxu0 0.0
  %2431 = vmatprep.subr.mxu0 0.0
  %2432 = vmatpush2.msra.mxu0 0.0
  %2433 = vmatprep.subr.mxu0 0.0
  %2434 = vmatpush2.msra.mxu0 0.0
  %2435 = vmatprep.subr.mxu0 0.0
  %2436 = vmatpush2.msra.mxu0 0.0
  %2437 = vmatprep.subr.mxu0 0.0
  %2438 = vmatpush2.msra.mxu0 0.0
  %2439 = vmatprep.subr.mxu0 0.0
  %2440 = vmatpush2.msra.mxu0 0.0
  %2441 = vmatprep.subr.mxu0 0.0
  %2442 = vmatpush2.msra.mxu0 0.0
  %2443 = vmatprep.mubr.f32.mxu0 0.0
  %2444 = vmatmul.mubr.f32.gmra.mxu0 %v2377
  %v2445 = vpop.f32.mrf.mxu0
  %v2446 = vadd.f32 0.0, %v2445
  %v2447 = vpop.f32.mrf.mxu0
  %2448 = vdwg.mxu0
  %2449 = vrot.lane.b32.xlu0 %v2113, 120
  %v2450 = vpop.permute.xlu0 %2449
  %2451 = vrot.lane.b32.xlu0 %v2113, 88
  %v2452 = vpop.permute.xlu0 %2451
  %v2453 = vsel %vm304, %v2450, 0
  %v2455 = vsel %vm304, %v2452, 0
  %2457 = vmatprep.subr.mxu0 0.0
  %2458 = vmatpush1.xpose.msra.mxu0 0.0
  %2459 = vmatprep.subr.mxu0 0.0
  %2460 = vmatpush1.xpose.msra.mxu0 0.0
  %2461 = vmatprep.subr.mxu0 0.0
  %2462 = vmatpush1.xpose.msra.mxu0 0.0
  %2463 = vmatprep.subr.mxu0 0.0
  %2464 = vmatpush1.xpose.msra.mxu0 0.0
  %2465 = vmatprep.subr.mxu0 0.0
  %2466 = vmatpush1.xpose.msra.mxu0 0.0
  %2467 = vmatprep.subr.mxu0 0.0
  %2468 = vmatpush1.xpose.msra.mxu0 0.0
  %2469 = vmatprep.subr.mxu0 0.0
  %2470 = vmatpush1.xpose.msra.mxu0 0.0
  %2471 = vmatprep.subr.mxu0 0.0
  %2472 = vmatpush1.xpose.msra.mxu0 0.0
  %2473 = vmatprep.subr.mxu0 0.0
  %2474 = vmatpush1.xpose.msra.mxu0 0.0
  %2475 = vmatprep.subr.mxu0 0.0
  %2476 = vmatpush1.xpose.msra.mxu0 0.0
  %2477 = vmatprep.subr.mxu0 0.0
  %2478 = vmatpush1.xpose.msra.mxu0 0.0
  %2479 = vmatprep.subr.mxu0 0.0
  %2480 = vmatpush1.xpose.msra.mxu0 0.0
  %2481 = vmatprep.subr.mxu0 0.0
  %2482 = vmatpush1.xpose.msra.mxu0 0.0
  %2483 = vmatprep.subr.mxu0 0.0
  %2484 = vmatpush1.xpose.msra.mxu0 0.0
  %2485 = vmatprep.subr.mxu0 0.0
  %2486 = vmatpush1.xpose.msra.mxu0 0.0
  %2487 = vmatprep.subr.mxu0 0.0
  %2488 = vmatpush1.xpose.msra.mxu0 %v2455
  %2489 = vmatprep.subr.mxu0 0.0
  %2490 = vmatpush2.xpose.msra.mxu0 0.0
  %2491 = vmatprep.subr.mxu0 0.0
  %2492 = vmatpush2.xpose.msra.mxu0 0.0
  %2493 = vmatprep.subr.mxu0 0.0
  %2494 = vmatpush2.xpose.msra.mxu0 0.0
  %2495 = vmatprep.subr.mxu0 0.0
  %2496 = vmatpush2.xpose.msra.mxu0 0.0
  %2497 = vmatprep.subr.mxu0 0.0
  %2498 = vmatpush2.xpose.msra.mxu0 0.0
  %2499 = vmatprep.subr.mxu0 0.0
  %2500 = vmatpush2.xpose.msra.mxu0 0.0
  %2501 = vmatprep.subr.mxu0 0.0
  %2502 = vmatpush2.xpose.msra.mxu0 0.0
  %2503 = vmatprep.subr.mxu0 0.0
  %2504 = vmatpush2.xpose.msra.mxu0 0.0
  %2505 = vmatprep.subr.mxu0 0.0
  %2506 = vmatpush2.xpose.msra.mxu0 0.0
  %2507 = vmatprep.subr.mxu0 0.0
  %2508 = vmatpush2.xpose.msra.mxu0 0.0
  %2509 = vmatprep.subr.mxu0 0.0
  %2510 = vmatpush2.xpose.msra.mxu0 0.0
  %2511 = vmatprep.subr.mxu0 0.0
  %2512 = vmatpush2.xpose.msra.mxu0 0.0
  %2513 = vmatprep.subr.mxu0 0.0
  %2514 = vmatpush2.xpose.msra.mxu0 0.0
  %2515 = vmatprep.subr.mxu0 0.0
  %2516 = vmatpush2.xpose.msra.mxu0 0.0
  %2517 = vmatprep.subr.mxu0 0.0
  %2518 = vmatpush2.xpose.msra.mxu0 0.0
  %2519 = vmatprep.subr.mxu0 0.0
  %2520 = vmatpush2.xpose.msra.mxu0 0.0
  %2521 = vmatprep.mubr.f32.mxu0 0.0
  %2522 = vmatmul.mubr.f32.gmra.mxu0 %v2453
  %v2523 = vpop.f32.mrf.mxu0
  %v2524 = vadd.f32 %v206, %v2523
  %v2525 = vpop.f32.mrf.mxu0
  %2526 = vdwg.mxu0
  %v2527 = vsel %vm304, %v2524, -inf
  %2528 = vmax.xlane.f32.xlu0 %v2527
  %v2529 = vpop.xlane.xlu0 %2528
  %v2530 = vsub.f32 %v2524, %v2529
  %v2531 = vmul.f32 %v2530, 1.442695
  %v2532 = vpow.pop %v2531
  %v2533 = vsel %vm304, %v2532, 0.0
  %2534 = vadd.xlane.f32.xlu0 %v2533
  %v2535 = vpop.xlane.xlu0 %2534
  %v2536 = vrcp.pop %v2535
  %v2537 = vmul.f32 %v2532, %v2536
  %2538 = vrot.lane.b32.xlu0 %v2113, 56
  %v2539 = vpop.permute.xlu0 %2538
  %v2542 = vsel %vm304, %v2537, 0
  %2544 = vmatprep.subr.mxu0 0.0
  %2545 = vmatpush1.msra.mxu0 0.0
  %2546 = vmatprep.subr.mxu0 0.0
  %2547 = vmatpush1.msra.mxu0 0.0
  %2548 = vmatprep.subr.mxu0 0.0
  %2549 = vmatpush1.msra.mxu0 0.0
  %2550 = vmatprep.subr.mxu0 0.0
  %2551 = vmatpush1.msra.mxu0 0.0
  %2552 = vmatprep.subr.mxu0 0.0
  %2553 = vmatpush1.msra.mxu0 0.0
  %2554 = vmatprep.subr.mxu0 0.0
  %2555 = vmatpush1.msra.mxu0 0.0
  %2556 = vmatprep.subr.mxu0 0.0
  %2557 = vmatpush1.msra.mxu0 0.0
  %2558 = vmatprep.subr.mxu0 0.0
  %2559 = vmatpush1.msra.mxu0 0.0
  %2560 = vmatprep.subr.mxu0 0.0
  %2561 = vmatpush1.msra.mxu0 0.0
  %2562 = vmatprep.subr.mxu0 0.0
  %2563 = vmatpush1.msra.mxu0 0.0
  %2564 = vmatprep.subr.mxu0 0.0
  %2565 = vmatpush1.msra.mxu0 0.0
  %2566 = vmatprep.subr.mxu0 0.0
  %2567 = vmatpush1.msra.mxu0 0.0
  %2568 = vmatprep.subr.mxu0 0.0
  %2569 = vmatpush1.msra.mxu0 0.0
  %2570 = vmatprep.subr.mxu0 0.0
  %2571 = vmatpush1.msra.mxu0 0.0
  %2572 = vmatprep.subr.mxu0 0.0
  %2573 = vmatpush1.msra.mxu0 0.0
  %2574 = vmatprep.subr.mxu0 0.0
  %2575 = vmatpush1.msra.mxu0 %v2539
  %2576 = vmatprep.subr.mxu0 0.0
  %2577 = vmatpush2.msra.mxu0 0.0
  %2578 = vmatprep.subr.mxu0 0.0
  %2579 = vmatpush2.msra.mxu0 0.0
  %2580 = vmatprep.subr.mxu0 0.0
  %2581 = vmatpush2.msra.mxu0 0.0
  %2582 = vmatprep.subr.mxu0 0.0
  %2583 = vmatpush2.msra.mxu0 0.0
  %2584 = vmatprep.subr.mxu0 0.0
  %2585 = vmatpush2.msra.mxu0 0.0
  %2586 = vmatprep.subr.mxu0 0.0
  %2587 = vmatpush2.msra.mxu0 0.0
  %2588 = vmatprep.subr.mxu0 0.0
  %2589 = vmatpush2.msra.mxu0 0.0
  %2590 = vmatprep.subr.mxu0 0.0
  %2591 = vmatpush2.msra.mxu0 0.0
  %2592 = vmatprep.subr.mxu0 0.0
  %2593 = vmatpush2.msra.mxu0 0.0
  %2594 = vmatprep.subr.mxu0 0.0
  %2595 = vmatpush2.msra.mxu0 0.0
  %2596 = vmatprep.subr.mxu0 0.0
  %2597 = vmatpush2.msra.mxu0 0.0
  %2598 = vmatprep.subr.mxu0 0.0
  %2599 = vmatpush2.msra.mxu0 0.0
  %2600 = vmatprep.subr.mxu0 0.0
  %2601 = vmatpush2.msra.mxu0 0.0
  %2602 = vmatprep.subr.mxu0 0.0
  %2603 = vmatpush2.msra.mxu0 0.0
  %2604 = vmatprep.subr.mxu0 0.0
  %2605 = vmatpush2.msra.mxu0 0.0
  %2606 = vmatprep.subr.mxu0 0.0
  %2607 = vmatpush2.msra.mxu0 0.0
  %2608 = vmatprep.mubr.f32.mxu0 0.0
  %2609 = vmatmul.mubr.f32.gmra.mxu0 %v2542
  %v2610 = vpop.f32.mrf.mxu0
  %v2611 = vadd.f32 0.0, %v2610
  %v2612 = vpop.f32.mrf.mxu0
  %2613 = vdwg.mxu0
  %2614 = vrot.lane.b32.xlu0 %v2118, 120
  %v2615 = vpop.permute.xlu0 %2614
  %2616 = vrot.lane.b32.xlu0 %v2118, 88
  %v2617 = vpop.permute.xlu0 %2616
  %v2618 = vsel %vm304, %v2615, 0
  %v2620 = vsel %vm304, %v2617, 0
  %2622 = vmatprep.subr.mxu0 0.0
  %2623 = vmatpush1.xpose.msra.mxu0 0.0
  %2624 = vmatprep.subr.mxu0 0.0
  %2625 = vmatpush1.xpose.msra.mxu0 0.0
  %2626 = vmatprep.subr.mxu0 0.0
  %2627 = vmatpush1.xpose.msra.mxu0 0.0
  %2628 = vmatprep.subr.mxu0 0.0
  %2629 = vmatpush1.xpose.msra.mxu0 0.0
  %2630 = vmatprep.subr.mxu0 0.0
  %2631 = vmatpush1.xpose.msra.mxu0 0.0
  %2632 = vmatprep.subr.mxu0 0.0
  %2633 = vmatpush1.xpose.msra.mxu0 0.0
  %2634 = vmatprep.subr.mxu0 0.0
  %2635 = vmatpush1.xpose.msra.mxu0 0.0
  %2636 = vmatprep.subr.mxu0 0.0
  %2637 = vmatpush1.xpose.msra.mxu0 0.0
  %2638 = vmatprep.subr.mxu0 0.0
  %2639 = vmatpush1.xpose.msra.mxu0 0.0
  %2640 = vmatprep.subr.mxu0 0.0
  %2641 = vmatpush1.xpose.msra.mxu0 0.0
  %2642 = vmatprep.subr.mxu0 0.0
  %2643 = vmatpush1.xpose.msra.mxu0 0.0
  %2644 = vmatprep.subr.mxu0 0.0
  %2645 = vmatpush1.xpose.msra.mxu0 0.0
  %2646 = vmatprep.subr.mxu0 0.0
  %2647 = vmatpush1.xpose.msra.mxu0 0.0
  %2648 = vmatprep.subr.mxu0 0.0
  %2649 = vmatpush1.xpose.msra.mxu0 0.0
  %2650 = vmatprep.subr.mxu0 0.0
  %2651 = vmatpush1.xpose.msra.mxu0 0.0
  %2652 = vmatprep.subr.mxu0 0.0
  %2653 = vmatpush1.xpose.msra.mxu0 %v2620
  %2654 = vmatprep.subr.mxu0 0.0
  %2655 = vmatpush2.xpose.msra.mxu0 0.0
  %2656 = vmatprep.subr.mxu0 0.0
  %2657 = vmatpush2.xpose.msra.mxu0 0.0
  %2658 = vmatprep.subr.mxu0 0.0
  %2659 = vmatpush2.xpose.msra.mxu0 0.0
  %2660 = vmatprep.subr.mxu0 0.0
  %2661 = vmatpush2.xpose.msra.mxu0 0.0
  %2662 = vmatprep.subr.mxu0 0.0
  %2663 = vmatpush2.xpose.msra.mxu0 0.0
  %2664 = vmatprep.subr.mxu0 0.0
  %2665 = vmatpush2.xpose.msra.mxu0 0.0
  %2666 = vmatprep.subr.mxu0 0.0
  %2667 = vmatpush2.xpose.msra.mxu0 0.0
  %2668 = vmatprep.subr.mxu0 0.0
  %2669 = vmatpush2.xpose.msra.mxu0 0.0
  %2670 = vmatprep.subr.mxu0 0.0
  %2671 = vmatpush2.xpose.msra.mxu0 0.0
  %2672 = vmatprep.subr.mxu0 0.0
  %2673 = vmatpush2.xpose.msra.mxu0 0.0
  %2674 = vmatprep.subr.mxu0 0.0
  %2675 = vmatpush2.xpose.msra.mxu0 0.0
  %2676 = vmatprep.subr.mxu0 0.0
  %2677 = vmatpush2.xpose.msra.mxu0 0.0
  %2678 = vmatprep.subr.mxu0 0.0
  %2679 = vmatpush2.xpose.msra.mxu0 0.0
  %2680 = vmatprep.subr.mxu0 0.0
  %2681 = vmatpush2.xpose.msra.mxu0 0.0
  %2682 = vmatprep.subr.mxu0 0.0
  %2683 = vmatpush2.xpose.msra.mxu0 0.0
  %2684 = vmatprep.subr.mxu0 0.0
  %2685 = vmatpush2.xpose.msra.mxu0 0.0
  %2686 = vmatprep.mubr.f32.mxu0 0.0
  %2687 = vmatmul.mubr.f32.gmra.mxu0 %v2618
  %v2688 = vpop.f32.mrf.mxu0
  %v2689 = vadd.f32 %v210, %v2688
  %v2690 = vpop.f32.mrf.mxu0
  %2691 = vdwg.mxu0
  %v2692 = vsel %vm304, %v2689, -inf
  %2693 = vmax.xlane.f32.xlu0 %v2692
  %v2694 = vpop.xlane.xlu0 %2693
  %v2695 = vsub.f32 %v2689, %v2694
  %v2696 = vmul.f32 %v2695, 1.442695
  %v2697 = vpow.pop %v2696
  %v2698 = vsel %vm304, %v2697, 0.0
  %2699 = vadd.xlane.f32.xlu0 %v2698
  %v2700 = vpop.xlane.xlu0 %2699
  %v2701 = vrcp.pop %v2700
  %v2702 = vmul.f32 %v2697, %v2701
  %2703 = vrot.lane.b32.xlu0 %v2118, 56
  %v2704 = vpop.permute.xlu0 %2703
  %v2707 = vsel %vm304, %v2702, 0
  %2709 = vmatprep.subr.mxu0 0.0
  %2710 = vmatpush1.msra.mxu0 0.0
  %2711 = vmatprep.subr.mxu0 0.0
  %2712 = vmatpush1.msra.mxu0 0.0
  %2713 = vmatprep.subr.mxu0 0.0
  %2714 = vmatpush1.msra.mxu0 0.0
  %2715 = vmatprep.subr.mxu0 0.0
  %2716 = vmatpush1.msra.mxu0 0.0
  %2717 = vmatprep.subr.mxu0 0.0
  %2718 = vmatpush1.msra.mxu0 0.0
  %2719 = vmatprep.subr.mxu0 0.0
  %2720 = vmatpush1.msra.mxu0 0.0
  %2721 = vmatprep.subr.mxu0 0.0
  %2722 = vmatpush1.msra.mxu0 0.0
  %2723 = vmatprep.subr.mxu0 0.0
  %2724 = vmatpush1.msra.mxu0 0.0
  %2725 = vmatprep.subr.mxu0 0.0
  %2726 = vmatpush1.msra.mxu0 0.0
  %2727 = vmatprep.subr.mxu0 0.0
  %2728 = vmatpush1.msra.mxu0 0.0
  %2729 = vmatprep.subr.mxu0 0.0
  %2730 = vmatpush1.msra.mxu0 0.0
  %2731 = vmatprep.subr.mxu0 0.0
  %2732 = vmatpush1.msra.mxu0 0.0
  %2733 = vmatprep.subr.mxu0 0.0
  %2734 = vmatpush1.msra.mxu0 0.0
  %2735 = vmatprep.subr.mxu0 0.0
  %2736 = vmatpush1.msra.mxu0 0.0
  %2737 = vmatprep.subr.mxu0 0.0
  %2738 = vmatpush1.msra.mxu0 0.0
  %2739 = vmatprep.subr.mxu0 0.0
  %2740 = vmatpush1.msra.mxu0 %v2704
  %2741 = vmatprep.subr.mxu0 0.0
  %2742 = vmatpush2.msra.mxu0 0.0
  %2743 = vmatprep.subr.mxu0 0.0
  %2744 = vmatpush2.msra.mxu0 0.0
  %2745 = vmatprep.subr.mxu0 0.0
  %2746 = vmatpush2.msra.mxu0 0.0
  %2747 = vmatprep.subr.mxu0 0.0
  %2748 = vmatpush2.msra.mxu0 0.0
  %2749 = vmatprep.subr.mxu0 0.0
  %2750 = vmatpush2.msra.mxu0 0.0
  %2751 = vmatprep.subr.mxu0 0.0
  %2752 = vmatpush2.msra.mxu0 0.0
  %2753 = vmatprep.subr.mxu0 0.0
  %2754 = vmatpush2.msra.mxu0 0.0
  %2755 = vmatprep.subr.mxu0 0.0
  %2756 = vmatpush2.msra.mxu0 0.0
  %2757 = vmatprep.subr.mxu0 0.0
  %2758 = vmatpush2.msra.mxu0 0.0
  %2759 = vmatprep.subr.mxu0 0.0
  %2760 = vmatpush2.msra.mxu0 0.0
  %2761 = vmatprep.subr.mxu0 0.0
  %2762 = vmatpush2.msra.mxu0 0.0
  %2763 = vmatprep.subr.mxu0 0.0
  %2764 = vmatpush2.msra.mxu0 0.0
  %2765 = vmatprep.subr.mxu0 0.0
  %2766 = vmatpush2.msra.mxu0 0.0
  %2767 = vmatprep.subr.mxu0 0.0
  %2768 = vmatpush2.msra.mxu0 0.0
  %2769 = vmatprep.subr.mxu0 0.0
  %2770 = vmatpush2.msra.mxu0 0.0
  %2771 = vmatprep.subr.mxu0 0.0
  %2772 = vmatpush2.msra.mxu0 0.0
  %2773 = vmatprep.mubr.f32.mxu0 0.0
  %2774 = vmatmul.mubr.f32.gmra.mxu0 %v2707
  %v2775 = vpop.f32.mrf.mxu0
  %v2776 = vadd.f32 0.0, %v2775
  %v2777 = vpop.f32.mrf.mxu0
  %2778 = vdwg.mxu0
  %2779 = vrot.lane.b32.xlu0 %v2113, 112
  %v2780 = vpop.permute.xlu0 %2779
  %2781 = vrot.lane.b32.xlu0 %v2113, 80
  %v2782 = vpop.permute.xlu0 %2781
  %v2783 = vsel %vm304, %v2780, 0
  %v2785 = vsel %vm304, %v2782, 0
  %2787 = vmatprep.subr.mxu0 0.0
  %2788 = vmatpush1.xpose.msra.mxu0 0.0
  %2789 = vmatprep.subr.mxu0 0.0
  %2790 = vmatpush1.xpose.msra.mxu0 0.0
  %2791 = vmatprep.subr.mxu0 0.0
  %2792 = vmatpush1.xpose.msra.mxu0 0.0
  %2793 = vmatprep.subr.mxu0 0.0
  %2794 = vmatpush1.xpose.msra.mxu0 0.0
  %2795 = vmatprep.subr.mxu0 0.0
  %2796 = vmatpush1.xpose.msra.mxu0 0.0
  %2797 = vmatprep.subr.mxu0 0.0
  %2798 = vmatpush1.xpose.msra.mxu0 0.0
  %2799 = vmatprep.subr.mxu0 0.0
  %2800 = vmatpush1.xpose.msra.mxu0 0.0
  %2801 = vmatprep.subr.mxu0 0.0
  %2802 = vmatpush1.xpose.msra.mxu0 0.0
  %2803 = vmatprep.subr.mxu0 0.0
  %2804 = vmatpush1.xpose.msra.mxu0 0.0
  %2805 = vmatprep.subr.mxu0 0.0
  %2806 = vmatpush1.xpose.msra.mxu0 0.0
  %2807 = vmatprep.subr.mxu0 0.0
  %2808 = vmatpush1.xpose.msra.mxu0 0.0
  %2809 = vmatprep.subr.mxu0 0.0
  %2810 = vmatpush1.xpose.msra.mxu0 0.0
  %2811 = vmatprep.subr.mxu0 0.0
  %2812 = vmatpush1.xpose.msra.mxu0 0.0
  %2813 = vmatprep.subr.mxu0 0.0
  %2814 = vmatpush1.xpose.msra.mxu0 0.0
  %2815 = vmatprep.subr.mxu0 0.0
  %2816 = vmatpush1.xpose.msra.mxu0 0.0
  %2817 = vmatprep.subr.mxu0 0.0
  %2818 = vmatpush1.xpose.msra.mxu0 %v2785
  %2819 = vmatprep.subr.mxu0 0.0
  %2820 = vmatpush2.xpose.msra.mxu0 0.0
  %2821 = vmatprep.subr.mxu0 0.0
  %2822 = vmatpush2.xpose.msra.mxu0 0.0
  %2823 = vmatprep.subr.mxu0 0.0
  %2824 = vmatpush2.xpose.msra.mxu0 0.0
  %2825 = vmatprep.subr.mxu0 0.0
  %2826 = vmatpush2.xpose.msra.mxu0 0.0
  %2827 = vmatprep.subr.mxu0 0.0
  %2828 = vmatpush2.xpose.msra.mxu0 0.0
  %2829 = vmatprep.subr.mxu0 0.0
  %2830 = vmatpush2.xpose.msra.mxu0 0.0
  %2831 = vmatprep.subr.mxu0 0.0
  %2832 = vmatpush2.xpose.msra.mxu0 0.0
  %2833 = vmatprep.subr.mxu0 0.0
  %2834 = vmatpush2.xpose.msra.mxu0 0.0
  %2835 = vmatprep.subr.mxu0 0.0
  %2836 = vmatpush2.xpose.msra.mxu0 0.0
  %2837 = vmatprep.subr.mxu0 0.0
  %2838 = vmatpush2.xpose.msra.mxu0 0.0
  %2839 = vmatprep.subr.mxu0 0.0
  %2840 = vmatpush2.xpose.msra.mxu0 0.0
  %2841 = vmatprep.subr.mxu0 0.0
  %2842 = vmatpush2.xpose.msra.mxu0 0.0
  %2843 = vmatprep.subr.mxu0 0.0
  %2844 = vmatpush2.xpose.msra.mxu0 0.0
  %2845 = vmatprep.subr.mxu0 0.0
  %2846 = vmatpush2.xpose.msra.mxu0 0.0
  %2847 = vmatprep.subr.mxu0 0.0
  %2848 = vmatpush2.xpose.msra.mxu0 0.0
  %2849 = vmatprep.subr.mxu0 0.0
  %2850 = vmatpush2.xpose.msra.mxu0 0.0
  %2851 = vmatprep.mubr.f32.mxu0 0.0
  %2852 = vmatmul.mubr.f32.gmra.mxu0 %v2783
  %v2853 = vpop.f32.mrf.mxu0
  %v2854 = vadd.f32 %v206, %v2853
  %v2855 = vpop.f32.mrf.mxu0
  %2856 = vdwg.mxu0
  %v2857 = vsel %vm304, %v2854, -inf
  %2858 = vmax.xlane.f32.xlu0 %v2857
  %v2859 = vpop.xlane.xlu0 %2858
  %v2860 = vsub.f32 %v2854, %v2859
  %v2861 = vmul.f32 %v2860, 1.442695
  %v2862 = vpow.pop %v2861
  %v2863 = vsel %vm304, %v2862, 0.0
  %2864 = vadd.xlane.f32.xlu0 %v2863
  %v2865 = vpop.xlane.xlu0 %2864
  %v2866 = vrcp.pop %v2865
  %v2867 = vmul.f32 %v2862, %v2866
  %2868 = vrot.lane.b32.xlu0 %v2113, 48
  %v2869 = vpop.permute.xlu0 %2868
  %v2872 = vsel %vm304, %v2867, 0
  %2874 = vmatprep.subr.mxu0 0.0
  %2875 = vmatpush1.msra.mxu0 0.0
  %2876 = vmatprep.subr.mxu0 0.0
  %2877 = vmatpush1.msra.mxu0 0.0
  %2878 = vmatprep.subr.mxu0 0.0
  %2879 = vmatpush1.msra.mxu0 0.0
  %2880 = vmatprep.subr.mxu0 0.0
  %2881 = vmatpush1.msra.mxu0 0.0
  %2882 = vmatprep.subr.mxu0 0.0
  %2883 = vmatpush1.msra.mxu0 0.0
  %2884 = vmatprep.subr.mxu0 0.0
  %2885 = vmatpush1.msra.mxu0 0.0
  %2886 = vmatprep.subr.mxu0 0.0
  %2887 = vmatpush1.msra.mxu0 0.0
  %2888 = vmatprep.subr.mxu0 0.0
  %2889 = vmatpush1.msra.mxu0 0.0
  %2890 = vmatprep.subr.mxu0 0.0
  %2891 = vmatpush1.msra.mxu0 0.0
  %2892 = vmatprep.subr.mxu0 0.0
  %2893 = vmatpush1.msra.mxu0 0.0
  %2894 = vmatprep.subr.mxu0 0.0
  %2895 = vmatpush1.msra.mxu0 0.0
  %2896 = vmatprep.subr.mxu0 0.0
  %2897 = vmatpush1.msra.mxu0 0.0
  %2898 = vmatprep.subr.mxu0 0.0
  %2899 = vmatpush1.msra.mxu0 0.0
  %2900 = vmatprep.subr.mxu0 0.0
  %2901 = vmatpush1.msra.mxu0 0.0
  %2902 = vmatprep.subr.mxu0 0.0
  %2903 = vmatpush1.msra.mxu0 0.0
  %2904 = vmatprep.subr.mxu0 0.0
  %2905 = vmatpush1.msra.mxu0 %v2869
  %2906 = vmatprep.subr.mxu0 0.0
  %2907 = vmatpush2.msra.mxu0 0.0
  %2908 = vmatprep.subr.mxu0 0.0
  %2909 = vmatpush2.msra.mxu0 0.0
  %2910 = vmatprep.subr.mxu0 0.0
  %2911 = vmatpush2.msra.mxu0 0.0
  %2912 = vmatprep.subr.mxu0 0.0
  %2913 = vmatpush2.msra.mxu0 0.0
  %2914 = vmatprep.subr.mxu0 0.0
  %2915 = vmatpush2.msra.mxu0 0.0
  %2916 = vmatprep.subr.mxu0 0.0
  %2917 = vmatpush2.msra.mxu0 0.0
  %2918 = vmatprep.subr.mxu0 0.0
  %2919 = vmatpush2.msra.mxu0 0.0
  %2920 = vmatprep.subr.mxu0 0.0
  %2921 = vmatpush2.msra.mxu0 0.0
  %2922 = vmatprep.subr.mxu0 0.0
  %2923 = vmatpush2.msra.mxu0 0.0
  %2924 = vmatprep.subr.mxu0 0.0
  %2925 = vmatpush2.msra.mxu0 0.0
  %2926 = vmatprep.subr.mxu0 0.0
  %2927 = vmatpush2.msra.mxu0 0.0
  %2928 = vmatprep.subr.mxu0 0.0
  %2929 = vmatpush2.msra.mxu0 0.0
  %2930 = vmatprep.subr.mxu0 0.0
  %2931 = vmatpush2.msra.mxu0 0.0
  %2932 = vmatprep.subr.mxu0 0.0
  %2933 = vmatpush2.msra.mxu0 0.0
  %2934 = vmatprep.subr.mxu0 0.0
  %2935 = vmatpush2.msra.mxu0 0.0
  %2936 = vmatprep.subr.mxu0 0.0
  %2937 = vmatpush2.msra.mxu0 0.0
  %2938 = vmatprep.mubr.f32.mxu0 0.0
  %2939 = vmatmul.mubr.f32.gmra.mxu0 %v2872
  %v2940 = vpop.f32.mrf.mxu0
  %v2941 = vadd.f32 0.0, %v2940
  %v2942 = vpop.f32.mrf.mxu0
  %2943 = vdwg.mxu0
  %2944 = vrot.lane.b32.xlu0 %v2118, 112
  %v2945 = vpop.permute.xlu0 %2944
  %2946 = vrot.lane.b32.xlu0 %v2118, 80
  %v2947 = vpop.permute.xlu0 %2946
  %v2948 = vsel %vm304, %v2945, 0
  %v2950 = vsel %vm304, %v2947, 0
  %2952 = vmatprep.subr.mxu0 0.0
  %2953 = vmatpush1.xpose.msra.mxu0 0.0
  %2954 = vmatprep.subr.mxu0 0.0
  %2955 = vmatpush1.xpose.msra.mxu0 0.0
  %2956 = vmatprep.subr.mxu0 0.0
  %2957 = vmatpush1.xpose.msra.mxu0 0.0
  %2958 = vmatprep.subr.mxu0 0.0
  %2959 = vmatpush1.xpose.msra.mxu0 0.0
  %2960 = vmatprep.subr.mxu0 0.0
  %2961 = vmatpush1.xpose.msra.mxu0 0.0
  %2962 = vmatprep.subr.mxu0 0.0
  %2963 = vmatpush1.xpose.msra.mxu0 0.0
  %2964 = vmatprep.subr.mxu0 0.0
  %2965 = vmatpush1.xpose.msra.mxu0 0.0
  %2966 = vmatprep.subr.mxu0 0.0
  %2967 = vmatpush1.xpose.msra.mxu0 0.0
  %2968 = vmatprep.subr.mxu0 0.0
  %2969 = vmatpush1.xpose.msra.mxu0 0.0
  %2970 = vmatprep.subr.mxu0 0.0
  %2971 = vmatpush1.xpose.msra.mxu0 0.0
  %2972 = vmatprep.subr.mxu0 0.0
  %2973 = vmatpush1.xpose.msra.mxu0 0.0
  %2974 = vmatprep.subr.mxu0 0.0
  %2975 = vmatpush1.xpose.msra.mxu0 0.0
  %2976 = vmatprep.subr.mxu0 0.0
  %2977 = vmatpush1.xpose.msra.mxu0 0.0
  %2978 = vmatprep.subr.mxu0 0.0
  %2979 = vmatpush1.xpose.msra.mxu0 0.0
  %2980 = vmatprep.subr.mxu0 0.0
  %2981 = vmatpush1.xpose.msra.mxu0 0.0
  %2982 = vmatprep.subr.mxu0 0.0
  %2983 = vmatpush1.xpose.msra.mxu0 %v2950
  %2984 = vmatprep.subr.mxu0 0.0
  %2985 = vmatpush2.xpose.msra.mxu0 0.0
  %2986 = vmatprep.subr.mxu0 0.0
  %2987 = vmatpush2.xpose.msra.mxu0 0.0
  %2988 = vmatprep.subr.mxu0 0.0
  %2989 = vmatpush2.xpose.msra.mxu0 0.0
  %2990 = vmatprep.subr.mxu0 0.0
  %2991 = vmatpush2.xpose.msra.mxu0 0.0
  %2992 = vmatprep.subr.mxu0 0.0
  %2993 = vmatpush2.xpose.msra.mxu0 0.0
  %2994 = vmatprep.subr.mxu0 0.0
  %2995 = vmatpush2.xpose.msra.mxu0 0.0
  %2996 = vmatprep.subr.mxu0 0.0
  %2997 = vmatpush2.xpose.msra.mxu0 0.0
  %2998 = vmatprep.subr.mxu0 0.0
  %2999 = vmatpush2.xpose.msra.mxu0 0.0
  %3000 = vmatprep.subr.mxu0 0.0
  %3001 = vmatpush2.xpose.msra.mxu0 0.0
  %3002 = vmatprep.subr.mxu0 0.0
  %3003 = vmatpush2.xpose.msra.mxu0 0.0
  %3004 = vmatprep.subr.mxu0 0.0
  %3005 = vmatpush2.xpose.msra.mxu0 0.0
  %3006 = vmatprep.subr.mxu0 0.0
  %3007 = vmatpush2.xpose.msra.mxu0 0.0
  %3008 = vmatprep.subr.mxu0 0.0
  %3009 = vmatpush2.xpose.msra.mxu0 0.0
  %3010 = vmatprep.subr.mxu0 0.0
  %3011 = vmatpush2.xpose.msra.mxu0 0.0
  %3012 = vmatprep.subr.mxu0 0.0
  %3013 = vmatpush2.xpose.msra.mxu0 0.0
  %3014 = vmatprep.subr.mxu0 0.0
  %3015 = vmatpush2.xpose.msra.mxu0 0.0
  %3016 = vmatprep.mubr.f32.mxu0 0.0
  %3017 = vmatmul.mubr.f32.gmra.mxu0 %v2948
  %v3018 = vpop.f32.mrf.mxu0
  %v3019 = vadd.f32 %v210, %v3018
  %v3020 = vpop.f32.mrf.mxu0
  %3021 = vdwg.mxu0
  %v3022 = vsel %vm304, %v3019, -inf
  %3023 = vmax.xlane.f32.xlu0 %v3022
  %v3024 = vpop.xlane.xlu0 %3023
  %v3025 = vsub.f32 %v3019, %v3024
  %v3026 = vmul.f32 %v3025, 1.442695
  %v3027 = vpow.pop %v3026
  %v3028 = vsel %vm304, %v3027, 0.0
  %3029 = vadd.xlane.f32.xlu0 %v3028
  %v3030 = vpop.xlane.xlu0 %3029
  %v3031 = vrcp.pop %v3030
  %v3032 = vmul.f32 %v3027, %v3031
  %3033 = vrot.lane.b32.xlu0 %v2118, 48
  %v3034 = vpop.permute.xlu0 %3033
  %v3037 = vsel %vm304, %v3032, 0
  %3039 = vmatprep.subr.mxu0 0.0
  %3040 = vmatpush1.msra.mxu0 0.0
  %3041 = vmatprep.subr.mxu0 0.0
  %3042 = vmatpush1.msra.mxu0 0.0
  %3043 = vmatprep.subr.mxu0 0.0
  %3044 = vmatpush1.msra.mxu0 0.0
  %3045 = vmatprep.subr.mxu0 0.0
  %3046 = vmatpush1.msra.mxu0 0.0
  %3047 = vmatprep.subr.mxu0 0.0
  %3048 = vmatpush1.msra.mxu0 0.0
  %3049 = vmatprep.subr.mxu0 0.0
  %3050 = vmatpush1.msra.mxu0 0.0
  %3051 = vmatprep.subr.mxu0 0.0
  %3052 = vmatpush1.msra.mxu0 0.0
  %3053 = vmatprep.subr.mxu0 0.0
  %3054 = vmatpush1.msra.mxu0 0.0
  %3055 = vmatprep.subr.mxu0 0.0
  %3056 = vmatpush1.msra.mxu0 0.0
  %3057 = vmatprep.subr.mxu0 0.0
  %3058 = vmatpush1.msra.mxu0 0.0
  %3059 = vmatprep.subr.mxu0 0.0
  %3060 = vmatpush1.msra.mxu0 0.0
  %3061 = vmatprep.subr.mxu0 0.0
  %3062 = vmatpush1.msra.mxu0 0.0
  %3063 = vmatprep.subr.mxu0 0.0
  %3064 = vmatpush1.msra.mxu0 0.0
  %3065 = vmatprep.subr.mxu0 0.0
  %3066 = vmatpush1.msra.mxu0 0.0
  %3067 = vmatprep.subr.mxu0 0.0
  %3068 = vmatpush1.msra.mxu0 0.0
  %3069 = vmatprep.subr.mxu0 0.0
  %3070 = vmatpush1.msra.mxu0 %v3034
  %3071 = vmatprep.subr.mxu0 0.0
  %3072 = vmatpush2.msra.mxu0 0.0
  %3073 = vmatprep.subr.mxu0 0.0
  %3074 = vmatpush2.msra.mxu0 0.0
  %3075 = vmatprep.subr.mxu0 0.0
  %3076 = vmatpush2.msra.mxu0 0.0
  %3077 = vmatprep.subr.mxu0 0.0
  %3078 = vmatpush2.msra.mxu0 0.0
  %3079 = vmatprep.subr.mxu0 0.0
  %3080 = vmatpush2.msra.mxu0 0.0
  %3081 = vmatprep.subr.mxu0 0.0
  %3082 = vmatpush2.msra.mxu0 0.0
  %3083 = vmatprep.subr.mxu0 0.0
  %3084 = vmatpush2.msra.mxu0 0.0
  %3085 = vmatprep.subr.mxu0 0.0
  %3086 = vmatpush2.msra.mxu0 0.0
  %3087 = vmatprep.subr.mxu0 0.0
  %3088 = vmatpush2.msra.mxu0 0.0
  %3089 = vmatprep.subr.mxu0 0.0
  %3090 = vmatpush2.msra.mxu0 0.0
  %3091 = vmatprep.subr.mxu0 0.0
  %3092 = vmatpush2.msra.mxu0 0.0
  %3093 = vmatprep.subr.mxu0 0.0
  %3094 = vmatpush2.msra.mxu0 0.0
  %3095 = vmatprep.subr.mxu0 0.0
  %3096 = vmatpush2.msra.mxu0 0.0
  %3097 = vmatprep.subr.mxu0 0.0
  %3098 = vmatpush2.msra.mxu0 0.0
  %3099 = vmatprep.subr.mxu0 0.0
  %3100 = vmatpush2.msra.mxu0 0.0
  %3101 = vmatprep.subr.mxu0 0.0
  %3102 = vmatpush2.msra.mxu0 0.0
  %3103 = vmatprep.mubr.f32.mxu0 0.0
  %3104 = vmatmul.mubr.f32.gmra.mxu0 %v3037
  %v3105 = vpop.f32.mrf.mxu0
  %v3106 = vadd.f32 0.0, %v3105
  %v3107 = vpop.f32.mrf.mxu0
  %3108 = vdwg.mxu0
  %3109 = vrot.lane.b32.xlu0 %v2113, 104
  %v3110 = vpop.permute.xlu0 %3109
  %3111 = vrot.lane.b32.xlu0 %v2113, 72
  %v3112 = vpop.permute.xlu0 %3111
  %v3113 = vsel %vm304, %v3110, 0
  %v3115 = vsel %vm304, %v3112, 0
  %3117 = vmatprep.subr.mxu0 0.0
  %3118 = vmatpush1.xpose.msra.mxu0 0.0
  %3119 = vmatprep.subr.mxu0 0.0
  %3120 = vmatpush1.xpose.msra.mxu0 0.0
  %3121 = vmatprep.subr.mxu0 0.0
  %3122 = vmatpush1.xpose.msra.mxu0 0.0
  %3123 = vmatprep.subr.mxu0 0.0
  %3124 = vmatpush1.xpose.msra.mxu0 0.0
  %3125 = vmatprep.subr.mxu0 0.0
  %3126 = vmatpush1.xpose.msra.mxu0 0.0
  %3127 = vmatprep.subr.mxu0 0.0
  %3128 = vmatpush1.xpose.msra.mxu0 0.0
  %3129 = vmatprep.subr.mxu0 0.0
  %3130 = vmatpush1.xpose.msra.mxu0 0.0
  %3131 = vmatprep.subr.mxu0 0.0
  %3132 = vmatpush1.xpose.msra.mxu0 0.0
  %3133 = vmatprep.subr.mxu0 0.0
  %3134 = vmatpush1.xpose.msra.mxu0 0.0
  %3135 = vmatprep.subr.mxu0 0.0
  %3136 = vmatpush1.xpose.msra.mxu0 0.0
  %3137 = vmatprep.subr.mxu0 0.0
  %3138 = vmatpush1.xpose.msra.mxu0 0.0
  %3139 = vmatprep.subr.mxu0 0.0
  %3140 = vmatpush1.xpose.msra.mxu0 0.0
  %3141 = vmatprep.subr.mxu0 0.0
  %3142 = vmatpush1.xpose.msra.mxu0 0.0
  %3143 = vmatprep.subr.mxu0 0.0
  %3144 = vmatpush1.xpose.msra.mxu0 0.0
  %3145 = vmatprep.subr.mxu0 0.0
  %3146 = vmatpush1.xpose.msra.mxu0 0.0
  %3147 = vmatprep.subr.mxu0 0.0
  %3148 = vmatpush1.xpose.msra.mxu0 %v3115
  %3149 = vmatprep.subr.mxu0 0.0
  %3150 = vmatpush2.xpose.msra.mxu0 0.0
  %3151 = vmatprep.subr.mxu0 0.0
  %3152 = vmatpush2.xpose.msra.mxu0 0.0
  %3153 = vmatprep.subr.mxu0 0.0
  %3154 = vmatpush2.xpose.msra.mxu0 0.0
  %3155 = vmatprep.subr.mxu0 0.0
  %3156 = vmatpush2.xpose.msra.mxu0 0.0
  %3157 = vmatprep.subr.mxu0 0.0
  %3158 = vmatpush2.xpose.msra.mxu0 0.0
  %3159 = vmatprep.subr.mxu0 0.0
  %3160 = vmatpush2.xpose.msra.mxu0 0.0
  %3161 = vmatprep.subr.mxu0 0.0
  %3162 = vmatpush2.xpose.msra.mxu0 0.0
  %3163 = vmatprep.subr.mxu0 0.0
  %3164 = vmatpush2.xpose.msra.mxu0 0.0
  %3165 = vmatprep.subr.mxu0 0.0
  %3166 = vmatpush2.xpose.msra.mxu0 0.0
  %3167 = vmatprep.subr.mxu0 0.0
  %3168 = vmatpush2.xpose.msra.mxu0 0.0
  %3169 = vmatprep.subr.mxu0 0.0
  %3170 = vmatpush2.xpose.msra.mxu0 0.0
  %3171 = vmatprep.subr.mxu0 0.0
  %3172 = vmatpush2.xpose.msra.mxu0 0.0
  %3173 = vmatprep.subr.mxu0 0.0
  %3174 = vmatpush2.xpose.msra.mxu0 0.0
  %3175 = vmatprep.subr.mxu0 0.0
  %3176 = vmatpush2.xpose.msra.mxu0 0.0
  %3177 = vmatprep.subr.mxu0 0.0
  %3178 = vmatpush2.xpose.msra.mxu0 0.0
  %3179 = vmatprep.subr.mxu0 0.0
  %3180 = vmatpush2.xpose.msra.mxu0 0.0
  %3181 = vmatprep.mubr.f32.mxu0 0.0
  %3182 = vmatmul.mubr.f32.gmra.mxu0 %v3113
  %v3183 = vpop.f32.mrf.mxu0
  %v3184 = vadd.f32 %v206, %v3183
  %v3185 = vpop.f32.mrf.mxu0
  %3186 = vdwg.mxu0
  %v3187 = vsel %vm304, %v3184, -inf
  %3188 = vmax.xlane.f32.xlu0 %v3187
  %v3189 = vpop.xlane.xlu0 %3188
  %v3190 = vsub.f32 %v3184, %v3189
  %v3191 = vmul.f32 %v3190, 1.442695
  %v3192 = vpow.pop %v3191
  %v3193 = vsel %vm304, %v3192, 0.0
  %3194 = vadd.xlane.f32.xlu0 %v3193
  %v3195 = vpop.xlane.xlu0 %3194
  %v3196 = vrcp.pop %v3195
  %v3197 = vmul.f32 %v3192, %v3196
  %3198 = vrot.lane.b32.xlu0 %v2113, 40
  %v3199 = vpop.permute.xlu0 %3198
  %v3202 = vsel %vm304, %v3197, 0
  %3204 = vmatprep.subr.mxu0 0.0
  %3205 = vmatpush1.msra.mxu0 0.0
  %3206 = vmatprep.subr.mxu0 0.0
  %3207 = vmatpush1.msra.mxu0 0.0
  %3208 = vmatprep.subr.mxu0 0.0
  %3209 = vmatpush1.msra.mxu0 0.0
  %3210 = vmatprep.subr.mxu0 0.0
  %3211 = vmatpush1.msra.mxu0 0.0
  %3212 = vmatprep.subr.mxu0 0.0
  %3213 = vmatpush1.msra.mxu0 0.0
  %3214 = vmatprep.subr.mxu0 0.0
  %3215 = vmatpush1.msra.mxu0 0.0
  %3216 = vmatprep.subr.mxu0 0.0
  %3217 = vmatpush1.msra.mxu0 0.0
  %3218 = vmatprep.subr.mxu0 0.0
  %3219 = vmatpush1.msra.mxu0 0.0
  %3220 = vmatprep.subr.mxu0 0.0
  %3221 = vmatpush1.msra.mxu0 0.0
  %3222 = vmatprep.subr.mxu0 0.0
  %3223 = vmatpush1.msra.mxu0 0.0
  %3224 = vmatprep.subr.mxu0 0.0
  %3225 = vmatpush1.msra.mxu0 0.0
  %3226 = vmatprep.subr.mxu0 0.0
  %3227 = vmatpush1.msra.mxu0 0.0
  %3228 = vmatprep.subr.mxu0 0.0
  %3229 = vmatpush1.msra.mxu0 0.0
  %3230 = vmatprep.subr.mxu0 0.0
  %3231 = vmatpush1.msra.mxu0 0.0
  %3232 = vmatprep.subr.mxu0 0.0
  %3233 = vmatpush1.msra.mxu0 0.0
  %3234 = vmatprep.subr.mxu0 0.0
  %3235 = vmatpush1.msra.mxu0 %v3199
  %3236 = vmatprep.subr.mxu0 0.0
  %3237 = vmatpush2.msra.mxu0 0.0
  %3238 = vmatprep.subr.mxu0 0.0
  %3239 = vmatpush2.msra.mxu0 0.0
  %3240 = vmatprep.subr.mxu0 0.0
  %3241 = vmatpush2.msra.mxu0 0.0
  %3242 = vmatprep.subr.mxu0 0.0
  %3243 = vmatpush2.msra.mxu0 0.0
  %3244 = vmatprep.subr.mxu0 0.0
  %3245 = vmatpush2.msra.mxu0 0.0
  %3246 = vmatprep.subr.mxu0 0.0
  %3247 = vmatpush2.msra.mxu0 0.0
  %3248 = vmatprep.subr.mxu0 0.0
  %3249 = vmatpush2.msra.mxu0 0.0
  %3250 = vmatprep.subr.mxu0 0.0
  %3251 = vmatpush2.msra.mxu0 0.0
  %3252 = vmatprep.subr.mxu0 0.0
  %3253 = vmatpush2.msra.mxu0 0.0
  %3254 = vmatprep.subr.mxu0 0.0
  %3255 = vmatpush2.msra.mxu0 0.0
  %3256 = vmatprep.subr.mxu0 0.0
  %3257 = vmatpush2.msra.mxu0 0.0
  %3258 = vmatprep.subr.mxu0 0.0
  %3259 = vmatpush2.msra.mxu0 0.0
  %3260 = vmatprep.subr.mxu0 0.0
  %3261 = vmatpush2.msra.mxu0 0.0
  %3262 = vmatprep.subr.mxu0 0.0
  %3263 = vmatpush2.msra.mxu0 0.0
  %3264 = vmatprep.subr.mxu0 0.0
  %3265 = vmatpush2.msra.mxu0 0.0
  %3266 = vmatprep.subr.mxu0 0.0
  %3267 = vmatpush2.msra.mxu0 0.0
  %3268 = vmatprep.mubr.f32.mxu0 0.0
  %3269 = vmatmul.mubr.f32.gmra.mxu0 %v3202
  %v3270 = vpop.f32.mrf.mxu0
  %v3271 = vadd.f32 0.0, %v3270
  %v3272 = vpop.f32.mrf.mxu0
  %3273 = vdwg.mxu0
  %3274 = vrot.lane.b32.xlu0 %v2118, 104
  %v3275 = vpop.permute.xlu0 %3274
  %3276 = vrot.lane.b32.xlu0 %v2118, 72
  %v3277 = vpop.permute.xlu0 %3276
  %v3278 = vsel %vm304, %v3275, 0
  %v3280 = vsel %vm304, %v3277, 0
  %3282 = vmatprep.subr.mxu0 0.0
  %3283 = vmatpush1.xpose.msra.mxu0 0.0
  %3284 = vmatprep.subr.mxu0 0.0
  %3285 = vmatpush1.xpose.msra.mxu0 0.0
  %3286 = vmatprep.subr.mxu0 0.0
  %3287 = vmatpush1.xpose.msra.mxu0 0.0
  %3288 = vmatprep.subr.mxu0 0.0
  %3289 = vmatpush1.xpose.msra.mxu0 0.0
  %3290 = vmatprep.subr.mxu0 0.0
  %3291 = vmatpush1.xpose.msra.mxu0 0.0
  %3292 = vmatprep.subr.mxu0 0.0
  %3293 = vmatpush1.xpose.msra.mxu0 0.0
  %3294 = vmatprep.subr.mxu0 0.0
  %3295 = vmatpush1.xpose.msra.mxu0 0.0
  %3296 = vmatprep.subr.mxu0 0.0
  %3297 = vmatpush1.xpose.msra.mxu0 0.0
  %3298 = vmatprep.subr.mxu0 0.0
  %3299 = vmatpush1.xpose.msra.mxu0 0.0
  %3300 = vmatprep.subr.mxu0 0.0
  %3301 = vmatpush1.xpose.msra.mxu0 0.0
  %3302 = vmatprep.subr.mxu0 0.0
  %3303 = vmatpush1.xpose.msra.mxu0 0.0
  %3304 = vmatprep.subr.mxu0 0.0
  %3305 = vmatpush1.xpose.msra.mxu0 0.0
  %3306 = vmatprep.subr.mxu0 0.0
  %3307 = vmatpush1.xpose.msra.mxu0 0.0
  %3308 = vmatprep.subr.mxu0 0.0
  %3309 = vmatpush1.xpose.msra.mxu0 0.0
  %3310 = vmatprep.subr.mxu0 0.0
  %3311 = vmatpush1.xpose.msra.mxu0 0.0
  %3312 = vmatprep.subr.mxu0 0.0
  %3313 = vmatpush1.xpose.msra.mxu0 %v3280
  %3314 = vmatprep.subr.mxu0 0.0
  %3315 = vmatpush2.xpose.msra.mxu0 0.0
  %3316 = vmatprep.subr.mxu0 0.0
  %3317 = vmatpush2.xpose.msra.mxu0 0.0
  %3318 = vmatprep.subr.mxu0 0.0
  %3319 = vmatpush2.xpose.msra.mxu0 0.0
  %3320 = vmatprep.subr.mxu0 0.0
  %3321 = vmatpush2.xpose.msra.mxu0 0.0
  %3322 = vmatprep.subr.mxu0 0.0
  %3323 = vmatpush2.xpose.msra.mxu0 0.0
  %3324 = vmatprep.subr.mxu0 0.0
  %3325 = vmatpush2.xpose.msra.mxu0 0.0
  %3326 = vmatprep.subr.mxu0 0.0
  %3327 = vmatpush2.xpose.msra.mxu0 0.0
  %3328 = vmatprep.subr.mxu0 0.0
  %3329 = vmatpush2.xpose.msra.mxu0 0.0
  %3330 = vmatprep.subr.mxu0 0.0
  %3331 = vmatpush2.xpose.msra.mxu0 0.0
  %3332 = vmatprep.subr.mxu0 0.0
  %3333 = vmatpush2.xpose.msra.mxu0 0.0
  %3334 = vmatprep.subr.mxu0 0.0
  %3335 = vmatpush2.xpose.msra.mxu0 0.0
  %3336 = vmatprep.subr.mxu0 0.0
  %3337 = vmatpush2.xpose.msra.mxu0 0.0
  %3338 = vmatprep.subr.mxu0 0.0
  %3339 = vmatpush2.xpose.msra.mxu0 0.0
  %3340 = vmatprep.subr.mxu0 0.0
  %3341 = vmatpush2.xpose.msra.mxu0 0.0
  %3342 = vmatprep.subr.mxu0 0.0
  %3343 = vmatpush2.xpose.msra.mxu0 0.0
  %3344 = vmatprep.subr.mxu0 0.0
  %3345 = vmatpush2.xpose.msra.mxu0 0.0
  %3346 = vmatprep.mubr.f32.mxu0 0.0
  %3347 = vmatmul.mubr.f32.gmra.mxu0 %v3278
  %v3348 = vpop.f32.mrf.mxu0
  %v3349 = vadd.f32 %v210, %v3348
  %v3350 = vpop.f32.mrf.mxu0
  %3351 = vdwg.mxu0
  %v3352 = vsel %vm304, %v3349, -inf
  %3353 = vmax.xlane.f32.xlu0 %v3352
  %v3354 = vpop.xlane.xlu0 %3353
  %v3355 = vsub.f32 %v3349, %v3354
  %v3356 = vmul.f32 %v3355, 1.442695
  %v3357 = vpow.pop %v3356
  %v3358 = vsel %vm304, %v3357, 0.0
  %3359 = vadd.xlane.f32.xlu0 %v3358
  %v3360 = vpop.xlane.xlu0 %3359
  %v3361 = vrcp.pop %v3360
  %v3362 = vmul.f32 %v3357, %v3361
  %3363 = vrot.lane.b32.xlu0 %v2118, 40
  %v3364 = vpop.permute.xlu0 %3363
  %v3367 = vsel %vm304, %v3362, 0
  %3369 = vmatprep.subr.mxu0 0.0
  %3370 = vmatpush1.msra.mxu0 0.0
  %3371 = vmatprep.subr.mxu0 0.0
  %3372 = vmatpush1.msra.mxu0 0.0
  %3373 = vmatprep.subr.mxu0 0.0
  %3374 = vmatpush1.msra.mxu0 0.0
  %3375 = vmatprep.subr.mxu0 0.0
  %3376 = vmatpush1.msra.mxu0 0.0
  %3377 = vmatprep.subr.mxu0 0.0
  %3378 = vmatpush1.msra.mxu0 0.0
  %3379 = vmatprep.subr.mxu0 0.0
  %3380 = vmatpush1.msra.mxu0 0.0
  %3381 = vmatprep.subr.mxu0 0.0
  %3382 = vmatpush1.msra.mxu0 0.0
  %3383 = vmatprep.subr.mxu0 0.0
  %3384 = vmatpush1.msra.mxu0 0.0
  %3385 = vmatprep.subr.mxu0 0.0
  %3386 = vmatpush1.msra.mxu0 0.0
  %3387 = vmatprep.subr.mxu0 0.0
  %3388 = vmatpush1.msra.mxu0 0.0
  %3389 = vmatprep.subr.mxu0 0.0
  %3390 = vmatpush1.msra.mxu0 0.0
  %3391 = vmatprep.subr.mxu0 0.0
  %3392 = vmatpush1.msra.mxu0 0.0
  %3393 = vmatprep.subr.mxu0 0.0
  %3394 = vmatpush1.msra.mxu0 0.0
  %3395 = vmatprep.subr.mxu0 0.0
  %3396 = vmatpush1.msra.mxu0 0.0
  %3397 = vmatprep.subr.mxu0 0.0
  %3398 = vmatpush1.msra.mxu0 0.0
  %3399 = vmatprep.subr.mxu0 0.0
  %3400 = vmatpush1.msra.mxu0 %v3364
  %3401 = vmatprep.subr.mxu0 0.0
  %3402 = vmatpush2.msra.mxu0 0.0
  %3403 = vmatprep.subr.mxu0 0.0
  %3404 = vmatpush2.msra.mxu0 0.0
  %3405 = vmatprep.subr.mxu0 0.0
  %3406 = vmatpush2.msra.mxu0 0.0
  %3407 = vmatprep.subr.mxu0 0.0
  %3408 = vmatpush2.msra.mxu0 0.0
  %3409 = vmatprep.subr.mxu0 0.0
  %3410 = vmatpush2.msra.mxu0 0.0
  %3411 = vmatprep.subr.mxu0 0.0
  %3412 = vmatpush2.msra.mxu0 0.0
  %3413 = vmatprep.subr.mxu0 0.0
  %3414 = vmatpush2.msra.mxu0 0.0
  %3415 = vmatprep.subr.mxu0 0.0
  %3416 = vmatpush2.msra.mxu0 0.0
  %3417 = vmatprep.subr.mxu0 0.0
  %3418 = vmatpush2.msra.mxu0 0.0
  %3419 = vmatprep.subr.mxu0 0.0
  %3420 = vmatpush2.msra.mxu0 0.0
  %3421 = vmatprep.subr.mxu0 0.0
  %3422 = vmatpush2.msra.mxu0 0.0
  %3423 = vmatprep.subr.mxu0 0.0
  %3424 = vmatpush2.msra.mxu0 0.0
  %3425 = vmatprep.subr.mxu0 0.0
  %3426 = vmatpush2.msra.mxu0 0.0
  %3427 = vmatprep.subr.mxu0 0.0
  %3428 = vmatpush2.msra.mxu0 0.0
  %3429 = vmatprep.subr.mxu0 0.0
  %3430 = vmatpush2.msra.mxu0 0.0
  %3431 = vmatprep.subr.mxu0 0.0
  %3432 = vmatpush2.msra.mxu0 0.0
  %3433 = vmatprep.mubr.f32.mxu0 0.0
  %3434 = vmatmul.mubr.f32.gmra.mxu0 %v3367
  %v3435 = vpop.f32.mrf.mxu0
  %v3436 = vadd.f32 0.0, %v3435
  %v3437 = vpop.f32.mrf.mxu0
  %3438 = vdwg.mxu0
  %3441 = vrot.lane.b32.xlu0 %v2611, 8
  %v3442 = vpop.permute.xlu0 %3441
  %3443 = vrot.lane.b32.xlu0 %v2776, 8
  %v3444 = vpop.permute.xlu0 %3443
  %3449 = vrot.lane.b32.xlu0 %v2941, 16
  %v3450 = vpop.permute.xlu0 %3449
  %3451 = vrot.lane.b32.xlu0 %v3106, 16
  %v3452 = vpop.permute.xlu0 %3451
  %3457 = vrot.lane.b32.xlu0 %v3271, 24
  %v3458 = vpop.permute.xlu0 %3457
  %3459 = vrot.lane.b32.xlu0 %v3436, 24
  %v3460 = vpop.permute.xlu0 %3459
  %v3463 = vsel %vm304, %v2282, %v3442
  %v3464 = vsel %vm304, %v2446, %v3444
  %v3465 = vsel %vm1646, %v3463, %v3450
  %v3466 = vsel %vm1646, %v3464, %v3452
  %v3467 = vsel %vm1649, %v3465, %v3458
  %v3468 = vsel %vm1649, %v3466, %v3460
  %s3469 = scalar_lea.vmem %s4, 32
  %v3470 = vld [vmem:[%s3469] sm:$0xff]
  %v3471 = vld [vmem:[%s3469 + $0x8] sm:$0xff]
  %v3472 = vld [vmem:[%s3469 + $0x10] sm:$0xff]
  %v3473 = vld [vmem:[%s3469 + $0x18] sm:$0xff]
  %v3474 = vld [vmem:[%s2034 + $0x1] sm:$0x1]
  %v3475 = vlaneseq
  %v3476 = vshrl.u32 %v3475, 7
  %v3477 = vsub.s32 0, %v3476
  %v3478 = vrot.slane %v3474, %v3477
  %v3480 = vsel %vm159, %v3467, 0
  %v3483 = vsel %vm159, %v3468, 0
  %3485 = vmatprep.subr.mxu0 0.0
  %3486 = vmatpush1.msra.mxu0 0.0
  %3487 = vmatprep.subr.mxu0 0.0
  %3488 = vmatpush1.msra.mxu0 0.0
  %3489 = vmatprep.subr.mxu0 0.0
  %3490 = vmatpush1.msra.mxu0 0.0
  %3491 = vmatprep.subr.mxu0 0.0
  %3492 = vmatpush1.msra.mxu0 0.0
  %3493 = vmatprep.subr.mxu0 0.0
  %3494 = vmatpush1.msra.mxu0 0.0
  %3495 = vmatprep.subr.mxu0 0.0
  %3496 = vmatpush1.msra.mxu0 0.0
  %3497 = vmatprep.subr.mxu0 0.0
  %3498 = vmatpush1.msra.mxu0 0.0
  %3499 = vmatprep.subr.mxu0 0.0
  %3500 = vmatpush1.msra.mxu0 0.0
  %3501 = vmatprep.subr.mxu0 0.0
  %3502 = vmatpush1.msra.mxu0 0.0
  %3503 = vmatprep.subr.mxu0 0.0
  %3504 = vmatpush1.msra.mxu0 0.0
  %3505 = vmatprep.subr.mxu0 0.0
  %3506 = vmatpush1.msra.mxu0 0.0
  %3507 = vmatprep.subr.mxu0 0.0
  %3508 = vmatpush1.msra.mxu0 0.0
  %3509 = vmatprep.subr.mxu0 0.0
  %3510 = vmatpush1.msra.mxu0 %v3473
  %3511 = vmatprep.subr.mxu0 0.0
  %3512 = vmatpush1.msra.mxu0 %v3472
  %3513 = vmatprep.subr.mxu0 0.0
  %3514 = vmatpush1.msra.mxu0 %v3471
  %3515 = vmatprep.subr.mxu0 0.0
  %3516 = vmatpush1.msra.mxu0 %v3470
  %3517 = vmatprep.subr.mxu0 0.0
  %3518 = vmatpush2.msra.mxu0 0.0
  %3519 = vmatprep.subr.mxu0 0.0
  %3520 = vmatpush2.msra.mxu0 0.0
  %3521 = vmatprep.subr.mxu0 0.0
  %3522 = vmatpush2.msra.mxu0 0.0
  %3523 = vmatprep.subr.mxu0 0.0
  %3524 = vmatpush2.msra.mxu0 0.0
  %3525 = vmatprep.subr.mxu0 0.0
  %3526 = vmatpush2.msra.mxu0 0.0
  %3527 = vmatprep.subr.mxu0 0.0
  %3528 = vmatpush2.msra.mxu0 0.0
  %3529 = vmatprep.subr.mxu0 0.0
  %3530 = vmatpush2.msra.mxu0 0.0
  %3531 = vmatprep.subr.mxu0 0.0
  %3532 = vmatpush2.msra.mxu0 0.0
  %3533 = vmatprep.subr.mxu0 0.0
  %3534 = vmatpush2.msra.mxu0 0.0
  %3535 = vmatprep.subr.mxu0 0.0
  %3536 = vmatpush2.msra.mxu0 0.0
  %3537 = vmatprep.subr.mxu0 0.0
  %3538 = vmatpush2.msra.mxu0 0.0
  %3539 = vmatprep.subr.mxu0 0.0
  %3540 = vmatpush2.msra.mxu0 0.0
  %3541 = vmatprep.subr.mxu0 0.0
  %3542 = vmatpush2.msra.mxu0 0.0
  %3543 = vmatprep.subr.mxu0 0.0
  %3544 = vmatpush2.msra.mxu0 0.0
  %3545 = vmatprep.subr.mxu0 0.0
  %3546 = vmatpush2.msra.mxu0 0.0
  %3547 = vmatprep.subr.mxu0 0.0
  %3548 = vmatpush2.msra.mxu0 0.0
  %3549 = vmatprep.mubr.f32.mxu0 0.0
  %3550 = vmatmul.mubr.f32.gmra.mxu0 %v3480
  %v3551 = vpop.f32.mrf.mxu0
  %v3552 = vadd.f32 %v3478, %v3551
  %v3553 = vpop.f32.mrf.mxu0
  %3554 = vmatprep.mubr.f32.mxu0 0.0
  %3555 = vmatmul.mubr.f32.gmra.mxu0 %v3483
  %v3556 = vpop.f32.mrf.mxu0
  %v3557 = vadd.f32 %v3478, %v3556
  %v3558 = vpop.f32.mrf.mxu0
  %3559 = vdwg.mxu0
  %v3560 = vadd.f32 %v3552, %v2027
  %v3561 = vadd.f32 %v3557, %v2028
  %v3562 = vld [vmem:[%s2034 + $0x2] sm:$0x1]
  %v3563 = vld [vmem:[%s2034 + $0x3] sm:$0x1]
  %v3564 = vsel %vm159, %v3560, 0.0
  %3565 = vadd.xlane.f32.xlu0 %v3564
  %v3566 = vpop.xlane.xlu0 %3565
  %v3567 = vsel %vm159, %v3561, 0.0
  %3568 = vadd.xlane.f32.xlu0 %v3567
  %v3569 = vpop.xlane.xlu0 %3568
  %v3570 = vmul.f32 %v3566, %v166
  %v3571 = vmul.f32 %v3569, %v166
  %v3572 = vsub.f32 %v3560, %v3570
  %v3573 = vsub.f32 %v3561, %v3571
  %v3574 = vmul.f32 %v3572, %v3572
  %v3575 = vmul.f32 %v3573, %v3573
  %v3576 = vsel %vm159, %v3574, 0.0
  %3577 = vadd.xlane.f32.xlu0 %v3576
  %v3578 = vpop.xlane.xlu0 %3577
  %v3579 = vsel %vm159, %v3575, 0.0
  %3580 = vadd.xlane.f32.xlu0 %v3579
  %v3581 = vpop.xlane.xlu0 %3580
  %v3582 = vmul.f32 %v3578, %v166
  %v3583 = vmul.f32 %v3581, %v166
  %v3584 = vadd.f32 %v3582, 1e-12
  %v3585 = vadd.f32 %v3583, 1e-12
  %v3586 = vrsqrt.pop %v3584
  %v3587 = vrsqrt.pop %v3585
  %v3588 = vmul.f32 %v3572, %v3586
  %v3589 = vmul.f32 %v3573, %v3587
  %v3590 = vlaneseq
  %v3591 = vshrl.u32 %v3590, 7
  %v3592 = vsub.s32 0, %v3591
  %v3593 = vrot.slane %v3562, %v3592
  %v3594 = vmul.f32 %v3588, %v3593
  %v3595 = vmul.f32 %v3589, %v3593
  %v3596 = vlaneseq
  %v3597 = vshrl.u32 %v3596, 7
  %v3598 = vsub.s32 0, %v3597
  %v3599 = vrot.slane %v3563, %v3598
  %v3600 = vadd.f32 %v3594, %v3599
  %v3601 = vadd.f32 %v3595, %v3599
  %s3602 = scalar_lea.vmem %s5, 32
  %v3603 = vld [vmem:[%s3602] sm:$0xff]
  %v3604 = vld [vmem:[%s3602 + $0x8] sm:$0xff]
  %v3605 = vld [vmem:[%s3602 + $0x10] sm:$0xff]
  %v3606 = vld [vmem:[%s3602 + $0x18] sm:$0xff]
  %v3607 = vld [vmem:[%s2034 + $0x4] sm:$0x1]
  %v3608 = vlaneseq
  %v3609 = vshrl.u32 %v3608, 7
  %v3610 = vsub.s32 0, %v3609
  %v3611 = vrot.slane %v3607, %v3610
  %v3613 = vsel %vm159, %v3600, 0
  %v3616 = vsel %vm159, %v3601, 0
  %3618 = vmatprep.subr.mxu0 0.0
  %3619 = vmatpush1.msra.mxu0 0.0
  %3620 = vmatprep.subr.mxu0 0.0
  %3621 = vmatpush1.msra.mxu0 0.0
  %3622 = vmatprep.subr.mxu0 0.0
  %3623 = vmatpush1.msra.mxu0 0.0
  %3624 = vmatprep.subr.mxu0 0.0
  %3625 = vmatpush1.msra.mxu0 0.0
  %3626 = vmatprep.subr.mxu0 0.0
  %3627 = vmatpush1.msra.mxu0 0.0
  %3628 = vmatprep.subr.mxu0 0.0
  %3629 = vmatpush1.msra.mxu0 0.0
  %3630 = vmatprep.subr.mxu0 0.0
  %3631 = vmatpush1.msra.mxu0 0.0
  %3632 = vmatprep.subr.mxu0 0.0
  %3633 = vmatpush1.msra.mxu0 0.0
  %3634 = vmatprep.subr.mxu0 0.0
  %3635 = vmatpush1.msra.mxu0 0.0
  %3636 = vmatprep.subr.mxu0 0.0
  %3637 = vmatpush1.msra.mxu0 0.0
  %3638 = vmatprep.subr.mxu0 0.0
  %3639 = vmatpush1.msra.mxu0 0.0
  %3640 = vmatprep.subr.mxu0 0.0
  %3641 = vmatpush1.msra.mxu0 0.0
  %3642 = vmatprep.subr.mxu0 0.0
  %3643 = vmatpush1.msra.mxu0 %v3606
  %3644 = vmatprep.subr.mxu0 0.0
  %3645 = vmatpush1.msra.mxu0 %v3605
  %3646 = vmatprep.subr.mxu0 0.0
  %3647 = vmatpush1.msra.mxu0 %v3604
  %3648 = vmatprep.subr.mxu0 0.0
  %3649 = vmatpush1.msra.mxu0 %v3603
  %3650 = vmatprep.subr.mxu0 0.0
  %3651 = vmatpush2.msra.mxu0 0.0
  %3652 = vmatprep.subr.mxu0 0.0
  %3653 = vmatpush2.msra.mxu0 0.0
  %3654 = vmatprep.subr.mxu0 0.0
  %3655 = vmatpush2.msra.mxu0 0.0
  %3656 = vmatprep.subr.mxu0 0.0
  %3657 = vmatpush2.msra.mxu0 0.0
  %3658 = vmatprep.subr.mxu0 0.0
  %3659 = vmatpush2.msra.mxu0 0.0
  %3660 = vmatprep.subr.mxu0 0.0
  %3661 = vmatpush2.msra.mxu0 0.0
  %3662 = vmatprep.subr.mxu0 0.0
  %3663 = vmatpush2.msra.mxu0 0.0
  %3664 = vmatprep.subr.mxu0 0.0
  %3665 = vmatpush2.msra.mxu0 0.0
  %3666 = vmatprep.subr.mxu0 0.0
  %3667 = vmatpush2.msra.mxu0 0.0
  %3668 = vmatprep.subr.mxu0 0.0
  %3669 = vmatpush2.msra.mxu0 0.0
  %3670 = vmatprep.subr.mxu0 0.0
  %3671 = vmatpush2.msra.mxu0 0.0
  %3672 = vmatprep.subr.mxu0 0.0
  %3673 = vmatpush2.msra.mxu0 0.0
  %3674 = vmatprep.subr.mxu0 0.0
  %3675 = vmatpush2.msra.mxu0 0.0
  %3676 = vmatprep.subr.mxu0 0.0
  %3677 = vmatpush2.msra.mxu0 0.0
  %3678 = vmatprep.subr.mxu0 0.0
  %3679 = vmatpush2.msra.mxu0 0.0
  %3680 = vmatprep.subr.mxu0 0.0
  %3681 = vmatpush2.msra.mxu0 0.0
  %3682 = vmatprep.mubr.f32.mxu0 0.0
  %3683 = vmatmul.mubr.f32.gmra.mxu0 %v3613
  %v3684 = vpop.f32.mrf.mxu0
  %v3685 = vadd.f32 %v3611, %v3684
  %v3686 = vpop.f32.mrf.mxu0
  %3687 = vmatprep.mubr.f32.mxu0 0.0
  %3688 = vmatmul.mubr.f32.gmra.mxu0 %v3616
  %v3689 = vpop.f32.mrf.mxu0
  %v3690 = vadd.f32 %v3611, %v3689
  %v3691 = vpop.f32.mrf.mxu0
  %3692 = vdwg.mxu0
  %v3693 = vmul.f32 %v3685, %v3685
  %v3694 = vmul.f32 %v3690, %v3690
  %v3695 = vmul.f32 %v3685, %v3693
  %v3696 = vmul.f32 %v3690, %v3694
  %v3697 = vmul.f32 %v3695, 0.044715
  %v3698 = vmul.f32 %v3696, 0.044715
  %v3699 = vadd.f32 %v3685, %v3697
  %v3700 = vadd.f32 %v3690, %v3698
  %v3701 = vmul.f32 %v3699, 0.7978846
  %v3702 = vmul.f32 %v3700, 0.7978846
  %v3703 = vtanh.pop %v3701
  %v3704 = vtanh.pop %v3702
  %v3705 = vadd.f32 %v3703, 1.0
  %v3706 = vadd.f32 %v3704, 1.0
  %v3707 = vmul.f32 %v3705, 0.5
  %v3708 = vmul.f32 %v3706, 0.5
  %v3709 = vmul.f32 %v3685, %v3707
  %v3710 = vmul.f32 %v3690, %v3708
  %s3711 = scalar_lea.vmem %s6, 64
  %v3712 = vld [vmem:[%s3711] sm:$0xff]
  %v3713 = vld [vmem:[%s3711 + $0x8] sm:$0xff]
  %v3714 = vld [vmem:[%s3711 + $0x10] sm:$0xff]
  %v3715 = vld [vmem:[%s3711 + $0x18] sm:$0xff]
  %v3716 = vld [vmem:[%s3711 + $0x20] sm:$0xff]
  %v3717 = vld [vmem:[%s3711 + $0x28] sm:$0xff]
  %v3718 = vld [vmem:[%s3711 + $0x30] sm:$0xff]
  %v3719 = vld [vmem:[%s3711 + $0x38] sm:$0xff]
  %v3720 = vld [vmem:[%s2034 + $0x5] sm:$0x1]
  %v3721 = vlaneseq
  %v3722 = vshrl.u32 %v3721, 7
  %v3723 = vsub.s32 0, %v3722
  %v3724 = vrot.slane %v3720, %v3723
  %v3726 = vsel %vm1905, %v3709, 0
  %v3729 = vsel %vm1905, %v3710, 0
  %3731 = vmatprep.subr.mxu0 0.0
  %3732 = vmatpush1.msra.mxu0 0.0
  %3733 = vmatprep.subr.mxu0 0.0
  %3734 = vmatpush1.msra.mxu0 0.0
  %3735 = vmatprep.subr.mxu0 0.0
  %3736 = vmatpush1.msra.mxu0 0.0
  %3737 = vmatprep.subr.mxu0 0.0
  %3738 = vmatpush1.msra.mxu0 0.0
  %3739 = vmatprep.subr.mxu0 0.0
  %3740 = vmatpush1.msra.mxu0 0.0
  %3741 = vmatprep.subr.mxu0 0.0
  %3742 = vmatpush1.msra.mxu0 0.0
  %3743 = vmatprep.subr.mxu0 0.0
  %3744 = vmatpush1.msra.mxu0 0.0
  %3745 = vmatprep.subr.mxu0 0.0
  %3746 = vmatpush1.msra.mxu0 0.0
  %3747 = vmatprep.subr.mxu0 0.0
  %3748 = vmatpush1.msra.mxu0 %v3719
  %3749 = vmatprep.subr.mxu0 0.0
  %3750 = vmatpush1.msra.mxu0 %v3718
  %3751 = vmatprep.subr.mxu0 0.0
  %3752 = vmatpush1.msra.mxu0 %v3717
  %3753 = vmatprep.subr.mxu0 0.0
  %3754 = vmatpush1.msra.mxu0 %v3716
  %3755 = vmatprep.subr.mxu0 0.0
  %3756 = vmatpush1.msra.mxu0 %v3715
  %3757 = vmatprep.subr.mxu0 0.0
  %3758 = vmatpush1.msra.mxu0 %v3714
  %3759 = vmatprep.subr.mxu0 0.0
  %3760 = vmatpush1.msra.mxu0 %v3713
  %3761 = vmatprep.subr.mxu0 0.0
  %3762 = vmatpush1.msra.mxu0 %v3712
  %3763 = vmatprep.subr.mxu0 0.0
  %3764 = vmatpush2.msra.mxu0 0.0
  %3765 = vmatprep.subr.mxu0 0.0
  %3766 = vmatpush2.msra.mxu0 0.0
  %3767 = vmatprep.subr.mxu0 0.0
  %3768 = vmatpush2.msra.mxu0 0.0
  %3769 = vmatprep.subr.mxu0 0.0
  %3770 = vmatpush2.msra.mxu0 0.0
  %3771 = vmatprep.subr.mxu0 0.0
  %3772 = vmatpush2.msra.mxu0 0.0
  %3773 = vmatprep.subr.mxu0 0.0
  %3774 = vmatpush2.msra.mxu0 0.0
  %3775 = vmatprep.subr.mxu0 0.0
  %3776 = vmatpush2.msra.mxu0 0.0
  %3777 = vmatprep.subr.mxu0 0.0
  %3778 = vmatpush2.msra.mxu0 0.0
  %3779 = vmatprep.subr.mxu0 0.0
  %3780 = vmatpush2.msra.mxu0 0.0
  %3781 = vmatprep.subr.mxu0 0.0
  %3782 = vmatpush2.msra.mxu0 0.0
  %3783 = vmatprep.subr.mxu0 0.0
  %3784 = vmatpush2.msra.mxu0 0.0
  %3785 = vmatprep.subr.mxu0 0.0
  %3786 = vmatpush2.msra.mxu0 0.0
  %3787 = vmatprep.subr.mxu0 0.0
  %3788 = vmatpush2.msra.mxu0 0.0
  %3789 = vmatprep.subr.mxu0 0.0
  %3790 = vmatpush2.msra.mxu0 0.0
  %3791 = vmatprep.subr.mxu0 0.0
  %3792 = vmatpush2.msra.mxu0 0.0
  %3793 = vmatprep.subr.mxu0 0.0
  %3794 = vmatpush2.msra.mxu0 0.0
  %3795 = vmatprep.mubr.f32.mxu0 0.0
  %3796 = vmatmul.mubr.f32.gmra.mxu0 %v3726
  %v3797 = vpop.f32.mrf.mxu0
  %v3798 = vadd.f32 %v3724, %v3797
  %v3799 = vpop.f32.mrf.mxu0
  %3800 = vmatprep.mubr.f32.mxu0 0.0
  %3801 = vmatmul.mubr.f32.gmra.mxu0 %v3729
  %v3802 = vpop.f32.mrf.mxu0
  %v3803 = vadd.f32 %v3724, %v3802
  %v3804 = vpop.f32.mrf.mxu0
  %3805 = vdwg.mxu0
  %v3806 = vadd.f32 %v3798, %v3600
  %v3807 = vadd.f32 %v3803, %v3601
  %v3808 = vld [vmem:[%s2034 + $0x6] sm:$0x1]
  %v3809 = vld [vmem:[%s2034 + $0x7] sm:$0x1]
  %v3810 = vsel %vm159, %v3806, 0.0
  %3811 = vadd.xlane.f32.xlu0 %v3810
  %v3812 = vpop.xlane.xlu0 %3811
  %v3813 = vsel %vm159, %v3807, 0.0
  %3814 = vadd.xlane.f32.xlu0 %v3813
  %v3815 = vpop.xlane.xlu0 %3814
  %v3816 = vmul.f32 %v3812, %v166
  %v3817 = vmul.f32 %v3815, %v166
  %v3818 = vsub.f32 %v3806, %v3816
  %v3819 = vsub.f32 %v3807, %v3817
  %v3820 = vmul.f32 %v3818, %v3818
  %v3821 = vmul.f32 %v3819, %v3819
  %v3822 = vsel %vm159, %v3820, 0.0
  %3823 = vadd.xlane.f32.xlu0 %v3822
  %v3824 = vpop.xlane.xlu0 %3823
  %v3825 = vsel %vm159, %v3821, 0.0
  %3826 = vadd.xlane.f32.xlu0 %v3825
  %v3827 = vpop.xlane.xlu0 %3826
  %v3828 = vmul.f32 %v3824, %v166
  %v3829 = vmul.f32 %v3827, %v166
  %v3830 = vadd.f32 %v3828, 1e-12
  %v3831 = vadd.f32 %v3829, 1e-12
  %v3832 = vrsqrt.pop %v3830
  %v3833 = vrsqrt.pop %v3831
  %v3834 = vmul.f32 %v3818, %v3832
  %v3835 = vmul.f32 %v3819, %v3833
  %v3836 = vlaneseq
  %v3837 = vshrl.u32 %v3836, 7
  %v3838 = vsub.s32 0, %v3837
  %v3839 = vrot.slane %v3808, %v3838
  %v3840 = vmul.f32 %v3834, %v3839
  %v3841 = vmul.f32 %v3835, %v3839
  %v3842 = vlaneseq
  %v3843 = vshrl.u32 %v3842, 7
  %v3844 = vsub.s32 0, %v3843
  %v3845 = vrot.slane %v3809, %v3844
  %v3846 = vadd.f32 %v3840, %v3845
  %v3847 = vadd.f32 %v3841, %v3845
  %v3848 = vmul.u32 %v43, 8
  %vm3849 = vcmp.eq.s32.totalorder %v41, %v3848
  %v3850 = vsel %vm3849, 1.0, 0.0
  %v3852 = vsel %vm1646, %v3850, 0
  %3854 = vmatprep.subr.mxu0 0.0
  %3855 = vmatpush1.msra.mxu0 0.0
  %3856 = vmatprep.subr.mxu0 0.0
  %3857 = vmatpush1.msra.mxu0 0.0
  %3858 = vmatprep.subr.mxu0 0.0
  %3859 = vmatpush1.msra.mxu0 0.0
  %3860 = vmatprep.subr.mxu0 0.0
  %3861 = vmatpush1.msra.mxu0 0.0
  %3862 = vmatprep.subr.mxu0 0.0
  %3863 = vmatpush1.msra.mxu0 0.0
  %3864 = vmatprep.subr.mxu0 0.0
  %3865 = vmatpush1.msra.mxu0 0.0
  %3866 = vmatprep.subr.mxu0 0.0
  %3867 = vmatpush1.msra.mxu0 0.0
  %3868 = vmatprep.subr.mxu0 0.0
  %3869 = vmatpush1.msra.mxu0 0.0
  %3870 = vmatprep.subr.mxu0 0.0
  %3871 = vmatpush1.msra.mxu0 0.0
  %3872 = vmatprep.subr.mxu0 0.0
  %3873 = vmatpush1.msra.mxu0 0.0
  %3874 = vmatprep.subr.mxu0 0.0
  %3875 = vmatpush1.msra.mxu0 0.0
  %3876 = vmatprep.subr.mxu0 0.0
  %3877 = vmatpush1.msra.mxu0 0.0
  %3878 = vmatprep.subr.mxu0 0.0
  %3879 = vmatpush1.msra.mxu0 0.0
  %3880 = vmatprep.subr.mxu0 0.0
  %3881 = vmatpush1.msra.mxu0 0.0
  %3882 = vmatprep.subr.mxu0 0.0
  %3883 = vmatpush1.msra.mxu0 %v3847
  %3884 = vmatprep.subr.mxu0 0.0
  %3885 = vmatpush1.msra.mxu0 %v3846
  %3886 = vmatprep.subr.mxu0 0.0
  %3887 = vmatpush2.msra.mxu0 0.0
  %3888 = vmatprep.subr.mxu0 0.0
  %3889 = vmatpush2.msra.mxu0 0.0
  %3890 = vmatprep.subr.mxu0 0.0
  %3891 = vmatpush2.msra.mxu0 0.0
  %3892 = vmatprep.subr.mxu0 0.0
  %3893 = vmatpush2.msra.mxu0 0.0
  %3894 = vmatprep.subr.mxu0 0.0
  %3895 = vmatpush2.msra.mxu0 0.0
  %3896 = vmatprep.subr.mxu0 0.0
  %3897 = vmatpush2.msra.mxu0 0.0
  %3898 = vmatprep.subr.mxu0 0.0
  %3899 = vmatpush2.msra.mxu0 0.0
  %3900 = vmatprep.subr.mxu0 0.0
  %3901 = vmatpush2.msra.mxu0 0.0
  %3902 = vmatprep.subr.mxu0 0.0
  %3903 = vmatpush2.msra.mxu0 0.0
  %3904 = vmatprep.subr.mxu0 0.0
  %3905 = vmatpush2.msra.mxu0 0.0
  %3906 = vmatprep.subr.mxu0 0.0
  %3907 = vmatpush2.msra.mxu0 0.0
  %3908 = vmatprep.subr.mxu0 0.0
  %3909 = vmatpush2.msra.mxu0 0.0
  %3910 = vmatprep.subr.mxu0 0.0
  %3911 = vmatpush2.msra.mxu0 0.0
  %3912 = vmatprep.subr.mxu0 0.0
  %3913 = vmatpush2.msra.mxu0 0.0
  %3914 = vmatprep.subr.mxu0 0.0
  %3915 = vmatpush2.msra.mxu0 0.0
  %3916 = vmatprep.subr.mxu0 0.0
  %3917 = vmatpush2.msra.mxu0 0.0
  %3918 = vmatprep.mubr.f32.mxu0 0.0
  %3919 = vmatmul.mubr.f32.gmra.mxu0 %v3852
  %v3920 = vpop.f32.mrf.mxu0
  %v3921 = vadd.f32 0.0, %v3920
  %v3922 = vpop.f32.mrf.mxu0
  %3923 = vdwg.mxu0
  %v3924 = vld [vmem:[%s8] sm:$0xff]
  %v3925 = vld [vmem:[%s8 + $0x8] sm:$0xff]
  %v3926 = vld [vmem:[%s8 + $0x10] sm:$0xff]
  %v3927 = vld [vmem:[%s8 + $0x18] sm:$0xff]
  %v3928 = vld [vmem:[%s10 + $0x2] sm:$0x1]
  %v3929 = vlaneseq
  %v3930 = vshrl.u32 %v3929, 7
  %v3931 = vsub.s32 0, %v3930
  %v3932 = vrot.slane %v3928, %v3931
  %v3934 = vsel %vm159, %v3921, 0
  %3936 = vmatprep.subr.mxu0 0.0
  %3937 = vmatpush1.msra.mxu0 0.0
  %3938 = vmatprep.subr.mxu0 0.0
  %3939 = vmatpush1.msra.mxu0 0.0
  %3940 = vmatprep.subr.mxu0 0.0
  %3941 = vmatpush1.msra.mxu0 0.0
  %3942 = vmatprep.subr.mxu0 0.0
  %3943 = vmatpush1.msra.mxu0 0.0
  %3944 = vmatprep.subr.mxu0 0.0
  %3945 = vmatpush1.msra.mxu0 0.0
  %3946 = vmatprep.subr.mxu0 0.0
  %3947 = vmatpush1.msra.mxu0 0.0
  %3948 = vmatprep.subr.mxu0 0.0
  %3949 = vmatpush1.msra.mxu0 0.0
  %3950 = vmatprep.subr.mxu0 0.0
  %3951 = vmatpush1.msra.mxu0 0.0
  %3952 = vmatprep.subr.mxu0 0.0
  %3953 = vmatpush1.msra.mxu0 0.0
  %3954 = vmatprep.subr.mxu0 0.0
  %3955 = vmatpush1.msra.mxu0 0.0
  %3956 = vmatprep.subr.mxu0 0.0
  %3957 = vmatpush1.msra.mxu0 0.0
  %3958 = vmatprep.subr.mxu0 0.0
  %3959 = vmatpush1.msra.mxu0 0.0
  %3960 = vmatprep.subr.mxu0 0.0
  %3961 = vmatpush1.msra.mxu0 %v3927
  %3962 = vmatprep.subr.mxu0 0.0
  %3963 = vmatpush1.msra.mxu0 %v3926
  %3964 = vmatprep.subr.mxu0 0.0
  %3965 = vmatpush1.msra.mxu0 %v3925
  %3966 = vmatprep.subr.mxu0 0.0
  %3967 = vmatpush1.msra.mxu0 %v3924
  %3968 = vmatprep.subr.mxu0 0.0
  %3969 = vmatpush2.msra.mxu0 0.0
  %3970 = vmatprep.subr.mxu0 0.0
  %3971 = vmatpush2.msra.mxu0 0.0
  %3972 = vmatprep.subr.mxu0 0.0
  %3973 = vmatpush2.msra.mxu0 0.0
  %3974 = vmatprep.subr.mxu0 0.0
  %3975 = vmatpush2.msra.mxu0 0.0
  %3976 = vmatprep.subr.mxu0 0.0
  %3977 = vmatpush2.msra.mxu0 0.0
  %3978 = vmatprep.subr.mxu0 0.0
  %3979 = vmatpush2.msra.mxu0 0.0
  %3980 = vmatprep.subr.mxu0 0.0
  %3981 = vmatpush2.msra.mxu0 0.0
  %3982 = vmatprep.subr.mxu0 0.0
  %3983 = vmatpush2.msra.mxu0 0.0
  %3984 = vmatprep.subr.mxu0 0.0
  %3985 = vmatpush2.msra.mxu0 0.0
  %3986 = vmatprep.subr.mxu0 0.0
  %3987 = vmatpush2.msra.mxu0 0.0
  %3988 = vmatprep.subr.mxu0 0.0
  %3989 = vmatpush2.msra.mxu0 0.0
  %3990 = vmatprep.subr.mxu0 0.0
  %3991 = vmatpush2.msra.mxu0 0.0
  %3992 = vmatprep.subr.mxu0 0.0
  %3993 = vmatpush2.msra.mxu0 0.0
  %3994 = vmatprep.subr.mxu0 0.0
  %3995 = vmatpush2.msra.mxu0 0.0
  %3996 = vmatprep.subr.mxu0 0.0
  %3997 = vmatpush2.msra.mxu0 0.0
  %3998 = vmatprep.subr.mxu0 0.0
  %3999 = vmatpush2.msra.mxu0 0.0
  %4000 = vmatprep.mubr.f32.mxu0 0.0
  %4001 = vmatmul.mubr.f32.gmra.mxu0 %v3934
  %v4002 = vpop.f32.mrf.mxu0
  %v4003 = vadd.f32 %v3932, %v4002
  %v4004 = vpop.f32.mrf.mxu0
  %4005 = vdwg.mxu0
  %v4006 = vtanh.pop %v4003
  %v4007 = vld [vmem:[%s9] sm:$0xff]
  %v4008 = vld [vmem:[%s9 + $0x8] sm:$0xff]
  %v4009 = vld [vmem:[%s9 + $0x10] sm:$0xff]
  %v4010 = vld [vmem:[%s9 + $0x18] sm:$0xff]
  %v4011 = vld [vmem:[%s10 + $0x3] sm:$0x1]
  %v4012 = vlaneseq
  %v4013 = vshrl.u32 %v4012, 7
  %v4014 = vsub.s32 0, %v4013
  %v4015 = vrot.slane %v4011, %v4014
  %v4017 = vsel %vm159, %v4006, 0
  %4019 = vmatprep.subr.mxu0 0.0
  %4020 = vmatpush1.msra.mxu0 0.0
  %4021 = vmatprep.subr.mxu0 0.0
  %4022 = vmatpush1.msra.mxu0 0.0
  %4023 = vmatprep.subr.mxu0 0.0
  %4024 = vmatpush1.msra.mxu0 0.0
  %4025 = vmatprep.subr.mxu0 0.0
  %4026 = vmatpush1.msra.mxu0 0.0
  %4027 = vmatprep.subr.mxu0 0.0
  %4028 = vmatpush1.msra.mxu0 0.0
  %4029 = vmatprep.subr.mxu0 0.0
  %4030 = vmatpush1.msra.mxu0 0.0
  %4031 = vmatprep.subr.mxu0 0.0
  %4032 = vmatpush1.msra.mxu0 0.0
  %4033 = vmatprep.subr.mxu0 0.0
  %4034 = vmatpush1.msra.mxu0 0.0
  %4035 = vmatprep.subr.mxu0 0.0
  %4036 = vmatpush1.msra.mxu0 0.0
  %4037 = vmatprep.subr.mxu0 0.0
  %4038 = vmatpush1.msra.mxu0 0.0
  %4039 = vmatprep.subr.mxu0 0.0
  %4040 = vmatpush1.msra.mxu0 0.0
  %4041 = vmatprep.subr.mxu0 0.0
  %4042 = vmatpush1.msra.mxu0 0.0
  %4043 = vmatprep.subr.mxu0 0.0
  %4044 = vmatpush1.msra.mxu0 %v4010
  %4045 = vmatprep.subr.mxu0 0.0
  %4046 = vmatpush1.msra.mxu0 %v4009
  %4047 = vmatprep.subr.mxu0 0.0
  %4048 = vmatpush1.msra.mxu0 %v4008
  %4049 = vmatprep.subr.mxu0 0.0
  %4050 = vmatpush1.msra.mxu0 %v4007
  %4051 = vmatprep.subr.mxu0 0.0
  %4052 = vmatpush2.msra.mxu0 0.0
  %4053 = vmatprep.subr.mxu0 0.0
  %4054 = vmatpush2.msra.mxu0 0.0
  %4055 = vmatprep.subr.mxu0 0.0
  %4056 = vmatpush2.msra.mxu0 0.0
  %4057 = vmatprep.subr.mxu0 0.0
  %4058 = vmatpush2.msra.mxu0 0.0
  %4059 = vmatprep.subr.mxu0 0.0
  %4060 = vmatpush2.msra.mxu0 0.0
  %4061 = vmatprep.subr.mxu0 0.0
  %4062 = vmatpush2.msra.mxu0 0.0
  %4063 = vmatprep.subr.mxu0 0.0
  %4064 = vmatpush2.msra.mxu0 0.0
  %4065 = vmatprep.subr.mxu0 0.0
  %4066 = vmatpush2.msra.mxu0 0.0
  %4067 = vmatprep.subr.mxu0 0.0
  %4068 = vmatpush2.msra.mxu0 0.0
  %4069 = vmatprep.subr.mxu0 0.0
  %4070 = vmatpush2.msra.mxu0 0.0
  %4071 = vmatprep.subr.mxu0 0.0
  %4072 = vmatpush2.msra.mxu0 0.0
  %4073 = vmatprep.subr.mxu0 0.0
  %4074 = vmatpush2.msra.mxu0 0.0
  %4075 = vmatprep.subr.mxu0 0.0
  %4076 = vmatpush2.msra.mxu0 0.0
  %4077 = vmatprep.subr.mxu0 0.0
  %4078 = vmatpush2.msra.mxu0 0.0
  %4079 = vmatprep.subr.mxu0 0.0
  %4080 = vmatpush2.msra.mxu0 0.0
  %4081 = vmatprep.subr.mxu0 0.0
  %4082 = vmatpush2.msra.mxu0 0.0
  %4083 = vmatprep.mubr.f32.mxu0 0.0
  %4084 = vmatmul.mubr.f32.gmra.mxu0 %v4017
  %v4085 = vpop.f32.mrf.mxu0
  %v4086 = vadd.f32 %v4015, %v4085
  %v4087 = vpop.f32.mrf.mxu0
  %4088 = vdwg.mxu0
  %4089 = vst [vmem:[%s11] sm:$0xff] %v4086
  // Predicated region
  $region46: #{transformer_place_model_forward.1} parent=0 // pred_check
    _
  $region47: #{transformer_place_model_forward.1} parent=0 // pred_check_branch
    %4091 = sbr.rel (0) target = $region49
  $region48: #{transformer_place_model_forward.1} parent=0 // pred_region
    _
  $region49: #{transformer_place_model_forward.1} parent=0 // pred_fallthru
    _
  // Predicated region
  $region50: #{transformer_place_model_forward.1} parent=0 // pred_check
    _
  $region51: #{transformer_place_model_forward.1} parent=0 // pred_check_branch
    %4093 = sbr.rel (0) target = $region53
  $region52: #{transformer_place_model_forward.1} parent=0 // pred_region
    _
  $region53: #{transformer_place_model_forward.1} parent=0 // pred_fallthru
    _

</llo_original>
